<compile_context>
chip_gen: v5e
topology: v5e:2x2
jax: 0.10.0
libtpu: 0.0.40
codegen_flags: <defaults>
</compile_context>

<pallas_src>
import jax
import jax.numpy as jnp
from jax.experimental import pallas as pl
from jax.experimental.pallas import tpu as pltpu

HIDDEN = 128       # hidden_size
NUM_FEATURE = 2    # len(data_fold)
FC_DIM = 64
OUT_DIM = 2


def lstm_head_kernel(x_ref,
                     wih0_ref, b0_ref,          # layer-0 input proj (f32) + folded bias
                     whh0_ref,                  # layer-0 recurrent weight (bf16)
                     w1_ref, b1_ref,            # layer-1 stacked [W_ih1; W_hh1] (bf16) + bias
                     wfc_ref, bfc_ref, wfc1_ref, bfc1_ref,
                     out_ref,
                     xw0_ref):                  # VMEM scratch (T, B, 4H) f32
    T, B, _ = x_ref.shape
    H = HIDDEN

    # ---- Hoisted layer-0 input projection: xW0[t] = x[t] @ W_ih0 + (b_ih0 + b_hh0) ----
    # F == 2, so do it as two VPU broadcast-mul-adds instead of a K=2 MXU matmul.
    x = x_ref[...]                               # (T, B, 2) f32
    wih0 = wih0_ref[...]                         # (2, 4H)   f32
    xw0_ref[...] = (x[:, :, 0:1] * wih0[0:1, :]
                    + x[:, :, 1:2] * wih0[1:2, :]
                    + b0_ref[...])               # -> (T, B, 4H) f32

    # ---- Loop-invariant weight loads / bias broadcast (hoisted) ----
    whh0 = whh0_ref[...]                                        # (H, 4H)  bf16
    w1 = w1_ref[...]                                            # (2H, 4H) bf16
    b1b = jnp.broadcast_to(b1_ref[...], (B, 4 * H))             # (B, 4H)  f32

    def gates_to_hc(gates, c):
        # gates: (B, 4H) f32, PyTorch order i | f | g | o
        sig = jax.nn.sigmoid(gates)              # one wide EUP pass covers i, f, o
        i = sig[:, 0 * H:1 * H]
        f = sig[:, 1 * H:2 * H]
        o = sig[:, 3 * H:4 * H]
        g = jnp.tanh(gates[:, 2 * H:3 * H])      # second EUP pass
        c_new = f * c + i * g
        h_new = o * jnp.tanh(c_new)
        return h_new, c_new

    zeros = jnp.zeros((B, H), jnp.float32)
    h0, c0, h1, c1 = zeros, zeros, zeros, zeros

    # Fully unrolled time loop (T is a small compile-time constant) for scheduler visibility.
    for t in range(T):
        # Layer 0: only the recurrent matmul remains on the critical path (bf16 MXU, f32 acc).
        gates0 = xw0_ref[t] + jnp.dot(h0.astype(jnp.bfloat16), whh0,
                                      preferred_element_type=jnp.float32)
        h0, c0 = gates_to_hc(gates0, c0)

        # Layer 1: single fused K=2H matmul on [h0, h1] against the stacked weight.
        hcat = jnp.concatenate([h0, h1], axis=1).astype(jnp.bfloat16)   # (B, 2H)
        gates1 = jnp.dot(hcat, w1, preferred_element_type=jnp.float32) + b1b
        h1, c1 = gates_to_hc(gates1, c1)

    # ---- Head: relu(fc(h_n[1])) -> fc1  (one-shot, off the recurrent critical path) ----
    hid = jnp.dot(h1, wfc_ref[...], preferred_element_type=jnp.float32) + bfc_ref[...]
    hid = jnp.maximum(hid, 0.0)
    out = jnp.dot(hid, wfc1_ref[...], preferred_element_type=jnp.float32) + bfc1_ref[...]
    out_ref[...] = out.astype(out_ref.dtype)


def lstm_forward(x_btf, params):
    """x_btf: (B, T, F) batch_first, exactly like the PyTorch module input."""
    B, T, F = x_btf.shape
    assert F == NUM_FEATURE
    H = HIDDEN

    # Time-major + pad batch to a multiple of 8 sublanes (f32 vreg is (8, 128)).
    B_pad = ((B + 7) // 8) * 8
    x_tbf = jnp.transpose(x_btf, (1, 0, 2)).astype(jnp.float32)         # (T, B, F)
    if B_pad != B:
        x_tbf = jnp.pad(x_tbf, ((0, 0), (0, B_pad - B), (0, 0)))

    (wih0, whh0, b0, wih1, whh1, b1, wfc, bfc, wfc1, bfc1) = params
    whh0_bf = whh0.astype(jnp.bfloat16)                                  # (H, 4H)
    w1_bf = jnp.concatenate([wih1, whh1], axis=0).astype(jnp.bfloat16)   # (2H, 4H)

    inputs = (x_tbf, wih0, b0, whh0_bf, w1_bf, b1, wfc, bfc, wfc1, bfc1)

    # Advisory cost estimate (recurrent matmuls + hoisted projection + head + activations).
    flops = (T * (2 * B_pad * H * 4 * H + 2 * B_pad * 2 * H * 4 * H)
             + 2 * T * B_pad * F * 4 * H
             + 2 * B_pad * H * FC_DIM + 2 * B_pad * FC_DIM * OUT_DIM)
    transcendentals = T * B_pad * 12 * H
    bytes_accessed = (sum(int(a.size) * a.dtype.itemsize for a in inputs)
                      + B_pad * OUT_DIM * 4)

    vmem = pl.BlockSpec(memory_space=pltpu.MemorySpace.VMEM)
    out = pl.pallas_call(
        lstm_head_kernel,
        out_shape=jax.ShapeDtypeStruct((B_pad, OUT_DIM), jnp.float32),
        in_specs=[vmem] * len(inputs),
        out_specs=vmem,
        scratch_shapes=[pltpu.VMEM((T, B_pad, 4 * H), jnp.float32)],
        compiler_params=pltpu.CompilerParams(vmem_limit_bytes=32 * 1024 * 1024),
        cost_estimate=pl.CostEstimate(flops=flops,
                                      transcendentals=transcendentals,
                                      bytes_accessed=bytes_accessed),
    )(*inputs)
    return out[:B]


def init_params(key):
    """Deterministic synthetic parameters with the same shapes as the PyTorch module."""
    H, F = HIDDEN, NUM_FEATURE
    ks = jax.random.split(key, 10)
    s = 0.1
    # LSTM layer 0: W_ih (F, 4H), W_hh (H, 4H) pre-transposed; b_ih + b_hh folded -> (1, 4H)
    wih0 = jax.random.normal(ks[0], (F, 4 * H), jnp.float32) * s
    whh0 = jax.random.normal(ks[1], (H, 4 * H), jnp.float32) * s
    b0 = jax.random.normal(ks[2], (1, 4 * H), jnp.float32) * s
    # LSTM layer 1: W_ih (H, 4H), W_hh (H, 4H)
    wih1 = jax.random.normal(ks[3], (H, 4 * H), jnp.float32) * s
    whh1 = jax.random.normal(ks[4], (H, 4 * H), jnp.float32) * s
    b1 = jax.random.normal(ks[5], (1, 4 * H), jnp.float32) * s
    # fc: Linear(128, 64), fc1: Linear(64, 2)  (stored pre-transposed)
    wfc = jax.random.normal(ks[6], (H, FC_DIM), jnp.float32) * s
    bfc = jax.random.normal(ks[7], (1, FC_DIM), jnp.float32) * s
    wfc1 = jax.random.normal(ks[8], (FC_DIM, OUT_DIM), jnp.float32) * s
    bfc1 = jax.random.normal(ks[9], (1, OUT_DIM), jnp.float32) * s
    return (wih0, whh0, b0, wih1, whh1, b1, wfc, bfc, wfc1, bfc1)


if __name__ == "__main__":
    key = jax.random.PRNGKey(0)
    k_x, k_p = jax.random.split(key)

    B, T = 4, 8
    x = jax.random.normal(k_x, (B, T, NUM_FEATURE), jnp.float32)  # batch_first input
    params = init_params(k_p)

    out = lstm_forward(x, params)
    out = jax.block_until_ready(out)
    assert out.shape == (B, OUT_DIM), out.shape
    print("KERNEL_OK")
</pallas_src>

<mosaic_0001>
module attributes {stable_mosaic.version = 11 : i64} {
  func.func @lstm_head_kernel(%arg0: memref<8x8x2xf32, #tpu.memory_space<vmem>>, %arg1: memref<2x512xf32, #tpu.memory_space<vmem>>, %arg2: memref<1x512xf32, #tpu.memory_space<vmem>>, %arg3: memref<128x512xbf16, #tpu.memory_space<vmem>>, %arg4: memref<256x512xbf16, #tpu.memory_space<vmem>>, %arg5: memref<1x512xf32, #tpu.memory_space<vmem>>, %arg6: memref<128x64xf32, #tpu.memory_space<vmem>>, %arg7: memref<1x64xf32, #tpu.memory_space<vmem>>, %arg8: memref<64x2xf32, #tpu.memory_space<vmem>>, %arg9: memref<1x2xf32, #tpu.memory_space<vmem>>, %arg10: memref<8x2xf32, #tpu.memory_space<vmem>>, %arg11: memref<8x8x512xf32, #tpu.memory_space<vmem>>) attributes {dimension_semantics = [], scalar_prefetch = 0 : i64, scratch_operands = 1 : i64, tpu.core_type = #tpu.core_type<tc>} {
    %c0 = arith.constant 0 : index
    %c0_0 = arith.constant 0 : index
    %c0_1 = arith.constant 0 : index
    %0 = vector.load %arg0[%c0, %c0_0, %c0_1] : memref<8x8x2xf32, #tpu.memory_space<vmem>>, vector<8x8x2xf32>
    %c0_2 = arith.constant 0 : index
    %c0_3 = arith.constant 0 : index
    %1 = vector.load %arg1[%c0_2, %c0_3] : memref<2x512xf32, #tpu.memory_space<vmem>>, vector<2x512xf32>
    %2 = vector.extract_strided_slice %0 {offsets = [0, 0, 0], sizes = [8, 8, 1], strides = [1, 1, 1]} : vector<8x8x2xf32> to vector<8x8x1xf32>
    %3 = vector.extract_strided_slice %1 {offsets = [0, 0], sizes = [1, 512], strides = [1, 1]} : vector<2x512xf32> to vector<1x512xf32>
    %4 = vector.shape_cast %3 : vector<1x512xf32> to vector<1x1x512xf32>
    %5 = vector.broadcast %2 : vector<8x8x1xf32> to vector<8x8x512xf32>
    %6 = vector.broadcast %4 : vector<1x1x512xf32> to vector<8x8x512xf32>
    %7 = arith.mulf %5, %6 : vector<8x8x512xf32>
    %8 = vector.extract_strided_slice %0 {offsets = [0, 0, 1], sizes = [8, 8, 1], strides = [1, 1, 1]} : vector<8x8x2xf32> to vector<8x8x1xf32>
    %9 = vector.extract_strided_slice %1 {offsets = [1, 0], sizes = [1, 512], strides = [1, 1]} : vector<2x512xf32> to vector<1x512xf32>
    %10 = vector.shape_cast %9 : vector<1x512xf32> to vector<1x1x512xf32>
    %11 = vector.broadcast %8 : vector<8x8x1xf32> to vector<8x8x512xf32>
    %12 = vector.broadcast %10 : vector<1x1x512xf32> to vector<8x8x512xf32>
    %13 = arith.mulf %11, %12 : vector<8x8x512xf32>
    %14 = arith.addf %7, %13 : vector<8x8x512xf32>
    %c0_4 = arith.constant 0 : index
    %c0_5 = arith.constant 0 : index
    %15 = vector.load %arg2[%c0_4, %c0_5] : memref<1x512xf32, #tpu.memory_space<vmem>>, vector<1x512xf32>
    %16 = vector.shape_cast %15 : vector<1x512xf32> to vector<1x1x512xf32>
    %17 = vector.broadcast %16 : vector<1x1x512xf32> to vector<8x8x512xf32>
    %18 = arith.addf %14, %17 : vector<8x8x512xf32>
    %c0_6 = arith.constant 0 : index
    %c0_7 = arith.constant 0 : index
    %c0_8 = arith.constant 0 : index
    %19 = vector.load %arg11[%c0_6, %c0_7, %c0_8] : memref<8x8x512xf32, #tpu.memory_space<vmem>>, vector<8x8x512xf32>
    tpu.vector_store %arg11[%c0_6, %c0_7, %c0_8], %18 {strides = array<i32>} : memref<8x8x512xf32, #tpu.memory_space<vmem>>, vector<8x8x512xf32>,
    %c0_9 = arith.constant 0 : index
    %c0_10 = arith.constant 0 : index
    %20 = vector.load %arg3[%c0_9, %c0_10] : memref<128x512xbf16, #tpu.memory_space<vmem>>, vector<128x512xbf16>
    %c0_11 = arith.constant 0 : index
    %c0_12 = arith.constant 0 : index
    %21 = vector.load %arg4[%c0_11, %c0_12] : memref<256x512xbf16, #tpu.memory_space<vmem>>, vector<256x512xbf16>
    %c0_13 = arith.constant 0 : index
    %c0_14 = arith.constant 0 : index
    %22 = vector.load %arg5[%c0_13, %c0_14] : memref<1x512xf32, #tpu.memory_space<vmem>>, vector<1x512xf32>
    %23 = vector.shape_cast %22 : vector<1x512xf32> to vector<1x512xf32>
    %24 = vector.broadcast %23 : vector<1x512xf32> to vector<8x512xf32>
    %cst = arith.constant 0.000000e+00 : f32
    %25 = vector.broadcast %cst : f32 to vector<8x128xf32>
    %c0_15 = arith.constant 0 : index
    %c0_16 = arith.constant 0 : index
    %c0_17 = arith.constant 0 : index
    %26 = vector.load %arg11[%c0_15, %c0_16, %c0_17] : memref<8x8x512xf32, #tpu.memory_space<vmem>>, vector<1x8x512xf32>
    %27 = vector.shape_cast %26 : vector<1x8x512xf32> to vector<8x512xf32>
    %28 = arith.truncf %25 : vector<8x128xf32> to vector<8x128xbf16>
    %cst_18 = arith.constant dense<0.000000e+00> : vector<8x512xf32>
    %29 = tpu.matmul %28, %20, %cst_18 {dimension_numbers = #tpu.dot_dimension_numbers<[1], [0], [0], [1], [0, 0, 1, 1], [], []>} : vector<8x128xbf16>, vector<128x512xbf16>, vector<8x512xf32> -> vector<8x512xf32>
    %30 = arith.addf %27, %29 : vector<8x512xf32>
    %31 = arith.negf %30 : vector<8x512xf32>
    %32 = math.exp %31 : vector<8x512xf32>
    %cst_19 = arith.constant 1.000000e+00 : f32
    %33 = vector.broadcast %cst_19 : f32 to vector<8x512xf32>
    %34 = arith.addf %33, %32 : vector<8x512xf32>
    %35 = arith.divf %33, %34 : vector<8x512xf32>
    %36 = vector.extract_strided_slice %35 {offsets = [0, 0], sizes = [8, 128], strides = [1, 1]} : vector<8x512xf32> to vector<8x128xf32>
    %37 = vector.extract_strided_slice %35 {offsets = [0, 128], sizes = [8, 128], strides = [1, 1]} : vector<8x512xf32> to vector<8x128xf32>
    %38 = vector.extract_strided_slice %35 {offsets = [0, 384], sizes = [8, 128], strides = [1, 1]} : vector<8x512xf32> to vector<8x128xf32>
    %39 = vector.extract_strided_slice %30 {offsets = [0, 256], sizes = [8, 128], strides = [1, 1]} : vector<8x512xf32> to vector<8x128xf32>
    %40 = math.tanh %39 : vector<8x128xf32>
    %41 = arith.mulf %37, %25 : vector<8x128xf32>
    %42 = arith.mulf %36, %40 : vector<8x128xf32>
    %43 = arith.addf %41, %42 : vector<8x128xf32>
    %44 = math.tanh %43 : vector<8x128xf32>
    %45 = arith.mulf %38, %44 : vector<8x128xf32>
    %46 = tpu.concatenate %45, %25 in 1 : vector<8x128xf32>, vector<8x128xf32> -> vector<8x256xf32>
    %47 = arith.truncf %46 : vector<8x256xf32> to vector<8x256xbf16>
    %cst_20 = arith.constant dense<0.000000e+00> : vector<8x512xf32>
    %48 = tpu.matmul %47, %21, %cst_20 {dimension_numbers = #tpu.dot_dimension_numbers<[1], [0], [0], [1], [0, 0, 1, 1], [], []>} : vector<8x256xbf16>, vector<256x512xbf16>, vector<8x512xf32> -> vector<8x512xf32>
    %49 = arith.addf %48, %24 : vector<8x512xf32>
    %50 = arith.negf %49 : vector<8x512xf32>
    %51 = math.exp %50 : vector<8x512xf32>
    %cst_21 = arith.constant 1.000000e+00 : f32
    %52 = vector.broadcast %cst_21 : f32 to vector<8x512xf32>
    %53 = arith.addf %52, %51 : vector<8x512xf32>
    %54 = arith.divf %52, %53 : vector<8x512xf32>
    %55 = vector.extract_strided_slice %54 {offsets = [0, 0], sizes = [8, 128], strides = [1, 1]} : vector<8x512xf32> to vector<8x128xf32>
    %56 = vector.extract_strided_slice %54 {offsets = [0, 128], sizes = [8, 128], strides = [1, 1]} : vector<8x512xf32> to vector<8x128xf32>
    %57 = vector.extract_strided_slice %54 {offsets = [0, 384], sizes = [8, 128], strides = [1, 1]} : vector<8x512xf32> to vector<8x128xf32>
    %58 = vector.extract_strided_slice %49 {offsets = [0, 256], sizes = [8, 128], strides = [1, 1]} : vector<8x512xf32> to vector<8x128xf32>
    %59 = math.tanh %58 : vector<8x128xf32>
    %60 = arith.mulf %56, %25 : vector<8x128xf32>
    %61 = arith.mulf %55, %59 : vector<8x128xf32>
    %62 = arith.addf %60, %61 : vector<8x128xf32>
    %63 = math.tanh %62 : vector<8x128xf32>
    %64 = arith.mulf %57, %63 : vector<8x128xf32>
    %c1 = arith.constant 1 : index
    %c0_22 = arith.constant 0 : index
    %c0_23 = arith.constant 0 : index
    %65 = vector.load %arg11[%c1, %c0_22, %c0_23] : memref<8x8x512xf32, #tpu.memory_space<vmem>>, vector<1x8x512xf32>
    %66 = vector.shape_cast %65 : vector<1x8x512xf32> to vector<8x512xf32>
    %67 = arith.truncf %45 : vector<8x128xf32> to vector<8x128xbf16>
    %cst_24 = arith.constant dense<0.000000e+00> : vector<8x512xf32>
    %68 = tpu.matmul %67, %20, %cst_24 {dimension_numbers = #tpu.dot_dimension_numbers<[1], [0], [0], [1], [0, 0, 1, 1], [], []>} : vector<8x128xbf16>, vector<128x512xbf16>, vector<8x512xf32> -> vector<8x512xf32>
    %69 = arith.addf %66, %68 : vector<8x512xf32>
    %70 = arith.negf %69 : vector<8x512xf32>
    %71 = math.exp %70 : vector<8x512xf32>
    %cst_25 = arith.constant 1.000000e+00 : f32
    %72 = vector.broadcast %cst_25 : f32 to vector<8x512xf32>
    %73 = arith.addf %72, %71 : vector<8x512xf32>
    %74 = arith.divf %72, %73 : vector<8x512xf32>
    %75 = vector.extract_strided_slice %74 {offsets = [0, 0], sizes = [8, 128], strides = [1, 1]} : vector<8x512xf32> to vector<8x128xf32>
    %76 = vector.extract_strided_slice %74 {offsets = [0, 128], sizes = [8, 128], strides = [1, 1]} : vector<8x512xf32> to vector<8x128xf32>
    %77 = vector.extract_strided_slice %74 {offsets = [0, 384], sizes = [8, 128], strides = [1, 1]} : vector<8x512xf32> to vector<8x128xf32>
    %78 = vector.extract_strided_slice %69 {offsets = [0, 256], sizes = [8, 128], strides = [1, 1]} : vector<8x512xf32> to vector<8x128xf32>
    %79 = math.tanh %78 : vector<8x128xf32>
    %80 = arith.mulf %76, %43 : vector<8x128xf32>
    %81 = arith.mulf %75, %79 : vector<8x128xf32>
    %82 = arith.addf %80, %81 : vector<8x128xf32>
    %83 = math.tanh %82 : vector<8x128xf32>
    %84 = arith.mulf %77, %83 : vector<8x128xf32>
    %85 = tpu.concatenate %84, %64 in 1 : vector<8x128xf32>, vector<8x128xf32> -> vector<8x256xf32>
    %86 = arith.truncf %85 : vector<8x256xf32> to vector<8x256xbf16>
    %cst_26 = arith.constant dense<0.000000e+00> : vector<8x512xf32>
    %87 = tpu.matmul %86, %21, %cst_26 {dimension_numbers = #tpu.dot_dimension_numbers<[1], [0], [0], [1], [0, 0, 1, 1], [], []>} : vector<8x256xbf16>, vector<256x512xbf16>, vector<8x512xf32> -> vector<8x512xf32>
    %88 = arith.addf %87, %24 : vector<8x512xf32>
    %89 = arith.negf %88 : vector<8x512xf32>
    %90 = math.exp %89 : vector<8x512xf32>
    %cst_27 = arith.constant 1.000000e+00 : f32
    %91 = vector.broadcast %cst_27 : f32 to vector<8x512xf32>
    %92 = arith.addf %91, %90 : vector<8x512xf32>
    %93 = arith.divf %91, %92 : vector<8x512xf32>
    %94 = vector.extract_strided_slice %93 {offsets = [0, 0], sizes = [8, 128], strides = [1, 1]} : vector<8x512xf32> to vector<8x128xf32>
    %95 = vector.extract_strided_slice %93 {offsets = [0, 128], sizes = [8, 128], strides = [1, 1]} : vector<8x512xf32> to vector<8x128xf32>
    %96 = vector.extract_strided_slice %93 {offsets = [0, 384], sizes = [8, 128], strides = [1, 1]} : vector<8x512xf32> to vector<8x128xf32>
    %97 = vector.extract_strided_slice %88 {offsets = [0, 256], sizes = [8, 128], strides = [1, 1]} : vector<8x512xf32> to vector<8x128xf32>
    %98 = math.tanh %97 : vector<8x128xf32>
    %99 = arith.mulf %95, %62 : vector<8x128xf32>
    %100 = arith.mulf %94, %98 : vector<8x128xf32>
    %101 = arith.addf %99, %100 : vector<8x128xf32>
    %102 = math.tanh %101 : vector<8x128xf32>
    %103 = arith.mulf %96, %102 : vector<8x128xf32>
    %c2 = arith.constant 2 : index
    %c0_28 = arith.constant 0 : index
    %c0_29 = arith.constant 0 : index
    %104 = vector.load %arg11[%c2, %c0_28, %c0_29] : memref<8x8x512xf32, #tpu.memory_space<vmem>>, vector<1x8x512xf32>
    %105 = vector.shape_cast %104 : vector<1x8x512xf32> to vector<8x512xf32>
    %106 = arith.truncf %84 : vector<8x128xf32> to vector<8x128xbf16>
    %cst_30 = arith.constant dense<0.000000e+00> : vector<8x512xf32>
    %107 = tpu.matmul %106, %20, %cst_30 {dimension_numbers = #tpu.dot_dimension_numbers<[1], [0], [0], [1], [0, 0, 1, 1], [], []>} : vector<8x128xbf16>, vector<128x512xbf16>, vector<8x512xf32> -> vector<8x512xf32>
    %108 = arith.addf %105, %107 : vector<8x512xf32>
    %109 = arith.negf %108 : vector<8x512xf32>
    %110 = math.exp %109 : vector<8x512xf32>
    %cst_31 = arith.constant 1.000000e+00 : f32
    %111 = vector.broadcast %cst_31 : f32 to vector<8x512xf32>
    %112 = arith.addf %111, %110 : vector<8x512xf32>
    %113 = arith.divf %111, %112 : vector<8x512xf32>
    %114 = vector.extract_strided_slice %113 {offsets = [0, 0], sizes = [8, 128], strides = [1, 1]} : vector<8x512xf32> to vector<8x128xf32>
    %115 = vector.extract_strided_slice %113 {offsets = [0, 128], sizes = [8, 128], strides = [1, 1]} : vector<8x512xf32> to vector<8x128xf32>
    %116 = vector.extract_strided_slice %113 {offsets = [0, 384], sizes = [8, 128], strides = [1, 1]} : vector<8x512xf32> to vector<8x128xf32>
    %117 = vector.extract_strided_slice %108 {offsets = [0, 256], sizes = [8, 128], strides = [1, 1]} : vector<8x512xf32> to vector<8x128xf32>
    %118 = math.tanh %117 : vector<8x128xf32>
    %119 = arith.mulf %115, %82 : vector<8x128xf32>
    %120 = arith.mulf %114, %118 : vector<8x128xf32>
    %121 = arith.addf %119, %120 : vector<8x128xf32>
    %122 = math.tanh %121 : vector<8x128xf32>
    %123 = arith.mulf %116, %122 : vector<8x128xf32>
    %124 = tpu.concatenate %123, %103 in 1 : vector<8x128xf32>, vector<8x128xf32> -> vector<8x256xf32>
    %125 = arith.truncf %124 : vector<8x256xf32> to vector<8x256xbf16>
    %cst_32 = arith.constant dense<0.000000e+00> : vector<8x512xf32>
    %126 = tpu.matmul %125, %21, %cst_32 {dimension_numbers = #tpu.dot_dimension_numbers<[1], [0], [0], [1], [0, 0, 1, 1], [], []>} : vector<8x256xbf16>, vector<256x512xbf16>, vector<8x512xf32> -> vector<8x512xf32>
    %127 = arith.addf %126, %24 : vector<8x512xf32>
    %128 = arith.negf %127 : vector<8x512xf32>
    %129 = math.exp %128 : vector<8x512xf32>
    %cst_33 = arith.constant 1.000000e+00 : f32
    %130 = vector.broadcast %cst_33 : f32 to vector<8x512xf32>
    %131 = arith.addf %130, %129 : vector<8x512xf32>
    %132 = arith.divf %130, %131 : vector<8x512xf32>
    %133 = vector.extract_strided_slice %132 {offsets = [0, 0], sizes = [8, 128], strides = [1, 1]} : vector<8x512xf32> to vector<8x128xf32>
    %134 = vector.extract_strided_slice %132 {offsets = [0, 128], sizes = [8, 128], strides = [1, 1]} : vector<8x512xf32> to vector<8x128xf32>
    %135 = vector.extract_strided_slice %132 {offsets = [0, 384], sizes = [8, 128], strides = [1, 1]} : vector<8x512xf32> to vector<8x128xf32>
    %136 = vector.extract_strided_slice %127 {offsets = [0, 256], sizes = [8, 128], strides = [1, 1]} : vector<8x512xf32> to vector<8x128xf32>
    %137 = math.tanh %136 : vector<8x128xf32>
    %138 = arith.mulf %134, %101 : vector<8x128xf32>
    %139 = arith.mulf %133, %137 : vector<8x128xf32>
    %140 = arith.addf %138, %139 : vector<8x128xf32>
    %141 = math.tanh %140 : vector<8x128xf32>
    %142 = arith.mulf %135, %141 : vector<8x128xf32>
    %c3 = arith.constant 3 : index
    %c0_34 = arith.constant 0 : index
    %c0_35 = arith.constant 0 : index
    %143 = vector.load %arg11[%c3, %c0_34, %c0_35] : memref<8x8x512xf32, #tpu.memory_space<vmem>>, vector<1x8x512xf32>
    %144 = vector.shape_cast %143 : vector<1x8x512xf32> to vector<8x512xf32>
    %145 = arith.truncf %123 : vector<8x128xf32> to vector<8x128xbf16>
    %cst_36 = arith.constant dense<0.000000e+00> : vector<8x512xf32>
    %146 = tpu.matmul %145, %20, %cst_36 {dimension_numbers = #tpu.dot_dimension_numbers<[1], [0], [0], [1], [0, 0, 1, 1], [], []>} : vector<8x128xbf16>, vector<128x512xbf16>, vector<8x512xf32> -> vector<8x512xf32>
    %147 = arith.addf %144, %146 : vector<8x512xf32>
    %148 = arith.negf %147 : vector<8x512xf32>
    %149 = math.exp %148 : vector<8x512xf32>
    %cst_37 = arith.constant 1.000000e+00 : f32
    %150 = vector.broadcast %cst_37 : f32 to vector<8x512xf32>
    %151 = arith.addf %150, %149 : vector<8x512xf32>
    %152 = arith.divf %150, %151 : vector<8x512xf32>
    %153 = vector.extract_strided_slice %152 {offsets = [0, 0], sizes = [8, 128], strides = [1, 1]} : vector<8x512xf32> to vector<8x128xf32>
    %154 = vector.extract_strided_slice %152 {offsets = [0, 128], sizes = [8, 128], strides = [1, 1]} : vector<8x512xf32> to vector<8x128xf32>
    %155 = vector.extract_strided_slice %152 {offsets = [0, 384], sizes = [8, 128], strides = [1, 1]} : vector<8x512xf32> to vector<8x128xf32>
    %156 = vector.extract_strided_slice %147 {offsets = [0, 256], sizes = [8, 128], strides = [1, 1]} : vector<8x512xf32> to vector<8x128xf32>
    %157 = math.tanh %156 : vector<8x128xf32>
    %158 = arith.mulf %154, %121 : vector<8x128xf32>
    %159 = arith.mulf %153, %157 : vector<8x128xf32>
    %160 = arith.addf %158, %159 : vector<8x128xf32>
    %161 = math.tanh %160 : vector<8x128xf32>
    %162 = arith.mulf %155, %161 : vector<8x128xf32>
    %163 = tpu.concatenate %162, %142 in 1 : vector<8x128xf32>, vector<8x128xf32> -> vector<8x256xf32>
    %164 = arith.truncf %163 : vector<8x256xf32> to vector<8x256xbf16>
    %cst_38 = arith.constant dense<0.000000e+00> : vector<8x512xf32>
    %165 = tpu.matmul %164, %21, %cst_38 {dimension_numbers = #tpu.dot_dimension_numbers<[1], [0], [0], [1], [0, 0, 1, 1], [], []>} : vector<8x256xbf16>, vector<256x512xbf16>, vector<8x512xf32> -> vector<8x512xf32>
    %166 = arith.addf %165, %24 : vector<8x512xf32>
    %167 = arith.negf %166 : vector<8x512xf32>
    %168 = math.exp %167 : vector<8x512xf32>
    %cst_39 = arith.constant 1.000000e+00 : f32
    %169 = vector.broadcast %cst_39 : f32 to vector<8x512xf32>
    %170 = arith.addf %169, %168 : vector<8x512xf32>
    %171 = arith.divf %169, %170 : vector<8x512xf32>
    %172 = vector.extract_strided_slice %171 {offsets = [0, 0], sizes = [8, 128], strides = [1, 1]} : vector<8x512xf32> to vector<8x128xf32>
    %173 = vector.extract_strided_slice %171 {offsets = [0, 128], sizes = [8, 128], strides = [1, 1]} : vector<8x512xf32> to vector<8x128xf32>
    %174 = vector.extract_strided_slice %171 {offsets = [0, 384], sizes = [8, 128], strides = [1, 1]} : vector<8x512xf32> to vector<8x128xf32>
    %175 = vector.extract_strided_slice %166 {offsets = [0, 256], sizes = [8, 128], strides = [1, 1]} : vector<8x512xf32> to vector<8x128xf32>
    %176 = math.tanh %175 : vector<8x128xf32>
    %177 = arith.mulf %173, %140 : vector<8x128xf32>
    %178 = arith.mulf %172, %176 : vector<8x128xf32>
    %179 = arith.addf %177, %178 : vector<8x128xf32>
    %180 = math.tanh %179 : vector<8x128xf32>
    %181 = arith.mulf %174, %180 : vector<8x128xf32>
    %c4 = arith.constant 4 : index
    %c0_40 = arith.constant 0 : index
    %c0_41 = arith.constant 0 : index
    %182 = vector.load %arg11[%c4, %c0_40, %c0_41] : memref<8x8x512xf32, #tpu.memory_space<vmem>>, vector<1x8x512xf32>
    %183 = vector.shape_cast %182 : vector<1x8x512xf32> to vector<8x512xf32>
    %184 = arith.truncf %162 : vector<8x128xf32> to vector<8x128xbf16>
    %cst_42 = arith.constant dense<0.000000e+00> : vector<8x512xf32>
    %185 = tpu.matmul %184, %20, %cst_42 {dimension_numbers = #tpu.dot_dimension_numbers<[1], [0], [0], [1], [0, 0, 1, 1], [], []>} : vector<8x128xbf16>, vector<128x512xbf16>, vector<8x512xf32> -> vector<8x512xf32>
    %186 = arith.addf %183, %185 : vector<8x512xf32>
    %187 = arith.negf %186 : vector<8x512xf32>
    %188 = math.exp %187 : vector<8x512xf32>
    %cst_43 = arith.constant 1.000000e+00 : f32
    %189 = vector.broadcast %cst_43 : f32 to vector<8x512xf32>
    %190 = arith.addf %189, %188 : vector<8x512xf32>
    %191 = arith.divf %189, %190 : vector<8x512xf32>
    %192 = vector.extract_strided_slice %191 {offsets = [0, 0], sizes = [8, 128], strides = [1, 1]} : vector<8x512xf32> to vector<8x128xf32>
    %193 = vector.extract_strided_slice %191 {offsets = [0, 128], sizes = [8, 128], strides = [1, 1]} : vector<8x512xf32> to vector<8x128xf32>
    %194 = vector.extract_strided_slice %191 {offsets = [0, 384], sizes = [8, 128], strides = [1, 1]} : vector<8x512xf32> to vector<8x128xf32>
    %195 = vector.extract_strided_slice %186 {offsets = [0, 256], sizes = [8, 128], strides = [1, 1]} : vector<8x512xf32> to vector<8x128xf32>
    %196 = math.tanh %195 : vector<8x128xf32>
    %197 = arith.mulf %193, %160 : vector<8x128xf32>
    %198 = arith.mulf %192, %196 : vector<8x128xf32>
    %199 = arith.addf %197, %198 : vector<8x128xf32>
    %200 = math.tanh %199 : vector<8x128xf32>
    %201 = arith.mulf %194, %200 : vector<8x128xf32>
    %202 = tpu.concatenate %201, %181 in 1 : vector<8x128xf32>, vector<8x128xf32> -> vector<8x256xf32>
    %203 = arith.truncf %202 : vector<8x256xf32> to vector<8x256xbf16>
    %cst_44 = arith.constant dense<0.000000e+00> : vector<8x512xf32>
    %204 = tpu.matmul %203, %21, %cst_44 {dimension_numbers = #tpu.dot_dimension_numbers<[1], [0], [0], [1], [0, 0, 1, 1], [], []>} : vector<8x256xbf16>, vector<256x512xbf16>, vector<8x512xf32> -> vector<8x512xf32>
    %205 = arith.addf %204, %24 : vector<8x512xf32>
    %206 = arith.negf %205 : vector<8x512xf32>
    %207 = math.exp %206 : vector<8x512xf32>
    %cst_45 = arith.constant 1.000000e+00 : f32
    %208 = vector.broadcast %cst_45 : f32 to vector<8x512xf32>
    %209 = arith.addf %208, %207 : vector<8x512xf32>
    %210 = arith.divf %208, %209 : vector<8x512xf32>
    %211 = vector.extract_strided_slice %210 {offsets = [0, 0], sizes = [8, 128], strides = [1, 1]} : vector<8x512xf32> to vector<8x128xf32>
    %212 = vector.extract_strided_slice %210 {offsets = [0, 128], sizes = [8, 128], strides = [1, 1]} : vector<8x512xf32> to vector<8x128xf32>
    %213 = vector.extract_strided_slice %210 {offsets = [0, 384], sizes = [8, 128], strides = [1, 1]} : vector<8x512xf32> to vector<8x128xf32>
    %214 = vector.extract_strided_slice %205 {offsets = [0, 256], sizes = [8, 128], strides = [1, 1]} : vector<8x512xf32> to vector<8x128xf32>
    %215 = math.tanh %214 : vector<8x128xf32>
    %216 = arith.mulf %212, %179 : vector<8x128xf32>
    %217 = arith.mulf %211, %215 : vector<8x128xf32>
    %218 = arith.addf %216, %217 : vector<8x128xf32>
    %219 = math.tanh %218 : vector<8x128xf32>
    %220 = arith.mulf %213, %219 : vector<8x128xf32>
    %c5 = arith.constant 5 : index
    %c0_46 = arith.constant 0 : index
    %c0_47 = arith.constant 0 : index
    %221 = vector.load %arg11[%c5, %c0_46, %c0_47] : memref<8x8x512xf32, #tpu.memory_space<vmem>>, vector<1x8x512xf32>
    %222 = vector.shape_cast %221 : vector<1x8x512xf32> to vector<8x512xf32>
    %223 = arith.truncf %201 : vector<8x128xf32> to vector<8x128xbf16>
    %cst_48 = arith.constant dense<0.000000e+00> : vector<8x512xf32>
    %224 = tpu.matmul %223, %20, %cst_48 {dimension_numbers = #tpu.dot_dimension_numbers<[1], [0], [0], [1], [0, 0, 1, 1], [], []>} : vector<8x128xbf16>, vector<128x512xbf16>, vector<8x512xf32> -> vector<8x512xf32>
    %225 = arith.addf %222, %224 : vector<8x512xf32>
    %226 = arith.negf %225 : vector<8x512xf32>
    %227 = math.exp %226 : vector<8x512xf32>
    %cst_49 = arith.constant 1.000000e+00 : f32
    %228 = vector.broadcast %cst_49 : f32 to vector<8x512xf32>
    %229 = arith.addf %228, %227 : vector<8x512xf32>
    %230 = arith.divf %228, %229 : vector<8x512xf32>
    %231 = vector.extract_strided_slice %230 {offsets = [0, 0], sizes = [8, 128], strides = [1, 1]} : vector<8x512xf32> to vector<8x128xf32>
    %232 = vector.extract_strided_slice %230 {offsets = [0, 128], sizes = [8, 128], strides = [1, 1]} : vector<8x512xf32> to vector<8x128xf32>
    %233 = vector.extract_strided_slice %230 {offsets = [0, 384], sizes = [8, 128], strides = [1, 1]} : vector<8x512xf32> to vector<8x128xf32>
    %234 = vector.extract_strided_slice %225 {offsets = [0, 256], sizes = [8, 128], strides = [1, 1]} : vector<8x512xf32> to vector<8x128xf32>
    %235 = math.tanh %234 : vector<8x128xf32>
    %236 = arith.mulf %232, %199 : vector<8x128xf32>
    %237 = arith.mulf %231, %235 : vector<8x128xf32>
    %238 = arith.addf %236, %237 : vector<8x128xf32>
    %239 = math.tanh %238 : vector<8x128xf32>
    %240 = arith.mulf %233, %239 : vector<8x128xf32>
    %241 = tpu.concatenate %240, %220 in 1 : vector<8x128xf32>, vector<8x128xf32> -> vector<8x256xf32>
    %242 = arith.truncf %241 : vector<8x256xf32> to vector<8x256xbf16>
    %cst_50 = arith.constant dense<0.000000e+00> : vector<8x512xf32>
    %243 = tpu.matmul %242, %21, %cst_50 {dimension_numbers = #tpu.dot_dimension_numbers<[1], [0], [0], [1], [0, 0, 1, 1], [], []>} : vector<8x256xbf16>, vector<256x512xbf16>, vector<8x512xf32> -> vector<8x512xf32>
    %244 = arith.addf %243, %24 : vector<8x512xf32>
    %245 = arith.negf %244 : vector<8x512xf32>
    %246 = math.exp %245 : vector<8x512xf32>
    %cst_51 = arith.constant 1.000000e+00 : f32
    %247 = vector.broadcast %cst_51 : f32 to vector<8x512xf32>
    %248 = arith.addf %247, %246 : vector<8x512xf32>
    %249 = arith.divf %247, %248 : vector<8x512xf32>
    %250 = vector.extract_strided_slice %249 {offsets = [0, 0], sizes = [8, 128], strides = [1, 1]} : vector<8x512xf32> to vector<8x128xf32>
    %251 = vector.extract_strided_slice %249 {offsets = [0, 128], sizes = [8, 128], strides = [1, 1]} : vector<8x512xf32> to vector<8x128xf32>
    %252 = vector.extract_strided_slice %249 {offsets = [0, 384], sizes = [8, 128], strides = [1, 1]} : vector<8x512xf32> to vector<8x128xf32>
    %253 = vector.extract_strided_slice %244 {offsets = [0, 256], sizes = [8, 128], strides = [1, 1]} : vector<8x512xf32> to vector<8x128xf32>
    %254 = math.tanh %253 : vector<8x128xf32>
    %255 = arith.mulf %251, %218 : vector<8x128xf32>
    %256 = arith.mulf %250, %254 : vector<8x128xf32>
    %257 = arith.addf %255, %256 : vector<8x128xf32>
    %258 = math.tanh %257 : vector<8x128xf32>
    %259 = arith.mulf %252, %258 : vector<8x128xf32>
    %c6 = arith.constant 6 : index
    %c0_52 = arith.constant 0 : index
    %c0_53 = arith.constant 0 : index
    %260 = vector.load %arg11[%c6, %c0_52, %c0_53] : memref<8x8x512xf32, #tpu.memory_space<vmem>>, vector<1x8x512xf32>
    %261 = vector.shape_cast %260 : vector<1x8x512xf32> to vector<8x512xf32>
    %262 = arith.truncf %240 : vector<8x128xf32> to vector<8x128xbf16>
    %cst_54 = arith.constant dense<0.000000e+00> : vector<8x512xf32>
    %263 = tpu.matmul %262, %20, %cst_54 {dimension_numbers = #tpu.dot_dimension_numbers<[1], [0], [0], [1], [0, 0, 1, 1], [], []>} : vector<8x128xbf16>, vector<128x512xbf16>, vector<8x512xf32> -> vector<8x512xf32>
    %264 = arith.addf %261, %263 : vector<8x512xf32>
    %265 = arith.negf %264 : vector<8x512xf32>
    %266 = math.exp %265 : vector<8x512xf32>
    %cst_55 = arith.constant 1.000000e+00 : f32
    %267 = vector.broadcast %cst_55 : f32 to vector<8x512xf32>
    %268 = arith.addf %267, %266 : vector<8x512xf32>
    %269 = arith.divf %267, %268 : vector<8x512xf32>
    %270 = vector.extract_strided_slice %269 {offsets = [0, 0], sizes = [8, 128], strides = [1, 1]} : vector<8x512xf32> to vector<8x128xf32>
    %271 = vector.extract_strided_slice %269 {offsets = [0, 128], sizes = [8, 128], strides = [1, 1]} : vector<8x512xf32> to vector<8x128xf32>
    %272 = vector.extract_strided_slice %269 {offsets = [0, 384], sizes = [8, 128], strides = [1, 1]} : vector<8x512xf32> to vector<8x128xf32>
    %273 = vector.extract_strided_slice %264 {offsets = [0, 256], sizes = [8, 128], strides = [1, 1]} : vector<8x512xf32> to vector<8x128xf32>
    %274 = math.tanh %273 : vector<8x128xf32>
    %275 = arith.mulf %271, %238 : vector<8x128xf32>
    %276 = arith.mulf %270, %274 : vector<8x128xf32>
    %277 = arith.addf %275, %276 : vector<8x128xf32>
    %278 = math.tanh %277 : vector<8x128xf32>
    %279 = arith.mulf %272, %278 : vector<8x128xf32>
    %280 = tpu.concatenate %279, %259 in 1 : vector<8x128xf32>, vector<8x128xf32> -> vector<8x256xf32>
    %281 = arith.truncf %280 : vector<8x256xf32> to vector<8x256xbf16>
    %cst_56 = arith.constant dense<0.000000e+00> : vector<8x512xf32>
    %282 = tpu.matmul %281, %21, %cst_56 {dimension_numbers = #tpu.dot_dimension_numbers<[1], [0], [0], [1], [0, 0, 1, 1], [], []>} : vector<8x256xbf16>, vector<256x512xbf16>, vector<8x512xf32> -> vector<8x512xf32>
    %283 = arith.addf %282, %24 : vector<8x512xf32>
    %284 = arith.negf %283 : vector<8x512xf32>
    %285 = math.exp %284 : vector<8x512xf32>
    %cst_57 = arith.constant 1.000000e+00 : f32
    %286 = vector.broadcast %cst_57 : f32 to vector<8x512xf32>
    %287 = arith.addf %286, %285 : vector<8x512xf32>
    %288 = arith.divf %286, %287 : vector<8x512xf32>
    %289 = vector.extract_strided_slice %288 {offsets = [0, 0], sizes = [8, 128], strides = [1, 1]} : vector<8x512xf32> to vector<8x128xf32>
    %290 = vector.extract_strided_slice %288 {offsets = [0, 128], sizes = [8, 128], strides = [1, 1]} : vector<8x512xf32> to vector<8x128xf32>
    %291 = vector.extract_strided_slice %288 {offsets = [0, 384], sizes = [8, 128], strides = [1, 1]} : vector<8x512xf32> to vector<8x128xf32>
    %292 = vector.extract_strided_slice %283 {offsets = [0, 256], sizes = [8, 128], strides = [1, 1]} : vector<8x512xf32> to vector<8x128xf32>
    %293 = math.tanh %292 : vector<8x128xf32>
    %294 = arith.mulf %290, %257 : vector<8x128xf32>
    %295 = arith.mulf %289, %293 : vector<8x128xf32>
    %296 = arith.addf %294, %295 : vector<8x128xf32>
    %297 = math.tanh %296 : vector<8x128xf32>
    %298 = arith.mulf %291, %297 : vector<8x128xf32>
    %c7 = arith.constant 7 : index
    %c0_58 = arith.constant 0 : index
    %c0_59 = arith.constant 0 : index
    %299 = vector.load %arg11[%c7, %c0_58, %c0_59] : memref<8x8x512xf32, #tpu.memory_space<vmem>>, vector<1x8x512xf32>
    %300 = vector.shape_cast %299 : vector<1x8x512xf32> to vector<8x512xf32>
    %301 = arith.truncf %279 : vector<8x128xf32> to vector<8x128xbf16>
    %cst_60 = arith.constant dense<0.000000e+00> : vector<8x512xf32>
    %302 = tpu.matmul %301, %20, %cst_60 {dimension_numbers = #tpu.dot_dimension_numbers<[1], [0], [0], [1], [0, 0, 1, 1], [], []>} : vector<8x128xbf16>, vector<128x512xbf16>, vector<8x512xf32> -> vector<8x512xf32>
    %303 = arith.addf %300, %302 : vector<8x512xf32>
    %304 = arith.negf %303 : vector<8x512xf32>
    %305 = math.exp %304 : vector<8x512xf32>
    %cst_61 = arith.constant 1.000000e+00 : f32
    %306 = vector.broadcast %cst_61 : f32 to vector<8x512xf32>
    %307 = arith.addf %306, %305 : vector<8x512xf32>
    %308 = arith.divf %306, %307 : vector<8x512xf32>
    %309 = vector.extract_strided_slice %308 {offsets = [0, 0], sizes = [8, 128], strides = [1, 1]} : vector<8x512xf32> to vector<8x128xf32>
    %310 = vector.extract_strided_slice %308 {offsets = [0, 128], sizes = [8, 128], strides = [1, 1]} : vector<8x512xf32> to vector<8x128xf32>
    %311 = vector.extract_strided_slice %308 {offsets = [0, 384], sizes = [8, 128], strides = [1, 1]} : vector<8x512xf32> to vector<8x128xf32>
    %312 = vector.extract_strided_slice %303 {offsets = [0, 256], sizes = [8, 128], strides = [1, 1]} : vector<8x512xf32> to vector<8x128xf32>
    %313 = math.tanh %312 : vector<8x128xf32>
    %314 = arith.mulf %310, %277 : vector<8x128xf32>
    %315 = arith.mulf %309, %313 : vector<8x128xf32>
    %316 = arith.addf %314, %315 : vector<8x128xf32>
    %317 = math.tanh %316 : vector<8x128xf32>
    %318 = arith.mulf %311, %317 : vector<8x128xf32>
    %319 = tpu.concatenate %318, %298 in 1 : vector<8x128xf32>, vector<8x128xf32> -> vector<8x256xf32>
    %320 = arith.truncf %319 : vector<8x256xf32> to vector<8x256xbf16>
    %cst_62 = arith.constant dense<0.000000e+00> : vector<8x512xf32>
    %321 = tpu.matmul %320, %21, %cst_62 {dimension_numbers = #tpu.dot_dimension_numbers<[1], [0], [0], [1], [0, 0, 1, 1], [], []>} : vector<8x256xbf16>, vector<256x512xbf16>, vector<8x512xf32> -> vector<8x512xf32>
    %322 = arith.addf %321, %24 : vector<8x512xf32>
    %323 = arith.negf %322 : vector<8x512xf32>
    %324 = math.exp %323 : vector<8x512xf32>
    %cst_63 = arith.constant 1.000000e+00 : f32
    %325 = vector.broadcast %cst_63 : f32 to vector<8x512xf32>
    %326 = arith.addf %325, %324 : vector<8x512xf32>
    %327 = arith.divf %325, %326 : vector<8x512xf32>
    %328 = vector.extract_strided_slice %327 {offsets = [0, 0], sizes = [8, 128], strides = [1, 1]} : vector<8x512xf32> to vector<8x128xf32>
    %329 = vector.extract_strided_slice %327 {offsets = [0, 128], sizes = [8, 128], strides = [1, 1]} : vector<8x512xf32> to vector<8x128xf32>
    %330 = vector.extract_strided_slice %327 {offsets = [0, 384], sizes = [8, 128], strides = [1, 1]} : vector<8x512xf32> to vector<8x128xf32>
    %331 = vector.extract_strided_slice %322 {offsets = [0, 256], sizes = [8, 128], strides = [1, 1]} : vector<8x512xf32> to vector<8x128xf32>
    %332 = math.tanh %331 : vector<8x128xf32>
    %333 = arith.mulf %329, %296 : vector<8x128xf32>
    %334 = arith.mulf %328, %332 : vector<8x128xf32>
    %335 = arith.addf %333, %334 : vector<8x128xf32>
    %336 = math.tanh %335 : vector<8x128xf32>
    %337 = arith.mulf %330, %336 : vector<8x128xf32>
    %c0_64 = arith.constant 0 : index
    %c0_65 = arith.constant 0 : index
    %338 = vector.load %arg6[%c0_64, %c0_65] : memref<128x64xf32, #tpu.memory_space<vmem>>, vector<128x64xf32>
    %cst_66 = arith.constant dense<0.000000e+00> : vector<8x64xf32>
    %339 = tpu.matmul %337, %338, %cst_66 {dimension_numbers = #tpu.dot_dimension_numbers<[1], [0], [0], [1], [0, 0, 1, 1], [], []>} : vector<8x128xf32>, vector<128x64xf32>, vector<8x64xf32> -> vector<8x64xf32>
    %c0_67 = arith.constant 0 : index
    %c0_68 = arith.constant 0 : index
    %340 = vector.load %arg7[%c0_67, %c0_68] : memref<1x64xf32, #tpu.memory_space<vmem>>, vector<1x64xf32>
    %341 = vector.broadcast %340 : vector<1x64xf32> to vector<8x64xf32>
    %342 = arith.addf %339, %341 : vector<8x64xf32>
    %cst_69 = arith.constant 0.000000e+00 : f32
    %343 = vector.broadcast %cst_69 : f32 to vector<8x64xf32>
    %344 = arith.maximumf %342, %343 : vector<8x64xf32>
    %c0_70 = arith.constant 0 : index
    %c0_71 = arith.constant 0 : index
    %345 = vector.load %arg8[%c0_70, %c0_71] : memref<64x2xf32, #tpu.memory_space<vmem>>, vector<64x2xf32>
    %cst_72 = arith.constant dense<0.000000e+00> : vector<8x2xf32>
    %346 = tpu.matmul %344, %345, %cst_72 {dimension_numbers = #tpu.dot_dimension_numbers<[1], [0], [0], [1], [0, 0, 1, 1], [], []>} : vector<8x64xf32>, vector<64x2xf32>, vector<8x2xf32> -> vector<8x2xf32>
    %c0_73 = arith.constant 0 : index
    %c0_74 = arith.constant 0 : index
    %347 = vector.load %arg9[%c0_73, %c0_74] : memref<1x2xf32, #tpu.memory_space<vmem>>, vector<1x2xf32>
    %348 = vector.broadcast %347 : vector<1x2xf32> to vector<8x2xf32>
    %349 = arith.addf %346, %348 : vector<8x2xf32>
    %c0_75 = arith.constant 0 : index
    %c0_76 = arith.constant 0 : index
    %350 = vector.load %arg10[%c0_75, %c0_76] : memref<8x2xf32, #tpu.memory_space<vmem>>, vector<8x2xf32>
    tpu.vector_store %arg10[%c0_75, %c0_76], %349 {strides = array<i32>} : memref<8x2xf32, #tpu.memory_space<vmem>>, vector<8x2xf32>,
    return
  }
}

</mosaic_0001>

<llo_original>
// kernel: tpu_custom_call.1
$region0: #{tpu_custom_call.1}
  #allocation0 [shape = 'u32[]', space=smem, size = 0x4, offset = 0x4, fixed_abs, tag = 'smem constant byte address 0x4 - core index']
  #allocation1 [shape = 'u32[72,128]{1,0:T(1,128)}', space=vmem, size = 0x9000, scoped, tag = 'internal scratch']
  #allocation2 [shape = 'f32[8,8,512]{2,1,0:T(8,128)}', space=vmem, size = 0x20000, scoped, tag = 'scratch operand']
  %s0 = inlined_call_operand.vmem [shape: f32[8,8,2], index: 0, kind: input, shape index: {}]
  %s1 = inlined_call_operand.vmem [shape: f32[2,512], index: 1, kind: input, shape index: {}]
  %s2 = inlined_call_operand.vmem [shape: f32[1,512], index: 2, kind: input, shape index: {}]
  %s3 = inlined_call_operand.vmem [shape: bf16[128,512], index: 3, kind: input, shape index: {}]
  %s4 = inlined_call_operand.hbm [shape: bf16[256,512], index: 4, kind: input, shape index: {}]
  %s5 = inlined_call_operand.vmem [shape: f32[1,512], index: 5, kind: input, shape index: {}]
  %s6 = inlined_call_operand.vmem [shape: f32[128,64], index: 6, kind: input, shape index: {}]
  %s7 = inlined_call_operand.vmem [shape: f32[1,64], index: 7, kind: input, shape index: {}]
  %s8 = inlined_call_operand.vmem [shape: f32[64,2], index: 8, kind: input, shape index: {}]
  %s9 = inlined_call_operand.vmem [shape: f32[1,2], index: 9, kind: input, shape index: {}]
  %s10 = inlined_call_operand.vmem [shape: f32[8,2], index: 10, kind: output, shape index: {}]
  %s11 = sld [smem:[#allocation0]]
  $region54: #{tpu_custom_call.1} parent=0
    _
  %s13 = ssub.s32 1, %s11
  %s14 = scalar_select 0, %s13, %s11
  $region1: #{tpu_custom_call.1} parent=0
    #allocation3 [shape = 'u8[262144]{0}', space=vmem, size = 0x40000, scoped, tag = 'input window, operand 4, single buffered']
    #allocation4 [shape = 's32[1]{0}', space=sflag, size = 0x4, scoped, tag = 'scoped memory for tpu_custom_call.1']
    %15 = vsyncpa [#allocation4], 0
    // Predicated region
    $region2: #{tpu_custom_call.1} parent=1 // pred_check
      _
    $region3: #{tpu_custom_call.1} parent=1 // pred_check_branch
      %17 = sbr.rel (0) target = $region5
    $region4: #{tpu_custom_call.1} parent=1 // pred_region
      _
    $region5: #{tpu_custom_call.1} parent=1 // pred_fallthru
      _
    // Predicated region
    $region6: #{tpu_custom_call.1} parent=1 // pred_check
      _
    $region7: #{tpu_custom_call.1} parent=1 // pred_check_branch
      %19 = sbr.rel (0) target = $region9
    $region8: #{tpu_custom_call.1} parent=1 // pred_region
      _
    $region9: #{tpu_custom_call.1} parent=1 // pred_fallthru
      _
    // Predicated region
    $region10: #{tpu_custom_call.1} parent=1 // pred_check
      _
    $region11: #{tpu_custom_call.1} parent=1 // pred_check_branch
      %21 = sbr.rel (0) target = $region13
    $region12: #{tpu_custom_call.1} parent=1 // pred_region
      _
    $region13: #{tpu_custom_call.1} parent=1 // pred_fallthru
      _
    // Predicated region
    $region14: #{tpu_custom_call.1} parent=1 // pred_check
      _
    $region15: #{tpu_custom_call.1} parent=1 // pred_check_branch
      %23 = sbr.rel (0) target = $region17
    $region16: #{tpu_custom_call.1} parent=1 // pred_region
      _
    $region17: #{tpu_custom_call.1} parent=1 // pred_fallthru
      _
    // Predicated region
    $region18: #{tpu_custom_call.1} parent=1 // pred_check
      _
    $region19: #{tpu_custom_call.1} parent=1 // pred_check_branch
      %25 = sbr.rel (0) target = $region21
    $region20: #{tpu_custom_call.1} parent=1 // pred_region
      %27 = vsyncadd [#allocation4], 0
      %s28 = sshll.u32 %s4, 4
      %s29 = int_to_ptr.hbm [resolvable:$true] %s28
      %s30 = sshll.u32 [#allocation3], 4
      %s31 = int_to_ptr.vmem [resolvable:$true] %s30
      %36 = dma.hbm_to_vmem [thread:$0]  %s29, 8192, %s31, [#allocation4], 256, 256, 16
    $region21: #{tpu_custom_call.1} parent=1 // pred_fallthru
      _
    // Predicated region
    $region22: #{tpu_custom_call.1} parent=1 // pred_check
      _
    $region23: #{tpu_custom_call.1} parent=1 // pred_check_branch
      %38 = sbr.rel (0) target = $region25
    $region24: #{tpu_custom_call.1} parent=1 // pred_region
      _
    $region25: #{tpu_custom_call.1} parent=1 // pred_fallthru
      _
    // Predicated region
    $region26: #{tpu_custom_call.1} parent=1 // pred_check
      _
    $region27: #{tpu_custom_call.1} parent=1 // pred_check_branch
      %40 = sbr.rel (0) target = $region29
    $region28: #{tpu_custom_call.1} parent=1 // pred_region
      _
    $region29: #{tpu_custom_call.1} parent=1 // pred_fallthru
      _
    // Predicated region
    $region30: #{tpu_custom_call.1} parent=1 // pred_check
      _
    $region31: #{tpu_custom_call.1} parent=1 // pred_check_branch
      %42 = sbr.rel (0) target = $region33
    $region32: #{tpu_custom_call.1} parent=1 // pred_region
      _
    $region33: #{tpu_custom_call.1} parent=1 // pred_fallthru
      _
    // Predicated region
    $region34: #{tpu_custom_call.1} parent=1 // pred_check
      _
    $region35: #{tpu_custom_call.1} parent=1 // pred_check_branch
      %44 = sbr.rel (0) target = $region37
    $region36: #{tpu_custom_call.1} parent=1 // pred_region
      _
    $region37: #{tpu_custom_call.1} parent=1 // pred_fallthru
      _
    // Predicated region
    $region38: #{tpu_custom_call.1} parent=1 // pred_check
      _
    $region39: #{tpu_custom_call.1} parent=1 // pred_check_branch
      %46 = sbr.rel (0) target = $region41
    $region40: #{tpu_custom_call.1} parent=1 // pred_region
      _
    $region41: #{tpu_custom_call.1} parent=1 // pred_fallthru
      _
    // Predicated region
    $region42: #{tpu_custom_call.1} parent=1 // pred_check
      _
    $region43: #{tpu_custom_call.1} parent=1 // pred_check_branch
      %48 = sbr.rel (0) target = $region45
    $region44: #{tpu_custom_call.1} parent=1 // pred_region
      %50 = dma.done [#allocation4], 8192
    $region45: #{tpu_custom_call.1} parent=1 // pred_fallthru
      _
    %v52 = vld [vmem:[%s0] sm:$0xff]
    %v53 = vld [vmem:[%s0 + $0x8] sm:$0xff]
    %v54 = vld [vmem:[%s0 + $0x10] sm:$0xff]
    %v55 = vld [vmem:[%s0 + $0x18] sm:$0xff]
    %v56 = vld [vmem:[%s0 + $0x20] sm:$0xff]
    %v57 = vld [vmem:[%s0 + $0x28] sm:$0xff]
    %v58 = vld [vmem:[%s0 + $0x30] sm:$0xff]
    %v59 = vld [vmem:[%s0 + $0x38] sm:$0xff]
    %v60 = vld [vmem:[%s1] sm:$0xff]
    %62 = vset.pattern.permute.xlu0 0
    %63 = vperm.xlu0 %62, %v52
    %v64 = vpop.permute.xlu0 %63
    %67 = vset.pattern.permute.xlu0 0
    %68 = vperm.xlu0 %67, %v53
    %v69 = vpop.permute.xlu0 %68
    %72 = vset.pattern.permute.xlu0 0
    %73 = vperm.xlu0 %72, %v54
    %v74 = vpop.permute.xlu0 %73
    %77 = vset.pattern.permute.xlu0 0
    %78 = vperm.xlu0 %77, %v55
    %v79 = vpop.permute.xlu0 %78
    %82 = vset.pattern.permute.xlu0 0
    %83 = vperm.xlu0 %82, %v56
    %v84 = vpop.permute.xlu0 %83
    %87 = vset.pattern.permute.xlu0 0
    %88 = vperm.xlu0 %87, %v57
    %v89 = vpop.permute.xlu0 %88
    %92 = vset.pattern.permute.xlu0 0
    %93 = vperm.xlu0 %92, %v58
    %v94 = vpop.permute.xlu0 %93
    %97 = vset.pattern.permute.xlu0 0
    %98 = vperm.xlu0 %97, %v59
    %v99 = vpop.permute.xlu0 %98
    %v102 = vperm.slane %v60, 0
    %v103 = vperm.slane %v60, 2
    %v104 = vperm.slane %v60, 4
    %v105 = vperm.slane %v60, 6
    %v110 = vperm.slane %v102, 0
    %v111 = vperm.slane %v103, 0
    %v112 = vperm.slane %v104, 0
    %v113 = vperm.slane %v105, 0
    %v114 = vmul.f32 %v64, %v110
    %v115 = vmul.f32 %v64, %v111
    %v116 = vmul.f32 %v64, %v112
    %v117 = vmul.f32 %v64, %v113
    %v118 = vmul.f32 %v69, %v110
    %v119 = vmul.f32 %v69, %v111
    %v120 = vmul.f32 %v69, %v112
    %v121 = vmul.f32 %v69, %v113
    %v122 = vmul.f32 %v74, %v110
    %v123 = vmul.f32 %v74, %v111
    %v124 = vmul.f32 %v74, %v112
    %v125 = vmul.f32 %v74, %v113
    %v126 = vmul.f32 %v79, %v110
    %v127 = vmul.f32 %v79, %v111
    %v128 = vmul.f32 %v79, %v112
    %v129 = vmul.f32 %v79, %v113
    %v130 = vmul.f32 %v84, %v110
    %v131 = vmul.f32 %v84, %v111
    %v132 = vmul.f32 %v84, %v112
    %v133 = vmul.f32 %v84, %v113
    %v134 = vmul.f32 %v89, %v110
    %v135 = vmul.f32 %v89, %v111
    %v136 = vmul.f32 %v89, %v112
    %v137 = vmul.f32 %v89, %v113
    %v138 = vmul.f32 %v94, %v110
    %v139 = vmul.f32 %v94, %v111
    %v140 = vmul.f32 %v94, %v112
    %v141 = vmul.f32 %v94, %v113
    %v142 = vmul.f32 %v99, %v110
    %v143 = vmul.f32 %v99, %v111
    %v144 = vmul.f32 %v99, %v112
    %v145 = vmul.f32 %v99, %v113
    %146 = vset.pattern.permute.xlu0 1
    %147 = vperm.xlu0 %146, %v52
    %v148 = vpop.permute.xlu0 %147
    %150 = vset.pattern.permute.xlu0 1
    %151 = vperm.xlu0 %150, %v53
    %v152 = vpop.permute.xlu0 %151
    %154 = vset.pattern.permute.xlu0 1
    %155 = vperm.xlu0 %154, %v54
    %v156 = vpop.permute.xlu0 %155
    %158 = vset.pattern.permute.xlu0 1
    %159 = vperm.xlu0 %158, %v55
    %v160 = vpop.permute.xlu0 %159
    %162 = vset.pattern.permute.xlu0 1
    %163 = vperm.xlu0 %162, %v56
    %v164 = vpop.permute.xlu0 %163
    %166 = vset.pattern.permute.xlu0 1
    %167 = vperm.xlu0 %166, %v57
    %v168 = vpop.permute.xlu0 %167
    %170 = vset.pattern.permute.xlu0 1
    %171 = vperm.xlu0 %170, %v58
    %v172 = vpop.permute.xlu0 %171
    %174 = vset.pattern.permute.xlu0 1
    %175 = vperm.xlu0 %174, %v59
    %v176 = vpop.permute.xlu0 %175
    %v178 = vperm.slane %v60, 1
    %v179 = vperm.slane %v60, 3
    %v180 = vperm.slane %v60, 5
    %v181 = vperm.slane %v60, 7
    %v186 = vperm.slane %v178, 1
    %v187 = vperm.slane %v179, 1
    %v188 = vperm.slane %v180, 1
    %v189 = vperm.slane %v181, 1
    %v190 = vmul.f32 %v148, %v186
    %v191 = vmul.f32 %v148, %v187
    %v192 = vmul.f32 %v148, %v188
    %v193 = vmul.f32 %v148, %v189
    %v194 = vmul.f32 %v152, %v186
    %v195 = vmul.f32 %v152, %v187
    %v196 = vmul.f32 %v152, %v188
    %v197 = vmul.f32 %v152, %v189
    %v198 = vmul.f32 %v156, %v186
    %v199 = vmul.f32 %v156, %v187
    %v200 = vmul.f32 %v156, %v188
    %v201 = vmul.f32 %v156, %v189
    %v202 = vmul.f32 %v160, %v186
    %v203 = vmul.f32 %v160, %v187
    %v204 = vmul.f32 %v160, %v188
    %v205 = vmul.f32 %v160, %v189
    %v206 = vmul.f32 %v164, %v186
    %v207 = vmul.f32 %v164, %v187
    %v208 = vmul.f32 %v164, %v188
    %v209 = vmul.f32 %v164, %v189
    %v210 = vmul.f32 %v168, %v186
    %v211 = vmul.f32 %v168, %v187
    %v212 = vmul.f32 %v168, %v188
    %v213 = vmul.f32 %v168, %v189
    %v214 = vmul.f32 %v172, %v186
    %v215 = vmul.f32 %v172, %v187
    %v216 = vmul.f32 %v172, %v188
    %v217 = vmul.f32 %v172, %v189
    %v218 = vmul.f32 %v176, %v186
    %v219 = vmul.f32 %v176, %v187
    %v220 = vmul.f32 %v176, %v188
    %v221 = vmul.f32 %v176, %v189
    %v222 = vadd.f32 %v114, %v190
    %v223 = vadd.f32 %v115, %v191
    %v224 = vadd.f32 %v116, %v192
    %v225 = vadd.f32 %v117, %v193
    %v226 = vadd.f32 %v118, %v194
    %v227 = vadd.f32 %v119, %v195
    %v228 = vadd.f32 %v120, %v196
    %v229 = vadd.f32 %v121, %v197
    %v230 = vadd.f32 %v122, %v198
    %v231 = vadd.f32 %v123, %v199
    %v232 = vadd.f32 %v124, %v200
    %v233 = vadd.f32 %v125, %v201
    %v234 = vadd.f32 %v126, %v202
    %v235 = vadd.f32 %v127, %v203
    %v236 = vadd.f32 %v128, %v204
    %v237 = vadd.f32 %v129, %v205
    %v238 = vadd.f32 %v130, %v206
    %v239 = vadd.f32 %v131, %v207
    %v240 = vadd.f32 %v132, %v208
    %v241 = vadd.f32 %v133, %v209
    %v242 = vadd.f32 %v134, %v210
    %v243 = vadd.f32 %v135, %v211
    %v244 = vadd.f32 %v136, %v212
    %v245 = vadd.f32 %v137, %v213
    %v246 = vadd.f32 %v138, %v214
    %v247 = vadd.f32 %v139, %v215
    %v248 = vadd.f32 %v140, %v216
    %v249 = vadd.f32 %v141, %v217
    %v250 = vadd.f32 %v142, %v218
    %v251 = vadd.f32 %v143, %v219
    %v252 = vadd.f32 %v144, %v220
    %v253 = vadd.f32 %v145, %v221
    %v254 = vld [vmem:[%s2] sm:$0xf]
    %v256 = vperm.slane %v254, 0
    %v257 = vperm.slane %v254, 1
    %v258 = vperm.slane %v254, 2
    %v259 = vperm.slane %v254, 3
    %v264 = vadd.f32 %v222, %v256
    %v265 = vadd.f32 %v223, %v257
    %v266 = vadd.f32 %v224, %v258
    %v267 = vadd.f32 %v225, %v259
    %v268 = vadd.f32 %v226, %v256
    %v269 = vadd.f32 %v227, %v257
    %v270 = vadd.f32 %v228, %v258
    %v271 = vadd.f32 %v229, %v259
    %v272 = vadd.f32 %v230, %v256
    %v273 = vadd.f32 %v231, %v257
    %v274 = vadd.f32 %v232, %v258
    %v275 = vadd.f32 %v233, %v259
    %v276 = vadd.f32 %v234, %v256
    %v277 = vadd.f32 %v235, %v257
    %v278 = vadd.f32 %v236, %v258
    %v279 = vadd.f32 %v237, %v259
    %v280 = vadd.f32 %v238, %v256
    %v281 = vadd.f32 %v239, %v257
    %v282 = vadd.f32 %v240, %v258
    %v283 = vadd.f32 %v241, %v259
    %v284 = vadd.f32 %v242, %v256
    %v285 = vadd.f32 %v243, %v257
    %v286 = vadd.f32 %v244, %v258
    %v287 = vadd.f32 %v245, %v259
    %v288 = vadd.f32 %v246, %v256
    %v289 = vadd.f32 %v247, %v257
    %v290 = vadd.f32 %v248, %v258
    %v291 = vadd.f32 %v249, %v259
    %v292 = vadd.f32 %v250, %v256
    %v293 = vadd.f32 %v251, %v257
    %v294 = vadd.f32 %v252, %v258
    %v295 = vadd.f32 %v253, %v259
    %296 = vst [vmem:[#allocation2] sm:$0xff] %v264
    %297 = vst [vmem:[#allocation2 + $0x8] sm:$0xff] %v265
    %298 = vst [vmem:[#allocation2 + $0x10] sm:$0xff] %v266
    %299 = vst [vmem:[#allocation2 + $0x18] sm:$0xff] %v267
    %300 = vst [vmem:[#allocation2 + $0x20] sm:$0xff] %v268
    %301 = vst [vmem:[#allocation2 + $0x28] sm:$0xff] %v269
    %302 = vst [vmem:[#allocation2 + $0x30] sm:$0xff] %v270
    %303 = vst [vmem:[#allocation2 + $0x38] sm:$0xff] %v271
    %304 = vst [vmem:[#allocation2 + $0x40] sm:$0xff] %v272
    %305 = vst [vmem:[#allocation2 + $0x48] sm:$0xff] %v273
    %306 = vst [vmem:[#allocation2 + $0x50] sm:$0xff] %v274
    %307 = vst [vmem:[#allocation2 + $0x58] sm:$0xff] %v275
    %308 = vst [vmem:[#allocation2 + $0x60] sm:$0xff] %v276
    %309 = vst [vmem:[#allocation2 + $0x68] sm:$0xff] %v277
    %310 = vst [vmem:[#allocation2 + $0x70] sm:$0xff] %v278
    %311 = vst [vmem:[#allocation2 + $0x78] sm:$0xff] %v279
    %312 = vst [vmem:[#allocation2 + $0x80] sm:$0xff] %v280
    %313 = vst [vmem:[#allocation2 + $0x88] sm:$0xff] %v281
    %314 = vst [vmem:[#allocation2 + $0x90] sm:$0xff] %v282
    %315 = vst [vmem:[#allocation2 + $0x98] sm:$0xff] %v283
    %316 = vst [vmem:[#allocation2 + $0xa0] sm:$0xff] %v284
    %317 = vst [vmem:[#allocation2 + $0xa8] sm:$0xff] %v285
    %318 = vst [vmem:[#allocation2 + $0xb0] sm:$0xff] %v286
    %319 = vst [vmem:[#allocation2 + $0xb8] sm:$0xff] %v287
    %320 = vst [vmem:[#allocation2 + $0xc0] sm:$0xff] %v288
    %321 = vst [vmem:[#allocation2 + $0xc8] sm:$0xff] %v289
    %322 = vst [vmem:[#allocation2 + $0xd0] sm:$0xff] %v290
    %323 = vst [vmem:[#allocation2 + $0xd8] sm:$0xff] %v291
    %324 = vst [vmem:[#allocation2 + $0xe0] sm:$0xff] %v292
    %325 = vst [vmem:[#allocation2 + $0xe8] sm:$0xff] %v293
    %326 = vst [vmem:[#allocation2 + $0xf0] sm:$0xff] %v294
    %327 = vst [vmem:[#allocation2 + $0xf8] sm:$0xff] %v295
    %v328 = vld [vmem:[%s3] sm:$0xff]
    %v329 = vld [vmem:[%s3 + $0x8] sm:$0xff]
    %v330 = vld [vmem:[%s3 + $0x10] sm:$0xff]
    %v331 = vld [vmem:[%s3 + $0x18] sm:$0xff]
    %v332 = vld [vmem:[%s3 + $0x20] sm:$0xff]
    %v333 = vld [vmem:[%s3 + $0x28] sm:$0xff]
    %v334 = vld [vmem:[%s3 + $0x30] sm:$0xff]
    %v335 = vld [vmem:[%s3 + $0x38] sm:$0xff]
    %v336 = vld [vmem:[%s3 + $0x40] sm:$0xff]
    %v337 = vld [vmem:[%s3 + $0x48] sm:$0xff]
    %v338 = vld [vmem:[%s3 + $0x50] sm:$0xff]
    %v339 = vld [vmem:[%s3 + $0x58] sm:$0xff]
    %v340 = vld [vmem:[%s3 + $0x60] sm:$0xff]
    %v341 = vld [vmem:[%s3 + $0x68] sm:$0xff]
    %v342 = vld [vmem:[%s3 + $0x70] sm:$0xff]
    %v343 = vld [vmem:[%s3 + $0x78] sm:$0xff]
    %v344 = vld [vmem:[%s3 + $0x80] sm:$0xff]
    %v345 = vld [vmem:[%s3 + $0x88] sm:$0xff]
    %v346 = vld [vmem:[%s3 + $0x90] sm:$0xff]
    %v347 = vld [vmem:[%s3 + $0x98] sm:$0xff]
    %v348 = vld [vmem:[%s3 + $0xa0] sm:$0xff]
    %v349 = vld [vmem:[%s3 + $0xa8] sm:$0xff]
    %v350 = vld [vmem:[%s3 + $0xb0] sm:$0xff]
    %v351 = vld [vmem:[%s3 + $0xb8] sm:$0xff]
    %v352 = vld [vmem:[%s3 + $0xc0] sm:$0xff]
    %v353 = vld [vmem:[%s3 + $0xc8] sm:$0xff]
    %v354 = vld [vmem:[%s3 + $0xd0] sm:$0xff]
    %v355 = vld [vmem:[%s3 + $0xd8] sm:$0xff]
    %v356 = vld [vmem:[%s3 + $0xe0] sm:$0xff]
    %v357 = vld [vmem:[%s3 + $0xe8] sm:$0xff]
    %v358 = vld [vmem:[%s3 + $0xf0] sm:$0xff]
    %v359 = vld [vmem:[%s3 + $0xf8] sm:$0xff]
    %v360 = vld [vmem:[#allocation3] sm:$0xff]
    %v361 = vld [vmem:[#allocation3 + $0x8] sm:$0xff]
    %v362 = vld [vmem:[#allocation3 + $0x10] sm:$0xff]
    %v363 = vld [vmem:[#allocation3 + $0x18] sm:$0xff]
    %v364 = vld [vmem:[#allocation3 + $0x20] sm:$0xff]
    %v365 = vld [vmem:[#allocation3 + $0x28] sm:$0xff]
    %v366 = vld [vmem:[#allocation3 + $0x30] sm:$0xff]
    %v367 = vld [vmem:[#allocation3 + $0x38] sm:$0xff]
    %v368 = vld [vmem:[#allocation3 + $0x40] sm:$0xff]
    %v369 = vld [vmem:[#allocation3 + $0x48] sm:$0xff]
    %v370 = vld [vmem:[#allocation3 + $0x50] sm:$0xff]
    %v371 = vld [vmem:[#allocation3 + $0x58] sm:$0xff]
    %v372 = vld [vmem:[#allocation3 + $0x60] sm:$0xff]
    %v373 = vld [vmem:[#allocation3 + $0x68] sm:$0xff]
    %v374 = vld [vmem:[#allocation3 + $0x70] sm:$0xff]
    %v375 = vld [vmem:[#allocation3 + $0x78] sm:$0xff]
    %v376 = vld [vmem:[#allocation3 + $0x80] sm:$0xff]
    %v377 = vld [vmem:[#allocation3 + $0x88] sm:$0xff]
    %v378 = vld [vmem:[#allocation3 + $0x90] sm:$0xff]
    %v379 = vld [vmem:[#allocation3 + $0x98] sm:$0xff]
    %v380 = vld [vmem:[#allocation3 + $0xa0] sm:$0xff]
    %v381 = vld [vmem:[#allocation3 + $0xa8] sm:$0xff]
    %v382 = vld [vmem:[#allocation3 + $0xb0] sm:$0xff]
    %v383 = vld [vmem:[#allocation3 + $0xb8] sm:$0xff]
    %v384 = vld [vmem:[#allocation3 + $0xc0] sm:$0xff]
    %v385 = vld [vmem:[#allocation3 + $0xc8] sm:$0xff]
    %v386 = vld [vmem:[#allocation3 + $0xd0] sm:$0xff]
    %v387 = vld [vmem:[#allocation3 + $0xd8] sm:$0xff]
    %v388 = vld [vmem:[#allocation3 + $0xe0] sm:$0xff]
    %v389 = vld [vmem:[#allocation3 + $0xe8] sm:$0xff]
    %v390 = vld [vmem:[#allocation3 + $0xf0] sm:$0xff]
    %v391 = vld [vmem:[#allocation3 + $0xf8] sm:$0xff]
    %v392 = vld [vmem:[#allocation3 + $0x100] sm:$0xff]
    %v393 = vld [vmem:[#allocation3 + $0x108] sm:$0xff]
    %v394 = vld [vmem:[#allocation3 + $0x110] sm:$0xff]
    %v395 = vld [vmem:[#allocation3 + $0x118] sm:$0xff]
    %v396 = vld [vmem:[#allocation3 + $0x120] sm:$0xff]
    %v397 = vld [vmem:[#allocation3 + $0x128] sm:$0xff]
    %v398 = vld [vmem:[#allocation3 + $0x130] sm:$0xff]
    %v399 = vld [vmem:[#allocation3 + $0x138] sm:$0xff]
    %v400 = vld [vmem:[#allocation3 + $0x140] sm:$0xff]
    %v401 = vld [vmem:[#allocation3 + $0x148] sm:$0xff]
    %v402 = vld [vmem:[#allocation3 + $0x150] sm:$0xff]
    %v403 = vld [vmem:[#allocation3 + $0x158] sm:$0xff]
    %v404 = vld [vmem:[#allocation3 + $0x160] sm:$0xff]
    %v405 = vld [vmem:[#allocation3 + $0x168] sm:$0xff]
    %v406 = vld [vmem:[#allocation3 + $0x170] sm:$0xff]
    %v407 = vld [vmem:[#allocation3 + $0x178] sm:$0xff]
    %v408 = vld [vmem:[#allocation3 + $0x180] sm:$0xff]
    %v409 = vld [vmem:[#allocation3 + $0x188] sm:$0xff]
    %v410 = vld [vmem:[#allocation3 + $0x190] sm:$0xff]
    %v411 = vld [vmem:[#allocation3 + $0x198] sm:$0xff]
    %v412 = vld [vmem:[#allocation3 + $0x1a0] sm:$0xff]
    %v413 = vld [vmem:[#allocation3 + $0x1a8] sm:$0xff]
    %v414 = vld [vmem:[#allocation3 + $0x1b0] sm:$0xff]
    %v415 = vld [vmem:[#allocation3 + $0x1b8] sm:$0xff]
    %v416 = vld [vmem:[#allocation3 + $0x1c0] sm:$0xff]
    %v417 = vld [vmem:[#allocation3 + $0x1c8] sm:$0xff]
    %v418 = vld [vmem:[#allocation3 + $0x1d0] sm:$0xff]
    %v419 = vld [vmem:[#allocation3 + $0x1d8] sm:$0xff]
    %v420 = vld [vmem:[#allocation3 + $0x1e0] sm:$0xff]
    %v421 = vld [vmem:[#allocation3 + $0x1e8] sm:$0xff]
    %v422 = vld [vmem:[#allocation3 + $0x1f0] sm:$0xff]
    %v423 = vld [vmem:[#allocation3 + $0x1f8] sm:$0xff]
    %v424 = vld [vmem:[%s5] sm:$0xf]
    %v426 = vperm.slane %v424, 0
    %v427 = vperm.slane %v424, 1
    %v428 = vperm.slane %v424, 2
    %v429 = vperm.slane %v424, 3
    %v434 = vld [vmem:[#allocation2] sm:$0xff]
    %v435 = vld [vmem:[#allocation2 + $0x8] sm:$0xff]
    %v436 = vld [vmem:[#allocation2 + $0x10] sm:$0xff]
    %v437 = vld [vmem:[#allocation2 + $0x18] sm:$0xff]
    %v470 = vunpack.c.l.b16 %v328
    %v471 = vunpack.c.h.b16 %v328
    %v472 = vunpack.c.l.b16 %v329
    %v473 = vunpack.c.h.b16 %v329
    %v474 = vunpack.c.l.b16 %v330
    %v475 = vunpack.c.h.b16 %v330
    %v476 = vunpack.c.l.b16 %v331
    %v477 = vunpack.c.h.b16 %v331
    %v478 = vunpack.c.l.b16 %v332
    %v479 = vunpack.c.h.b16 %v332
    %v480 = vunpack.c.l.b16 %v333
    %v481 = vunpack.c.h.b16 %v333
    %v482 = vunpack.c.l.b16 %v334
    %v483 = vunpack.c.h.b16 %v334
    %v484 = vunpack.c.l.b16 %v335
    %v485 = vunpack.c.h.b16 %v335
    %v486 = vunpack.c.l.b16 %v336
    %v487 = vunpack.c.h.b16 %v336
    %v488 = vunpack.c.l.b16 %v337
    %v489 = vunpack.c.h.b16 %v337
    %v490 = vunpack.c.l.b16 %v338
    %v491 = vunpack.c.h.b16 %v338
    %v492 = vunpack.c.l.b16 %v339
    %v493 = vunpack.c.h.b16 %v339
    %v494 = vunpack.c.l.b16 %v340
    %v495 = vunpack.c.h.b16 %v340
    %v496 = vunpack.c.l.b16 %v341
    %v497 = vunpack.c.h.b16 %v341
    %v498 = vunpack.c.l.b16 %v342
    %v499 = vunpack.c.h.b16 %v342
    %v500 = vunpack.c.l.b16 %v343
    %v501 = vunpack.c.h.b16 %v343
    %v502 = vunpack.c.l.b16 %v344
    %v503 = vunpack.c.h.b16 %v344
    %v504 = vunpack.c.l.b16 %v345
    %v505 = vunpack.c.h.b16 %v345
    %v506 = vunpack.c.l.b16 %v346
    %v507 = vunpack.c.h.b16 %v346
    %v508 = vunpack.c.l.b16 %v347
    %v509 = vunpack.c.h.b16 %v347
    %v510 = vunpack.c.l.b16 %v348
    %v511 = vunpack.c.h.b16 %v348
    %v512 = vunpack.c.l.b16 %v349
    %v513 = vunpack.c.h.b16 %v349
    %v514 = vunpack.c.l.b16 %v350
    %v515 = vunpack.c.h.b16 %v350
    %v516 = vunpack.c.l.b16 %v351
    %v517 = vunpack.c.h.b16 %v351
    %v518 = vunpack.c.l.b16 %v352
    %v519 = vunpack.c.h.b16 %v352
    %v520 = vunpack.c.l.b16 %v353
    %v521 = vunpack.c.h.b16 %v353
    %v522 = vunpack.c.l.b16 %v354
    %v523 = vunpack.c.h.b16 %v354
    %v524 = vunpack.c.l.b16 %v355
    %v525 = vunpack.c.h.b16 %v355
    %v526 = vunpack.c.l.b16 %v356
    %v527 = vunpack.c.h.b16 %v356
    %v528 = vunpack.c.l.b16 %v357
    %v529 = vunpack.c.h.b16 %v357
    %v530 = vunpack.c.l.b16 %v358
    %v531 = vunpack.c.h.b16 %v358
    %v532 = vunpack.c.l.b16 %v359
    %v533 = vunpack.c.h.b16 %v359
    %v534 = vpack.c.b16 %v474, %v470
    %v535 = vpack.c.b16 %v475, %v471
    %v536 = vpack.c.b16 %v476, %v472
    %v537 = vpack.c.b16 %v477, %v473
    %v538 = vpack.c.b16 %v482, %v478
    %v539 = vpack.c.b16 %v483, %v479
    %v540 = vpack.c.b16 %v484, %v480
    %v541 = vpack.c.b16 %v485, %v481
    %v542 = vpack.c.b16 %v490, %v486
    %v543 = vpack.c.b16 %v491, %v487
    %v544 = vpack.c.b16 %v492, %v488
    %v545 = vpack.c.b16 %v493, %v489
    %v546 = vpack.c.b16 %v498, %v494
    %v547 = vpack.c.b16 %v499, %v495
    %v548 = vpack.c.b16 %v500, %v496
    %v549 = vpack.c.b16 %v501, %v497
    %v550 = vpack.c.b16 %v506, %v502
    %v551 = vpack.c.b16 %v507, %v503
    %v552 = vpack.c.b16 %v508, %v504
    %v553 = vpack.c.b16 %v509, %v505
    %v554 = vpack.c.b16 %v514, %v510
    %v555 = vpack.c.b16 %v515, %v511
    %v556 = vpack.c.b16 %v516, %v512
    %v557 = vpack.c.b16 %v517, %v513
    %v558 = vpack.c.b16 %v522, %v518
    %v559 = vpack.c.b16 %v523, %v519
    %v560 = vpack.c.b16 %v524, %v520
    %v561 = vpack.c.b16 %v525, %v521
    %v562 = vpack.c.b16 %v530, %v526
    %v563 = vpack.c.b16 %v531, %v527
    %v564 = vpack.c.b16 %v532, %v528
    %v565 = vpack.c.b16 %v533, %v529
    %598 = vmatpush.bf16.msra.mxu0 %v562
    %599 = vmatpush.bf16.msra.mxu0 %v558
    %600 = vmatpush.bf16.msra.mxu0 %v554
    %601 = vmatpush.bf16.msra.mxu0 %v550
    %602 = vmatpush.bf16.msra.mxu0 %v546
    %603 = vmatpush.bf16.msra.mxu0 %v542
    %604 = vmatpush.bf16.msra.mxu0 %v538
    %605 = vmatpush.bf16.msra.mxu0 %v534
    %606 = vmatmul.bf16.gmra.mxu0 0
    %v607 = vpop.f32.mrf.mxu0
    %v608 = vadd.f32 0.0, %v607
    %v609 = vpop.f32.mrf.mxu0
    %610 = vdwg.mxu0
    %611 = vmatpush.bf16.msra.mxu0 %v563
    %612 = vmatpush.bf16.msra.mxu0 %v559
    %613 = vmatpush.bf16.msra.mxu0 %v555
    %614 = vmatpush.bf16.msra.mxu0 %v551
    %615 = vmatpush.bf16.msra.mxu0 %v547
    %616 = vmatpush.bf16.msra.mxu0 %v543
    %617 = vmatpush.bf16.msra.mxu0 %v539
    %618 = vmatpush.bf16.msra.mxu0 %v535
    %619 = vmatmul.bf16.gmra.mxu0 0
    %v620 = vpop.f32.mrf.mxu0
    %v621 = vadd.f32 0.0, %v620
    %v622 = vpop.f32.mrf.mxu0
    %623 = vdwg.mxu0
    %624 = vmatpush.bf16.msra.mxu0 %v564
    %625 = vmatpush.bf16.msra.mxu0 %v560
    %626 = vmatpush.bf16.msra.mxu0 %v556
    %627 = vmatpush.bf16.msra.mxu0 %v552
    %628 = vmatpush.bf16.msra.mxu0 %v548
    %629 = vmatpush.bf16.msra.mxu0 %v544
    %630 = vmatpush.bf16.msra.mxu0 %v540
    %631 = vmatpush.bf16.msra.mxu0 %v536
    %632 = vmatmul.bf16.gmra.mxu0 0
    %v633 = vpop.f32.mrf.mxu0
    %v634 = vadd.f32 0.0, %v633
    %v635 = vpop.f32.mrf.mxu0
    %636 = vdwg.mxu0
    %637 = vmatpush.bf16.msra.mxu0 %v565
    %638 = vmatpush.bf16.msra.mxu0 %v561
    %639 = vmatpush.bf16.msra.mxu0 %v557
    %640 = vmatpush.bf16.msra.mxu0 %v553
    %641 = vmatpush.bf16.msra.mxu0 %v549
    %642 = vmatpush.bf16.msra.mxu0 %v545
    %643 = vmatpush.bf16.msra.mxu0 %v541
    %644 = vmatpush.bf16.msra.mxu0 %v537
    %645 = vmatmul.bf16.gmra.mxu0 0
    %v646 = vpop.f32.mrf.mxu0
    %v647 = vadd.f32 0.0, %v646
    %v648 = vpop.f32.mrf.mxu0
    %649 = vdwg.mxu0
    %v650 = vadd.f32 %v434, %v608
    %v651 = vadd.f32 %v435, %v621
    %v652 = vadd.f32 %v436, %v634
    %v653 = vadd.f32 %v437, %v647
    %v654 = vxor.u32 %v650, 2147483648
    %v655 = vxor.u32 %v651, 2147483648
    %v656 = vxor.u32 %v653, 2147483648
    %v657 = vmul.f32 %v654, 1.442695
    %v658 = vpow.pop %v657
    %v659 = vmul.f32 %v655, 1.442695
    %v660 = vpow.pop %v659
    %v661 = vmul.f32 %v656, 1.442695
    %v662 = vpow.pop %v661
    %v663 = vadd.f32 %v658, 1.0
    %v664 = vadd.f32 %v660, 1.0
    %v665 = vadd.f32 %v662, 1.0
    %v666 = vrcp.pop %v663
    %v667 = vmul.f32 %v663, %v666
    %v668 = vsub.f32 1.0, %v667
    %v669 = vmul.f32 %v666, %v668
    %v670 = vadd.f32 %v666, %v669
    %vm671 = vweird.f32 %v663
    %vm672 = vweird.f32 %v666
    %vm673 = vmor %vm671, %vm672
    %v674 = vsel %vm673, %v666, %v670
    %v675 = vand.u32 2147483647, %v663
    %vm676 = vcmp.eq.f32.partialorder %v675, 8.507059e+37
    %v677 = vand.u32 %v663, 2147483648
    %v678 = vor.u32 1.1754944e-38, %v677
    %v679 = vsel %vm676, %v678, %v674
    %v680 = vmul.f32 1.0, %v679
    %v681 = vrcp.pop %v664
    %v682 = vmul.f32 %v664, %v681
    %v683 = vsub.f32 1.0, %v682
    %v684 = vmul.f32 %v681, %v683
    %v685 = vadd.f32 %v681, %v684
    %vm686 = vweird.f32 %v664
    %vm687 = vweird.f32 %v681
    %vm688 = vmor %vm686, %vm687
    %v689 = vsel %vm688, %v681, %v685
    %v690 = vand.u32 2147483647, %v664
    %vm691 = vcmp.eq.f32.partialorder %v690, 8.507059e+37
    %v692 = vand.u32 %v664, 2147483648
    %v693 = vor.u32 1.1754944e-38, %v692
    %v694 = vsel %vm691, %v693, %v689
    %v695 = vmul.f32 1.0, %v694
    %v696 = vrcp.pop %v665
    %v697 = vmul.f32 %v665, %v696
    %v698 = vsub.f32 1.0, %v697
    %v699 = vmul.f32 %v696, %v698
    %v700 = vadd.f32 %v696, %v699
    %vm701 = vweird.f32 %v665
    %vm702 = vweird.f32 %v696
    %vm703 = vmor %vm701, %vm702
    %v704 = vsel %vm703, %v696, %v700
    %v705 = vand.u32 2147483647, %v665
    %vm706 = vcmp.eq.f32.partialorder %v705, 8.507059e+37
    %v707 = vand.u32 %v665, 2147483648
    %v708 = vor.u32 1.1754944e-38, %v707
    %v709 = vsel %vm706, %v708, %v704
    %v710 = vmul.f32 1.0, %v709
    %v711 = vtanh.pop %v652
    %v712 = vmul.f32 %v695, 0.0
    %v713 = vmul.f32 %v680, %v711
    %v714 = vadd.f32 %v712, %v713
    %v715 = vtanh.pop %v714
    %v716 = vmul.f32 %v710, %v715
    %v717 = vpack.c.bf16 %v716, %v716
    %v718 = vpack.c.bf16 0.0, 0.0
    %v783 = vunpack.c.l.b16 %v360
    %v784 = vunpack.c.h.b16 %v360
    %v785 = vunpack.c.l.b16 %v361
    %v786 = vunpack.c.h.b16 %v361
    %v787 = vunpack.c.l.b16 %v362
    %v788 = vunpack.c.h.b16 %v362
    %v789 = vunpack.c.l.b16 %v363
    %v790 = vunpack.c.h.b16 %v363
    %v791 = vunpack.c.l.b16 %v364
    %v792 = vunpack.c.h.b16 %v364
    %v793 = vunpack.c.l.b16 %v365
    %v794 = vunpack.c.h.b16 %v365
    %v795 = vunpack.c.l.b16 %v366
    %v796 = vunpack.c.h.b16 %v366
    %v797 = vunpack.c.l.b16 %v367
    %v798 = vunpack.c.h.b16 %v367
    %v799 = vunpack.c.l.b16 %v368
    %v800 = vunpack.c.h.b16 %v368
    %v801 = vunpack.c.l.b16 %v369
    %v802 = vunpack.c.h.b16 %v369
    %v803 = vunpack.c.l.b16 %v370
    %v804 = vunpack.c.h.b16 %v370
    %v805 = vunpack.c.l.b16 %v371
    %v806 = vunpack.c.h.b16 %v371
    %v807 = vunpack.c.l.b16 %v372
    %v808 = vunpack.c.h.b16 %v372
    %v809 = vunpack.c.l.b16 %v373
    %v810 = vunpack.c.h.b16 %v373
    %v811 = vunpack.c.l.b16 %v374
    %v812 = vunpack.c.h.b16 %v374
    %v813 = vunpack.c.l.b16 %v375
    %v814 = vunpack.c.h.b16 %v375
    %v815 = vunpack.c.l.b16 %v376
    %v816 = vunpack.c.h.b16 %v376
    %v817 = vunpack.c.l.b16 %v377
    %v818 = vunpack.c.h.b16 %v377
    %v819 = vunpack.c.l.b16 %v378
    %v820 = vunpack.c.h.b16 %v378
    %v821 = vunpack.c.l.b16 %v379
    %v822 = vunpack.c.h.b16 %v379
    %v823 = vunpack.c.l.b16 %v380
    %v824 = vunpack.c.h.b16 %v380
    %v825 = vunpack.c.l.b16 %v381
    %v826 = vunpack.c.h.b16 %v381
    %v827 = vunpack.c.l.b16 %v382
    %v828 = vunpack.c.h.b16 %v382
    %v829 = vunpack.c.l.b16 %v383
    %v830 = vunpack.c.h.b16 %v383
    %v831 = vunpack.c.l.b16 %v384
    %v832 = vunpack.c.h.b16 %v384
    %v833 = vunpack.c.l.b16 %v385
    %v834 = vunpack.c.h.b16 %v385
    %v835 = vunpack.c.l.b16 %v386
    %v836 = vunpack.c.h.b16 %v386
    %v837 = vunpack.c.l.b16 %v387
    %v838 = vunpack.c.h.b16 %v387
    %v839 = vunpack.c.l.b16 %v388
    %v840 = vunpack.c.h.b16 %v388
    %v841 = vunpack.c.l.b16 %v389
    %v842 = vunpack.c.h.b16 %v389
    %v843 = vunpack.c.l.b16 %v390
    %v844 = vunpack.c.h.b16 %v390
    %v845 = vunpack.c.l.b16 %v391
    %v846 = vunpack.c.h.b16 %v391
    %v847 = vunpack.c.l.b16 %v392
    %v848 = vunpack.c.h.b16 %v392
    %v849 = vunpack.c.l.b16 %v393
    %v850 = vunpack.c.h.b16 %v393
    %v851 = vunpack.c.l.b16 %v394
    %v852 = vunpack.c.h.b16 %v394
    %v853 = vunpack.c.l.b16 %v395
    %v854 = vunpack.c.h.b16 %v395
    %v855 = vunpack.c.l.b16 %v396
    %v856 = vunpack.c.h.b16 %v396
    %v857 = vunpack.c.l.b16 %v397
    %v858 = vunpack.c.h.b16 %v397
    %v859 = vunpack.c.l.b16 %v398
    %v860 = vunpack.c.h.b16 %v398
    %v861 = vunpack.c.l.b16 %v399
    %v862 = vunpack.c.h.b16 %v399
    %v863 = vunpack.c.l.b16 %v400
    %v864 = vunpack.c.h.b16 %v400
    %v865 = vunpack.c.l.b16 %v401
    %v866 = vunpack.c.h.b16 %v401
    %v867 = vunpack.c.l.b16 %v402
    %v868 = vunpack.c.h.b16 %v402
    %v869 = vunpack.c.l.b16 %v403
    %v870 = vunpack.c.h.b16 %v403
    %v871 = vunpack.c.l.b16 %v404
    %v872 = vunpack.c.h.b16 %v404
    %v873 = vunpack.c.l.b16 %v405
    %v874 = vunpack.c.h.b16 %v405
    %v875 = vunpack.c.l.b16 %v406
    %v876 = vunpack.c.h.b16 %v406
    %v877 = vunpack.c.l.b16 %v407
    %v878 = vunpack.c.h.b16 %v407
    %v879 = vunpack.c.l.b16 %v408
    %v880 = vunpack.c.h.b16 %v408
    %v881 = vunpack.c.l.b16 %v409
    %v882 = vunpack.c.h.b16 %v409
    %v883 = vunpack.c.l.b16 %v410
    %v884 = vunpack.c.h.b16 %v410
    %v885 = vunpack.c.l.b16 %v411
    %v886 = vunpack.c.h.b16 %v411
    %v887 = vunpack.c.l.b16 %v412
    %v888 = vunpack.c.h.b16 %v412
    %v889 = vunpack.c.l.b16 %v413
    %v890 = vunpack.c.h.b16 %v413
    %v891 = vunpack.c.l.b16 %v414
    %v892 = vunpack.c.h.b16 %v414
    %v893 = vunpack.c.l.b16 %v415
    %v894 = vunpack.c.h.b16 %v415
    %v895 = vunpack.c.l.b16 %v416
    %v896 = vunpack.c.h.b16 %v416
    %v897 = vunpack.c.l.b16 %v417
    %v898 = vunpack.c.h.b16 %v417
    %v899 = vunpack.c.l.b16 %v418
    %v900 = vunpack.c.h.b16 %v418
    %v901 = vunpack.c.l.b16 %v419
    %v902 = vunpack.c.h.b16 %v419
    %v903 = vunpack.c.l.b16 %v420
    %v904 = vunpack.c.h.b16 %v420
    %v905 = vunpack.c.l.b16 %v421
    %v906 = vunpack.c.h.b16 %v421
    %v907 = vunpack.c.l.b16 %v422
    %v908 = vunpack.c.h.b16 %v422
    %v909 = vunpack.c.l.b16 %v423
    %v910 = vunpack.c.h.b16 %v423
    %v911 = vpack.c.b16 %v787, %v783
    %v912 = vpack.c.b16 %v788, %v784
    %v913 = vpack.c.b16 %v789, %v785
    %v914 = vpack.c.b16 %v790, %v786
    %v915 = vpack.c.b16 %v795, %v791
    %v916 = vpack.c.b16 %v796, %v792
    %v917 = vpack.c.b16 %v797, %v793
    %v918 = vpack.c.b16 %v798, %v794
    %v919 = vpack.c.b16 %v803, %v799
    %v920 = vpack.c.b16 %v804, %v800
    %v921 = vpack.c.b16 %v805, %v801
    %v922 = vpack.c.b16 %v806, %v802
    %v923 = vpack.c.b16 %v811, %v807
    %v924 = vpack.c.b16 %v812, %v808
    %v925 = vpack.c.b16 %v813, %v809
    %v926 = vpack.c.b16 %v814, %v810
    %v927 = vpack.c.b16 %v819, %v815
    %v928 = vpack.c.b16 %v820, %v816
    %v929 = vpack.c.b16 %v821, %v817
    %v930 = vpack.c.b16 %v822, %v818
    %v931 = vpack.c.b16 %v827, %v823
    %v932 = vpack.c.b16 %v828, %v824
    %v933 = vpack.c.b16 %v829, %v825
    %v934 = vpack.c.b16 %v830, %v826
    %v935 = vpack.c.b16 %v835, %v831
    %v936 = vpack.c.b16 %v836, %v832
    %v937 = vpack.c.b16 %v837, %v833
    %v938 = vpack.c.b16 %v838, %v834
    %v939 = vpack.c.b16 %v843, %v839
    %v940 = vpack.c.b16 %v844, %v840
    %v941 = vpack.c.b16 %v845, %v841
    %v942 = vpack.c.b16 %v846, %v842
    %v943 = vpack.c.b16 %v851, %v847
    %v944 = vpack.c.b16 %v852, %v848
    %v945 = vpack.c.b16 %v853, %v849
    %v946 = vpack.c.b16 %v854, %v850
    %v947 = vpack.c.b16 %v859, %v855
    %v948 = vpack.c.b16 %v860, %v856
    %v949 = vpack.c.b16 %v861, %v857
    %v950 = vpack.c.b16 %v862, %v858
    %v951 = vpack.c.b16 %v867, %v863
    %v952 = vpack.c.b16 %v868, %v864
    %v953 = vpack.c.b16 %v869, %v865
    %v954 = vpack.c.b16 %v870, %v866
    %v955 = vpack.c.b16 %v875, %v871
    %v956 = vpack.c.b16 %v876, %v872
    %v957 = vpack.c.b16 %v877, %v873
    %v958 = vpack.c.b16 %v878, %v874
    %v959 = vpack.c.b16 %v883, %v879
    %v960 = vpack.c.b16 %v884, %v880
    %v961 = vpack.c.b16 %v885, %v881
    %v962 = vpack.c.b16 %v886, %v882
    %v963 = vpack.c.b16 %v891, %v887
    %v964 = vpack.c.b16 %v892, %v888
    %v965 = vpack.c.b16 %v893, %v889
    %v966 = vpack.c.b16 %v894, %v890
    %v967 = vpack.c.b16 %v899, %v895
    %v968 = vpack.c.b16 %v900, %v896
    %v969 = vpack.c.b16 %v901, %v897
    %v970 = vpack.c.b16 %v902, %v898
    %v971 = vpack.c.b16 %v907, %v903
    %v972 = vpack.c.b16 %v908, %v904
    %v973 = vpack.c.b16 %v909, %v905
    %v974 = vpack.c.b16 %v910, %v906
    %1039 = vmatpush.bf16.msra.mxu0 %v939
    %1040 = vmatpush.bf16.msra.mxu0 %v935
    %1041 = vmatpush.bf16.msra.mxu0 %v931
    %1042 = vmatpush.bf16.msra.mxu0 %v927
    %1043 = vmatpush.bf16.msra.mxu0 %v923
    %1044 = vmatpush.bf16.msra.mxu0 %v919
    %1045 = vmatpush.bf16.msra.mxu0 %v915
    %1046 = vmatpush.bf16.msra.mxu0 %v911
    %1047 = vmatmul.bf16.gmra.mxu0 %v717
    %v1048 = vpop.f32.mrf.mxu0
    %v1049 = vadd.f32 %v426, %v1048
    %v1050 = vpop.f32.mrf.mxu0
    %1051 = vdwg.mxu0
    %1052 = vmatpush.bf16.msra.mxu0 %v971
    %1053 = vmatpush.bf16.msra.mxu0 %v967
    %1054 = vmatpush.bf16.msra.mxu0 %v963
    %1055 = vmatpush.bf16.msra.mxu0 %v959
    %1056 = vmatpush.bf16.msra.mxu0 %v955
    %1057 = vmatpush.bf16.msra.mxu0 %v951
    %1058 = vmatpush.bf16.msra.mxu0 %v947
    %1059 = vmatpush.bf16.msra.mxu0 %v943
    %1060 = vmatmul.bf16.gmra.mxu0 %v718
    %v1061 = vpop.f32.mrf.mxu0
    %v1062 = vadd.f32 %v1049, %v1061
    %v1063 = vpop.f32.mrf.mxu0
    %1064 = vdwg.mxu0
    %1065 = vmatpush.bf16.msra.mxu0 %v940
    %1066 = vmatpush.bf16.msra.mxu0 %v936
    %1067 = vmatpush.bf16.msra.mxu0 %v932
    %1068 = vmatpush.bf16.msra.mxu0 %v928
    %1069 = vmatpush.bf16.msra.mxu0 %v924
    %1070 = vmatpush.bf16.msra.mxu0 %v920
    %1071 = vmatpush.bf16.msra.mxu0 %v916
    %1072 = vmatpush.bf16.msra.mxu0 %v912
    %1073 = vmatmul.bf16.gmra.mxu0 %v717
    %v1074 = vpop.f32.mrf.mxu0
    %v1075 = vadd.f32 %v427, %v1074
    %v1076 = vpop.f32.mrf.mxu0
    %1077 = vdwg.mxu0
    %1078 = vmatpush.bf16.msra.mxu0 %v972
    %1079 = vmatpush.bf16.msra.mxu0 %v968
    %1080 = vmatpush.bf16.msra.mxu0 %v964
    %1081 = vmatpush.bf16.msra.mxu0 %v960
    %1082 = vmatpush.bf16.msra.mxu0 %v956
    %1083 = vmatpush.bf16.msra.mxu0 %v952
    %1084 = vmatpush.bf16.msra.mxu0 %v948
    %1085 = vmatpush.bf16.msra.mxu0 %v944
    %1086 = vmatmul.bf16.gmra.mxu0 %v718
    %v1087 = vpop.f32.mrf.mxu0
    %v1088 = vadd.f32 %v1075, %v1087
    %v1089 = vpop.f32.mrf.mxu0
    %1090 = vdwg.mxu0
    %1091 = vmatpush.bf16.msra.mxu0 %v941
    %1092 = vmatpush.bf16.msra.mxu0 %v937
    %1093 = vmatpush.bf16.msra.mxu0 %v933
    %1094 = vmatpush.bf16.msra.mxu0 %v929
    %1095 = vmatpush.bf16.msra.mxu0 %v925
    %1096 = vmatpush.bf16.msra.mxu0 %v921
    %1097 = vmatpush.bf16.msra.mxu0 %v917
    %1098 = vmatpush.bf16.msra.mxu0 %v913
    %1099 = vmatmul.bf16.gmra.mxu0 %v717
    %v1100 = vpop.f32.mrf.mxu0
    %v1101 = vadd.f32 %v428, %v1100
    %v1102 = vpop.f32.mrf.mxu0
    %1103 = vdwg.mxu0
    %1104 = vmatpush.bf16.msra.mxu0 %v973
    %1105 = vmatpush.bf16.msra.mxu0 %v969
    %1106 = vmatpush.bf16.msra.mxu0 %v965
    %1107 = vmatpush.bf16.msra.mxu0 %v961
    %1108 = vmatpush.bf16.msra.mxu0 %v957
    %1109 = vmatpush.bf16.msra.mxu0 %v953
    %1110 = vmatpush.bf16.msra.mxu0 %v949
    %1111 = vmatpush.bf16.msra.mxu0 %v945
    %1112 = vmatmul.bf16.gmra.mxu0 %v718
    %v1113 = vpop.f32.mrf.mxu0
    %v1114 = vadd.f32 %v1101, %v1113
    %v1115 = vpop.f32.mrf.mxu0
    %1116 = vdwg.mxu0
    %1117 = vmatpush.bf16.msra.mxu0 %v942
    %1118 = vmatpush.bf16.msra.mxu0 %v938
    %1119 = vmatpush.bf16.msra.mxu0 %v934
    %1120 = vmatpush.bf16.msra.mxu0 %v930
    %1121 = vmatpush.bf16.msra.mxu0 %v926
    %1122 = vmatpush.bf16.msra.mxu0 %v922
    %1123 = vmatpush.bf16.msra.mxu0 %v918
    %1124 = vmatpush.bf16.msra.mxu0 %v914
    %1125 = vmatmul.bf16.gmra.mxu0 %v717
    %v1126 = vpop.f32.mrf.mxu0
    %v1127 = vadd.f32 %v429, %v1126
    %v1128 = vpop.f32.mrf.mxu0
    %1129 = vdwg.mxu0
    %1130 = vmatpush.bf16.msra.mxu0 %v974
    %1131 = vmatpush.bf16.msra.mxu0 %v970
    %1132 = vmatpush.bf16.msra.mxu0 %v966
    %1133 = vmatpush.bf16.msra.mxu0 %v962
    %1134 = vmatpush.bf16.msra.mxu0 %v958
    %1135 = vmatpush.bf16.msra.mxu0 %v954
    %1136 = vmatpush.bf16.msra.mxu0 %v950
    %1137 = vmatpush.bf16.msra.mxu0 %v946
    %1138 = vmatmul.bf16.gmra.mxu0 %v718
    %v1139 = vpop.f32.mrf.mxu0
    %v1140 = vadd.f32 %v1127, %v1139
    %v1141 = vpop.f32.mrf.mxu0
    %1142 = vdwg.mxu0
    %v1143 = vxor.u32 %v1062, 2147483648
    %v1144 = vxor.u32 %v1088, 2147483648
    %v1145 = vxor.u32 %v1140, 2147483648
    %v1146 = vmul.f32 %v1143, 1.442695
    %v1147 = vpow.pop %v1146
    %v1148 = vmul.f32 %v1144, 1.442695
    %v1149 = vpow.pop %v1148
    %v1150 = vmul.f32 %v1145, 1.442695
    %v1151 = vpow.pop %v1150
    %v1152 = vadd.f32 %v1147, 1.0
    %v1153 = vadd.f32 %v1149, 1.0
    %v1154 = vadd.f32 %v1151, 1.0
    %v1155 = vrcp.pop %v1152
    %v1156 = vmul.f32 %v1152, %v1155
    %v1157 = vsub.f32 1.0, %v1156
    %v1158 = vmul.f32 %v1155, %v1157
    %v1159 = vadd.f32 %v1155, %v1158
    %vm1160 = vweird.f32 %v1152
    %vm1161 = vweird.f32 %v1155
    %vm1162 = vmor %vm1160, %vm1161
    %v1163 = vsel %vm1162, %v1155, %v1159
    %v1164 = vand.u32 2147483647, %v1152
    %vm1165 = vcmp.eq.f32.partialorder %v1164, 8.507059e+37
    %v1166 = vand.u32 %v1152, 2147483648
    %v1167 = vor.u32 1.1754944e-38, %v1166
    %v1168 = vsel %vm1165, %v1167, %v1163
    %v1169 = vmul.f32 1.0, %v1168
    %v1170 = vrcp.pop %v1153
    %v1171 = vmul.f32 %v1153, %v1170
    %v1172 = vsub.f32 1.0, %v1171
    %v1173 = vmul.f32 %v1170, %v1172
    %v1174 = vadd.f32 %v1170, %v1173
    %vm1175 = vweird.f32 %v1153
    %vm1176 = vweird.f32 %v1170
    %vm1177 = vmor %vm1175, %vm1176
    %v1178 = vsel %vm1177, %v1170, %v1174
    %v1179 = vand.u32 2147483647, %v1153
    %vm1180 = vcmp.eq.f32.partialorder %v1179, 8.507059e+37
    %v1181 = vand.u32 %v1153, 2147483648
    %v1182 = vor.u32 1.1754944e-38, %v1181
    %v1183 = vsel %vm1180, %v1182, %v1178
    %v1184 = vmul.f32 1.0, %v1183
    %v1185 = vrcp.pop %v1154
    %v1186 = vmul.f32 %v1154, %v1185
    %v1187 = vsub.f32 1.0, %v1186
    %v1188 = vmul.f32 %v1185, %v1187
    %v1189 = vadd.f32 %v1185, %v1188
    %vm1190 = vweird.f32 %v1154
    %vm1191 = vweird.f32 %v1185
    %vm1192 = vmor %vm1190, %vm1191
    %v1193 = vsel %vm1192, %v1185, %v1189
    %v1194 = vand.u32 2147483647, %v1154
    %vm1195 = vcmp.eq.f32.partialorder %v1194, 8.507059e+37
    %v1196 = vand.u32 %v1154, 2147483648
    %v1197 = vor.u32 1.1754944e-38, %v1196
    %v1198 = vsel %vm1195, %v1197, %v1193
    %v1199 = vmul.f32 1.0, %v1198
    %v1200 = vtanh.pop %v1114
    %v1201 = vmul.f32 %v1184, 0.0
    %v1202 = vmul.f32 %v1169, %v1200
    %v1203 = vadd.f32 %v1201, %v1202
    %v1204 = vtanh.pop %v1203
    %v1205 = vmul.f32 %v1199, %v1204
    %s1206 = scalar_lea.vmem [#allocation2], 32
    %v1207 = vld [vmem:[%s1206] sm:$0xff]
    %v1208 = vld [vmem:[%s1206 + $0x8] sm:$0xff]
    %v1209 = vld [vmem:[%s1206 + $0x10] sm:$0xff]
    %v1210 = vld [vmem:[%s1206 + $0x18] sm:$0xff]
    %1211 = vmatpush.bf16.msra.mxu0 %v562
    %1212 = vmatpush.bf16.msra.mxu0 %v558
    %1213 = vmatpush.bf16.msra.mxu0 %v554
    %1214 = vmatpush.bf16.msra.mxu0 %v550
    %1215 = vmatpush.bf16.msra.mxu0 %v546
    %1216 = vmatpush.bf16.msra.mxu0 %v542
    %1217 = vmatpush.bf16.msra.mxu0 %v538
    %1218 = vmatpush.bf16.msra.mxu0 %v534
    %1219 = vmatmul.bf16.gmra.mxu0 %v717
    %v1220 = vpop.f32.mrf.mxu0
    %v1221 = vadd.f32 0.0, %v1220
    %v1222 = vpop.f32.mrf.mxu0
    %1223 = vdwg.mxu0
    %1224 = vmatpush.bf16.msra.mxu0 %v563
    %1225 = vmatpush.bf16.msra.mxu0 %v559
    %1226 = vmatpush.bf16.msra.mxu0 %v555
    %1227 = vmatpush.bf16.msra.mxu0 %v551
    %1228 = vmatpush.bf16.msra.mxu0 %v547
    %1229 = vmatpush.bf16.msra.mxu0 %v543
    %1230 = vmatpush.bf16.msra.mxu0 %v539
    %1231 = vmatpush.bf16.msra.mxu0 %v535
    %1232 = vmatmul.bf16.gmra.mxu0 %v717
    %v1233 = vpop.f32.mrf.mxu0
    %v1234 = vadd.f32 0.0, %v1233
    %v1235 = vpop.f32.mrf.mxu0
    %1236 = vdwg.mxu0
    %1237 = vmatpush.bf16.msra.mxu0 %v564
    %1238 = vmatpush.bf16.msra.mxu0 %v560
    %1239 = vmatpush.bf16.msra.mxu0 %v556
    %1240 = vmatpush.bf16.msra.mxu0 %v552
    %1241 = vmatpush.bf16.msra.mxu0 %v548
    %1242 = vmatpush.bf16.msra.mxu0 %v544
    %1243 = vmatpush.bf16.msra.mxu0 %v540
    %1244 = vmatpush.bf16.msra.mxu0 %v536
    %1245 = vmatmul.bf16.gmra.mxu0 %v717
    %v1246 = vpop.f32.mrf.mxu0
    %v1247 = vadd.f32 0.0, %v1246
    %v1248 = vpop.f32.mrf.mxu0
    %1249 = vdwg.mxu0
    %1250 = vmatpush.bf16.msra.mxu0 %v565
    %1251 = vmatpush.bf16.msra.mxu0 %v561
    %1252 = vmatpush.bf16.msra.mxu0 %v557
    %1253 = vmatpush.bf16.msra.mxu0 %v553
    %1254 = vmatpush.bf16.msra.mxu0 %v549
    %1255 = vmatpush.bf16.msra.mxu0 %v545
    %1256 = vmatpush.bf16.msra.mxu0 %v541
    %1257 = vmatpush.bf16.msra.mxu0 %v537
    %1258 = vmatmul.bf16.gmra.mxu0 %v717
    %v1259 = vpop.f32.mrf.mxu0
    %v1260 = vadd.f32 0.0, %v1259
    %v1261 = vpop.f32.mrf.mxu0
    %1262 = vdwg.mxu0
    %v1263 = vadd.f32 %v1207, %v1221
    %v1264 = vadd.f32 %v1208, %v1234
    %v1265 = vadd.f32 %v1209, %v1247
    %v1266 = vadd.f32 %v1210, %v1260
    %v1267 = vxor.u32 %v1263, 2147483648
    %v1268 = vxor.u32 %v1264, 2147483648
    %v1269 = vxor.u32 %v1266, 2147483648
    %v1270 = vmul.f32 %v1267, 1.442695
    %v1271 = vpow.pop %v1270
    %v1272 = vmul.f32 %v1268, 1.442695
    %v1273 = vpow.pop %v1272
    %v1274 = vmul.f32 %v1269, 1.442695
    %v1275 = vpow.pop %v1274
    %v1276 = vadd.f32 %v1271, 1.0
    %v1277 = vadd.f32 %v1273, 1.0
    %v1278 = vadd.f32 %v1275, 1.0
    %v1279 = vrcp.pop %v1276
    %v1280 = vmul.f32 %v1276, %v1279
    %v1281 = vsub.f32 1.0, %v1280
    %v1282 = vmul.f32 %v1279, %v1281
    %v1283 = vadd.f32 %v1279, %v1282
    %vm1284 = vweird.f32 %v1276
    %vm1285 = vweird.f32 %v1279
    %vm1286 = vmor %vm1284, %vm1285
    %v1287 = vsel %vm1286, %v1279, %v1283
    %v1288 = vand.u32 2147483647, %v1276
    %vm1289 = vcmp.eq.f32.partialorder %v1288, 8.507059e+37
    %v1290 = vand.u32 %v1276, 2147483648
    %v1291 = vor.u32 1.1754944e-38, %v1290
    %v1292 = vsel %vm1289, %v1291, %v1287
    %v1293 = vmul.f32 1.0, %v1292
    %v1294 = vrcp.pop %v1277
    %v1295 = vmul.f32 %v1277, %v1294
    %v1296 = vsub.f32 1.0, %v1295
    %v1297 = vmul.f32 %v1294, %v1296
    %v1298 = vadd.f32 %v1294, %v1297
    %vm1299 = vweird.f32 %v1277
    %vm1300 = vweird.f32 %v1294
    %vm1301 = vmor %vm1299, %vm1300
    %v1302 = vsel %vm1301, %v1294, %v1298
    %v1303 = vand.u32 2147483647, %v1277
    %vm1304 = vcmp.eq.f32.partialorder %v1303, 8.507059e+37
    %v1305 = vand.u32 %v1277, 2147483648
    %v1306 = vor.u32 1.1754944e-38, %v1305
    %v1307 = vsel %vm1304, %v1306, %v1302
    %v1308 = vmul.f32 1.0, %v1307
    %v1309 = vrcp.pop %v1278
    %v1310 = vmul.f32 %v1278, %v1309
    %v1311 = vsub.f32 1.0, %v1310
    %v1312 = vmul.f32 %v1309, %v1311
    %v1313 = vadd.f32 %v1309, %v1312
    %vm1314 = vweird.f32 %v1278
    %vm1315 = vweird.f32 %v1309
    %vm1316 = vmor %vm1314, %vm1315
    %v1317 = vsel %vm1316, %v1309, %v1313
    %v1318 = vand.u32 2147483647, %v1278
    %vm1319 = vcmp.eq.f32.partialorder %v1318, 8.507059e+37
    %v1320 = vand.u32 %v1278, 2147483648
    %v1321 = vor.u32 1.1754944e-38, %v1320
    %v1322 = vsel %vm1319, %v1321, %v1317
    %v1323 = vmul.f32 1.0, %v1322
    %v1324 = vtanh.pop %v1265
    %v1325 = vmul.f32 %v1308, %v714
    %v1326 = vmul.f32 %v1293, %v1324
    %v1327 = vadd.f32 %v1325, %v1326
    %v1328 = vtanh.pop %v1327
    %v1329 = vmul.f32 %v1323, %v1328
    %v1330 = vpack.c.bf16 %v1329, %v1329
    %v1331 = vpack.c.bf16 %v1205, %v1205
    %1332 = vmatpush.bf16.msra.mxu0 %v939
    %1333 = vmatpush.bf16.msra.mxu0 %v935
    %1334 = vmatpush.bf16.msra.mxu0 %v931
    %1335 = vmatpush.bf16.msra.mxu0 %v927
    %1336 = vmatpush.bf16.msra.mxu0 %v923
    %1337 = vmatpush.bf16.msra.mxu0 %v919
    %1338 = vmatpush.bf16.msra.mxu0 %v915
    %1339 = vmatpush.bf16.msra.mxu0 %v911
    %1340 = vmatmul.bf16.gmra.mxu0 %v1330
    %v1341 = vpop.f32.mrf.mxu0
    %v1342 = vadd.f32 %v426, %v1341
    %v1343 = vpop.f32.mrf.mxu0
    %1344 = vdwg.mxu0
    %1345 = vmatpush.bf16.msra.mxu0 %v971
    %1346 = vmatpush.bf16.msra.mxu0 %v967
    %1347 = vmatpush.bf16.msra.mxu0 %v963
    %1348 = vmatpush.bf16.msra.mxu0 %v959
    %1349 = vmatpush.bf16.msra.mxu0 %v955
    %1350 = vmatpush.bf16.msra.mxu0 %v951
    %1351 = vmatpush.bf16.msra.mxu0 %v947
    %1352 = vmatpush.bf16.msra.mxu0 %v943
    %1353 = vmatmul.bf16.gmra.mxu0 %v1331
    %v1354 = vpop.f32.mrf.mxu0
    %v1355 = vadd.f32 %v1342, %v1354
    %v1356 = vpop.f32.mrf.mxu0
    %1357 = vdwg.mxu0
    %1358 = vmatpush.bf16.msra.mxu0 %v940
    %1359 = vmatpush.bf16.msra.mxu0 %v936
    %1360 = vmatpush.bf16.msra.mxu0 %v932
    %1361 = vmatpush.bf16.msra.mxu0 %v928
    %1362 = vmatpush.bf16.msra.mxu0 %v924
    %1363 = vmatpush.bf16.msra.mxu0 %v920
    %1364 = vmatpush.bf16.msra.mxu0 %v916
    %1365 = vmatpush.bf16.msra.mxu0 %v912
    %1366 = vmatmul.bf16.gmra.mxu0 %v1330
    %v1367 = vpop.f32.mrf.mxu0
    %v1368 = vadd.f32 %v427, %v1367
    %v1369 = vpop.f32.mrf.mxu0
    %1370 = vdwg.mxu0
    %1371 = vmatpush.bf16.msra.mxu0 %v972
    %1372 = vmatpush.bf16.msra.mxu0 %v968
    %1373 = vmatpush.bf16.msra.mxu0 %v964
    %1374 = vmatpush.bf16.msra.mxu0 %v960
    %1375 = vmatpush.bf16.msra.mxu0 %v956
    %1376 = vmatpush.bf16.msra.mxu0 %v952
    %1377 = vmatpush.bf16.msra.mxu0 %v948
    %1378 = vmatpush.bf16.msra.mxu0 %v944
    %1379 = vmatmul.bf16.gmra.mxu0 %v1331
    %v1380 = vpop.f32.mrf.mxu0
    %v1381 = vadd.f32 %v1368, %v1380
    %v1382 = vpop.f32.mrf.mxu0
    %1383 = vdwg.mxu0
    %1384 = vmatpush.bf16.msra.mxu0 %v941
    %1385 = vmatpush.bf16.msra.mxu0 %v937
    %1386 = vmatpush.bf16.msra.mxu0 %v933
    %1387 = vmatpush.bf16.msra.mxu0 %v929
    %1388 = vmatpush.bf16.msra.mxu0 %v925
    %1389 = vmatpush.bf16.msra.mxu0 %v921
    %1390 = vmatpush.bf16.msra.mxu0 %v917
    %1391 = vmatpush.bf16.msra.mxu0 %v913
    %1392 = vmatmul.bf16.gmra.mxu0 %v1330
    %v1393 = vpop.f32.mrf.mxu0
    %v1394 = vadd.f32 %v428, %v1393
    %v1395 = vpop.f32.mrf.mxu0
    %1396 = vdwg.mxu0
    %1397 = vmatpush.bf16.msra.mxu0 %v973
    %1398 = vmatpush.bf16.msra.mxu0 %v969
    %1399 = vmatpush.bf16.msra.mxu0 %v965
    %1400 = vmatpush.bf16.msra.mxu0 %v961
    %1401 = vmatpush.bf16.msra.mxu0 %v957
    %1402 = vmatpush.bf16.msra.mxu0 %v953
    %1403 = vmatpush.bf16.msra.mxu0 %v949
    %1404 = vmatpush.bf16.msra.mxu0 %v945
    %1405 = vmatmul.bf16.gmra.mxu0 %v1331
    %v1406 = vpop.f32.mrf.mxu0
    %v1407 = vadd.f32 %v1394, %v1406
    %v1408 = vpop.f32.mrf.mxu0
    %1409 = vdwg.mxu0
    %1410 = vmatpush.bf16.msra.mxu0 %v942
    %1411 = vmatpush.bf16.msra.mxu0 %v938
    %1412 = vmatpush.bf16.msra.mxu0 %v934
    %1413 = vmatpush.bf16.msra.mxu0 %v930
    %1414 = vmatpush.bf16.msra.mxu0 %v926
    %1415 = vmatpush.bf16.msra.mxu0 %v922
    %1416 = vmatpush.bf16.msra.mxu0 %v918
    %1417 = vmatpush.bf16.msra.mxu0 %v914
    %1418 = vmatmul.bf16.gmra.mxu0 %v1330
    %v1419 = vpop.f32.mrf.mxu0
    %v1420 = vadd.f32 %v429, %v1419
    %v1421 = vpop.f32.mrf.mxu0
    %1422 = vdwg.mxu0
    %1423 = vmatpush.bf16.msra.mxu0 %v974
    %1424 = vmatpush.bf16.msra.mxu0 %v970
    %1425 = vmatpush.bf16.msra.mxu0 %v966
    %1426 = vmatpush.bf16.msra.mxu0 %v962
    %1427 = vmatpush.bf16.msra.mxu0 %v958
    %1428 = vmatpush.bf16.msra.mxu0 %v954
    %1429 = vmatpush.bf16.msra.mxu0 %v950
    %1430 = vmatpush.bf16.msra.mxu0 %v946
    %1431 = vmatmul.bf16.gmra.mxu0 %v1331
    %v1432 = vpop.f32.mrf.mxu0
    %v1433 = vadd.f32 %v1420, %v1432
    %v1434 = vpop.f32.mrf.mxu0
    %1435 = vdwg.mxu0
    %v1436 = vxor.u32 %v1355, 2147483648
    %v1437 = vxor.u32 %v1381, 2147483648
    %v1438 = vxor.u32 %v1433, 2147483648
    %v1439 = vmul.f32 %v1436, 1.442695
    %v1440 = vpow.pop %v1439
    %v1441 = vmul.f32 %v1437, 1.442695
    %v1442 = vpow.pop %v1441
    %v1443 = vmul.f32 %v1438, 1.442695
    %v1444 = vpow.pop %v1443
    %v1445 = vadd.f32 %v1440, 1.0
    %v1446 = vadd.f32 %v1442, 1.0
    %v1447 = vadd.f32 %v1444, 1.0
    %v1448 = vrcp.pop %v1445
    %v1449 = vmul.f32 %v1445, %v1448
    %v1450 = vsub.f32 1.0, %v1449
    %v1451 = vmul.f32 %v1448, %v1450
    %v1452 = vadd.f32 %v1448, %v1451
    %vm1453 = vweird.f32 %v1445
    %vm1454 = vweird.f32 %v1448
    %vm1455 = vmor %vm1453, %vm1454
    %v1456 = vsel %vm1455, %v1448, %v1452
    %v1457 = vand.u32 2147483647, %v1445
    %vm1458 = vcmp.eq.f32.partialorder %v1457, 8.507059e+37
    %v1459 = vand.u32 %v1445, 2147483648
    %v1460 = vor.u32 1.1754944e-38, %v1459
    %v1461 = vsel %vm1458, %v1460, %v1456
    %v1462 = vmul.f32 1.0, %v1461
    %v1463 = vrcp.pop %v1446
    %v1464 = vmul.f32 %v1446, %v1463
    %v1465 = vsub.f32 1.0, %v1464
    %v1466 = vmul.f32 %v1463, %v1465
    %v1467 = vadd.f32 %v1463, %v1466
    %vm1468 = vweird.f32 %v1446
    %vm1469 = vweird.f32 %v1463
    %vm1470 = vmor %vm1468, %vm1469
    %v1471 = vsel %vm1470, %v1463, %v1467
    %v1472 = vand.u32 2147483647, %v1446
    %vm1473 = vcmp.eq.f32.partialorder %v1472, 8.507059e+37
    %v1474 = vand.u32 %v1446, 2147483648
    %v1475 = vor.u32 1.1754944e-38, %v1474
    %v1476 = vsel %vm1473, %v1475, %v1471
    %v1477 = vmul.f32 1.0, %v1476
    %v1478 = vrcp.pop %v1447
    %v1479 = vmul.f32 %v1447, %v1478
    %v1480 = vsub.f32 1.0, %v1479
    %v1481 = vmul.f32 %v1478, %v1480
    %v1482 = vadd.f32 %v1478, %v1481
    %vm1483 = vweird.f32 %v1447
    %vm1484 = vweird.f32 %v1478
    %vm1485 = vmor %vm1483, %vm1484
    %v1486 = vsel %vm1485, %v1478, %v1482
    %v1487 = vand.u32 2147483647, %v1447
    %vm1488 = vcmp.eq.f32.partialorder %v1487, 8.507059e+37
    %v1489 = vand.u32 %v1447, 2147483648
    %v1490 = vor.u32 1.1754944e-38, %v1489
    %v1491 = vsel %vm1488, %v1490, %v1486
    %v1492 = vmul.f32 1.0, %v1491
    %v1493 = vtanh.pop %v1407
    %v1494 = vmul.f32 %v1477, %v1203
    %v1495 = vmul.f32 %v1462, %v1493
    %v1496 = vadd.f32 %v1494, %v1495
    %v1497 = vtanh.pop %v1496
    %v1498 = vmul.f32 %v1492, %v1497
    %s1499 = scalar_lea.vmem [#allocation2], 64
    %v1500 = vld [vmem:[%s1499] sm:$0xff]
    %v1501 = vld [vmem:[%s1499 + $0x8] sm:$0xff]
    %v1502 = vld [vmem:[%s1499 + $0x10] sm:$0xff]
    %v1503 = vld [vmem:[%s1499 + $0x18] sm:$0xff]
    %1504 = vmatpush.bf16.msra.mxu0 %v562
    %1505 = vmatpush.bf16.msra.mxu0 %v558
    %1506 = vmatpush.bf16.msra.mxu0 %v554
    %1507 = vmatpush.bf16.msra.mxu0 %v550
    %1508 = vmatpush.bf16.msra.mxu0 %v546
    %1509 = vmatpush.bf16.msra.mxu0 %v542
    %1510 = vmatpush.bf16.msra.mxu0 %v538
    %1511 = vmatpush.bf16.msra.mxu0 %v534
    %1512 = vmatmul.bf16.gmra.mxu0 %v1330
    %v1513 = vpop.f32.mrf.mxu0
    %v1514 = vadd.f32 0.0, %v1513
    %v1515 = vpop.f32.mrf.mxu0
    %1516 = vdwg.mxu0
    %1517 = vmatpush.bf16.msra.mxu0 %v563
    %1518 = vmatpush.bf16.msra.mxu0 %v559
    %1519 = vmatpush.bf16.msra.mxu0 %v555
    %1520 = vmatpush.bf16.msra.mxu0 %v551
    %1521 = vmatpush.bf16.msra.mxu0 %v547
    %1522 = vmatpush.bf16.msra.mxu0 %v543
    %1523 = vmatpush.bf16.msra.mxu0 %v539
    %1524 = vmatpush.bf16.msra.mxu0 %v535
    %1525 = vmatmul.bf16.gmra.mxu0 %v1330
    %v1526 = vpop.f32.mrf.mxu0
    %v1527 = vadd.f32 0.0, %v1526
    %v1528 = vpop.f32.mrf.mxu0
    %1529 = vdwg.mxu0
    %1530 = vmatpush.bf16.msra.mxu0 %v564
    %1531 = vmatpush.bf16.msra.mxu0 %v560
    %1532 = vmatpush.bf16.msra.mxu0 %v556
    %1533 = vmatpush.bf16.msra.mxu0 %v552
    %1534 = vmatpush.bf16.msra.mxu0 %v548
    %1535 = vmatpush.bf16.msra.mxu0 %v544
    %1536 = vmatpush.bf16.msra.mxu0 %v540
    %1537 = vmatpush.bf16.msra.mxu0 %v536
    %1538 = vmatmul.bf16.gmra.mxu0 %v1330
    %v1539 = vpop.f32.mrf.mxu0
    %v1540 = vadd.f32 0.0, %v1539
    %v1541 = vpop.f32.mrf.mxu0
    %1542 = vdwg.mxu0
    %1543 = vmatpush.bf16.msra.mxu0 %v565
    %1544 = vmatpush.bf16.msra.mxu0 %v561
    %1545 = vmatpush.bf16.msra.mxu0 %v557
    %1546 = vmatpush.bf16.msra.mxu0 %v553
    %1547 = vmatpush.bf16.msra.mxu0 %v549
    %1548 = vmatpush.bf16.msra.mxu0 %v545
    %1549 = vmatpush.bf16.msra.mxu0 %v541
    %1550 = vmatpush.bf16.msra.mxu0 %v537
    %1551 = vmatmul.bf16.gmra.mxu0 %v1330
    %v1552 = vpop.f32.mrf.mxu0
    %v1553 = vadd.f32 0.0, %v1552
    %v1554 = vpop.f32.mrf.mxu0
    %1555 = vdwg.mxu0
    %v1556 = vadd.f32 %v1500, %v1514
    %v1557 = vadd.f32 %v1501, %v1527
    %v1558 = vadd.f32 %v1502, %v1540
    %v1559 = vadd.f32 %v1503, %v1553
    %v1560 = vxor.u32 %v1556, 2147483648
    %v1561 = vxor.u32 %v1557, 2147483648
    %v1562 = vxor.u32 %v1559, 2147483648
    %v1563 = vmul.f32 %v1560, 1.442695
    %v1564 = vpow.pop %v1563
    %v1565 = vmul.f32 %v1561, 1.442695
    %v1566 = vpow.pop %v1565
    %v1567 = vmul.f32 %v1562, 1.442695
    %v1568 = vpow.pop %v1567
    %v1569 = vadd.f32 %v1564, 1.0
    %v1570 = vadd.f32 %v1566, 1.0
    %v1571 = vadd.f32 %v1568, 1.0
    %v1572 = vrcp.pop %v1569
    %v1573 = vmul.f32 %v1569, %v1572
    %v1574 = vsub.f32 1.0, %v1573
    %v1575 = vmul.f32 %v1572, %v1574
    %v1576 = vadd.f32 %v1572, %v1575
    %vm1577 = vweird.f32 %v1569
    %vm1578 = vweird.f32 %v1572
    %vm1579 = vmor %vm1577, %vm1578
    %v1580 = vsel %vm1579, %v1572, %v1576
    %v1581 = vand.u32 2147483647, %v1569
    %vm1582 = vcmp.eq.f32.partialorder %v1581, 8.507059e+37
    %v1583 = vand.u32 %v1569, 2147483648
    %v1584 = vor.u32 1.1754944e-38, %v1583
    %v1585 = vsel %vm1582, %v1584, %v1580
    %v1586 = vmul.f32 1.0, %v1585
    %v1587 = vrcp.pop %v1570
    %v1588 = vmul.f32 %v1570, %v1587
    %v1589 = vsub.f32 1.0, %v1588
    %v1590 = vmul.f32 %v1587, %v1589
    %v1591 = vadd.f32 %v1587, %v1590
    %vm1592 = vweird.f32 %v1570
    %vm1593 = vweird.f32 %v1587
    %vm1594 = vmor %vm1592, %vm1593
    %v1595 = vsel %vm1594, %v1587, %v1591
    %v1596 = vand.u32 2147483647, %v1570
    %vm1597 = vcmp.eq.f32.partialorder %v1596, 8.507059e+37
    %v1598 = vand.u32 %v1570, 2147483648
    %v1599 = vor.u32 1.1754944e-38, %v1598
    %v1600 = vsel %vm1597, %v1599, %v1595
    %v1601 = vmul.f32 1.0, %v1600
    %v1602 = vrcp.pop %v1571
    %v1603 = vmul.f32 %v1571, %v1602
    %v1604 = vsub.f32 1.0, %v1603
    %v1605 = vmul.f32 %v1602, %v1604
    %v1606 = vadd.f32 %v1602, %v1605
    %vm1607 = vweird.f32 %v1571
    %vm1608 = vweird.f32 %v1602
    %vm1609 = vmor %vm1607, %vm1608
    %v1610 = vsel %vm1609, %v1602, %v1606
    %v1611 = vand.u32 2147483647, %v1571
    %vm1612 = vcmp.eq.f32.partialorder %v1611, 8.507059e+37
    %v1613 = vand.u32 %v1571, 2147483648
    %v1614 = vor.u32 1.1754944e-38, %v1613
    %v1615 = vsel %vm1612, %v1614, %v1610
    %v1616 = vmul.f32 1.0, %v1615
    %v1617 = vtanh.pop %v1558
    %v1618 = vmul.f32 %v1601, %v1327
    %v1619 = vmul.f32 %v1586, %v1617
    %v1620 = vadd.f32 %v1618, %v1619
    %v1621 = vtanh.pop %v1620
    %v1622 = vmul.f32 %v1616, %v1621
    %v1623 = vpack.c.bf16 %v1622, %v1622
    %v1624 = vpack.c.bf16 %v1498, %v1498
    %1625 = vmatpush.bf16.msra.mxu0 %v939
    %1626 = vmatpush.bf16.msra.mxu0 %v935
    %1627 = vmatpush.bf16.msra.mxu0 %v931
    %1628 = vmatpush.bf16.msra.mxu0 %v927
    %1629 = vmatpush.bf16.msra.mxu0 %v923
    %1630 = vmatpush.bf16.msra.mxu0 %v919
    %1631 = vmatpush.bf16.msra.mxu0 %v915
    %1632 = vmatpush.bf16.msra.mxu0 %v911
    %1633 = vmatmul.bf16.gmra.mxu0 %v1623
    %v1634 = vpop.f32.mrf.mxu0
    %v1635 = vadd.f32 %v426, %v1634
    %v1636 = vpop.f32.mrf.mxu0
    %1637 = vdwg.mxu0
    %1638 = vmatpush.bf16.msra.mxu0 %v971
    %1639 = vmatpush.bf16.msra.mxu0 %v967
    %1640 = vmatpush.bf16.msra.mxu0 %v963
    %1641 = vmatpush.bf16.msra.mxu0 %v959
    %1642 = vmatpush.bf16.msra.mxu0 %v955
    %1643 = vmatpush.bf16.msra.mxu0 %v951
    %1644 = vmatpush.bf16.msra.mxu0 %v947
    %1645 = vmatpush.bf16.msra.mxu0 %v943
    %1646 = vmatmul.bf16.gmra.mxu0 %v1624
    %v1647 = vpop.f32.mrf.mxu0
    %v1648 = vadd.f32 %v1635, %v1647
    %v1649 = vpop.f32.mrf.mxu0
    %1650 = vdwg.mxu0
    %1651 = vmatpush.bf16.msra.mxu0 %v940
    %1652 = vmatpush.bf16.msra.mxu0 %v936
    %1653 = vmatpush.bf16.msra.mxu0 %v932
    %1654 = vmatpush.bf16.msra.mxu0 %v928
    %1655 = vmatpush.bf16.msra.mxu0 %v924
    %1656 = vmatpush.bf16.msra.mxu0 %v920
    %1657 = vmatpush.bf16.msra.mxu0 %v916
    %1658 = vmatpush.bf16.msra.mxu0 %v912
    %1659 = vmatmul.bf16.gmra.mxu0 %v1623
    %v1660 = vpop.f32.mrf.mxu0
    %v1661 = vadd.f32 %v427, %v1660
    %v1662 = vpop.f32.mrf.mxu0
    %1663 = vdwg.mxu0
    %1664 = vmatpush.bf16.msra.mxu0 %v972
    %1665 = vmatpush.bf16.msra.mxu0 %v968
    %1666 = vmatpush.bf16.msra.mxu0 %v964
    %1667 = vmatpush.bf16.msra.mxu0 %v960
    %1668 = vmatpush.bf16.msra.mxu0 %v956
    %1669 = vmatpush.bf16.msra.mxu0 %v952
    %1670 = vmatpush.bf16.msra.mxu0 %v948
    %1671 = vmatpush.bf16.msra.mxu0 %v944
    %1672 = vmatmul.bf16.gmra.mxu0 %v1624
    %v1673 = vpop.f32.mrf.mxu0
    %v1674 = vadd.f32 %v1661, %v1673
    %v1675 = vpop.f32.mrf.mxu0
    %1676 = vdwg.mxu0
    %1677 = vmatpush.bf16.msra.mxu0 %v941
    %1678 = vmatpush.bf16.msra.mxu0 %v937
    %1679 = vmatpush.bf16.msra.mxu0 %v933
    %1680 = vmatpush.bf16.msra.mxu0 %v929
    %1681 = vmatpush.bf16.msra.mxu0 %v925
    %1682 = vmatpush.bf16.msra.mxu0 %v921
    %1683 = vmatpush.bf16.msra.mxu0 %v917
    %1684 = vmatpush.bf16.msra.mxu0 %v913
    %1685 = vmatmul.bf16.gmra.mxu0 %v1623
    %v1686 = vpop.f32.mrf.mxu0
    %v1687 = vadd.f32 %v428, %v1686
    %v1688 = vpop.f32.mrf.mxu0
    %1689 = vdwg.mxu0
    %1690 = vmatpush.bf16.msra.mxu0 %v973
    %1691 = vmatpush.bf16.msra.mxu0 %v969
    %1692 = vmatpush.bf16.msra.mxu0 %v965
    %1693 = vmatpush.bf16.msra.mxu0 %v961
    %1694 = vmatpush.bf16.msra.mxu0 %v957
    %1695 = vmatpush.bf16.msra.mxu0 %v953
    %1696 = vmatpush.bf16.msra.mxu0 %v949
    %1697 = vmatpush.bf16.msra.mxu0 %v945
    %1698 = vmatmul.bf16.gmra.mxu0 %v1624
    %v1699 = vpop.f32.mrf.mxu0
    %v1700 = vadd.f32 %v1687, %v1699
    %v1701 = vpop.f32.mrf.mxu0
    %1702 = vdwg.mxu0
    %1703 = vmatpush.bf16.msra.mxu0 %v942
    %1704 = vmatpush.bf16.msra.mxu0 %v938
    %1705 = vmatpush.bf16.msra.mxu0 %v934
    %1706 = vmatpush.bf16.msra.mxu0 %v930
    %1707 = vmatpush.bf16.msra.mxu0 %v926
    %1708 = vmatpush.bf16.msra.mxu0 %v922
    %1709 = vmatpush.bf16.msra.mxu0 %v918
    %1710 = vmatpush.bf16.msra.mxu0 %v914
    %1711 = vmatmul.bf16.gmra.mxu0 %v1623
    %v1712 = vpop.f32.mrf.mxu0
    %v1713 = vadd.f32 %v429, %v1712
    %v1714 = vpop.f32.mrf.mxu0
    %1715 = vdwg.mxu0
    %1716 = vmatpush.bf16.msra.mxu0 %v974
    %1717 = vmatpush.bf16.msra.mxu0 %v970
    %1718 = vmatpush.bf16.msra.mxu0 %v966
    %1719 = vmatpush.bf16.msra.mxu0 %v962
    %1720 = vmatpush.bf16.msra.mxu0 %v958
    %1721 = vmatpush.bf16.msra.mxu0 %v954
    %1722 = vmatpush.bf16.msra.mxu0 %v950
    %1723 = vmatpush.bf16.msra.mxu0 %v946
    %1724 = vmatmul.bf16.gmra.mxu0 %v1624
    %v1725 = vpop.f32.mrf.mxu0
    %v1726 = vadd.f32 %v1713, %v1725
    %v1727 = vpop.f32.mrf.mxu0
    %1728 = vdwg.mxu0
    %v1729 = vxor.u32 %v1648, 2147483648
    %v1730 = vxor.u32 %v1674, 2147483648
    %v1731 = vxor.u32 %v1726, 2147483648
    %v1732 = vmul.f32 %v1729, 1.442695
    %v1733 = vpow.pop %v1732
    %v1734 = vmul.f32 %v1730, 1.442695
    %v1735 = vpow.pop %v1734
    %v1736 = vmul.f32 %v1731, 1.442695
    %v1737 = vpow.pop %v1736
    %v1738 = vadd.f32 %v1733, 1.0
    %v1739 = vadd.f32 %v1735, 1.0
    %v1740 = vadd.f32 %v1737, 1.0
    %v1741 = vrcp.pop %v1738
    %v1742 = vmul.f32 %v1738, %v1741
    %v1743 = vsub.f32 1.0, %v1742
    %v1744 = vmul.f32 %v1741, %v1743
    %v1745 = vadd.f32 %v1741, %v1744
    %vm1746 = vweird.f32 %v1738
    %vm1747 = vweird.f32 %v1741
    %vm1748 = vmor %vm1746, %vm1747
    %v1749 = vsel %vm1748, %v1741, %v1745
    %v1750 = vand.u32 2147483647, %v1738
    %vm1751 = vcmp.eq.f32.partialorder %v1750, 8.507059e+37
    %v1752 = vand.u32 %v1738, 2147483648
    %v1753 = vor.u32 1.1754944e-38, %v1752
    %v1754 = vsel %vm1751, %v1753, %v1749
    %v1755 = vmul.f32 1.0, %v1754
    %v1756 = vrcp.pop %v1739
    %v1757 = vmul.f32 %v1739, %v1756
    %v1758 = vsub.f32 1.0, %v1757
    %v1759 = vmul.f32 %v1756, %v1758
    %v1760 = vadd.f32 %v1756, %v1759
    %vm1761 = vweird.f32 %v1739
    %vm1762 = vweird.f32 %v1756
    %vm1763 = vmor %vm1761, %vm1762
    %v1764 = vsel %vm1763, %v1756, %v1760
    %v1765 = vand.u32 2147483647, %v1739
    %vm1766 = vcmp.eq.f32.partialorder %v1765, 8.507059e+37
    %v1767 = vand.u32 %v1739, 2147483648
    %v1768 = vor.u32 1.1754944e-38, %v1767
    %v1769 = vsel %vm1766, %v1768, %v1764
    %v1770 = vmul.f32 1.0, %v1769
    %v1771 = vrcp.pop %v1740
    %v1772 = vmul.f32 %v1740, %v1771
    %v1773 = vsub.f32 1.0, %v1772
    %v1774 = vmul.f32 %v1771, %v1773
    %v1775 = vadd.f32 %v1771, %v1774
    %vm1776 = vweird.f32 %v1740
    %vm1777 = vweird.f32 %v1771
    %vm1778 = vmor %vm1776, %vm1777
    %v1779 = vsel %vm1778, %v1771, %v1775
    %v1780 = vand.u32 2147483647, %v1740
    %vm1781 = vcmp.eq.f32.partialorder %v1780, 8.507059e+37
    %v1782 = vand.u32 %v1740, 2147483648
    %v1783 = vor.u32 1.1754944e-38, %v1782
    %v1784 = vsel %vm1781, %v1783, %v1779
    %v1785 = vmul.f32 1.0, %v1784
    %v1786 = vtanh.pop %v1700
    %v1787 = vmul.f32 %v1770, %v1496
    %v1788 = vmul.f32 %v1755, %v1786
    %v1789 = vadd.f32 %v1787, %v1788
    %v1790 = vtanh.pop %v1789
    %v1791 = vmul.f32 %v1785, %v1790
    %s1792 = scalar_lea.vmem [#allocation2], 96
    %v1793 = vld [vmem:[%s1792] sm:$0xff]
    %v1794 = vld [vmem:[%s1792 + $0x8] sm:$0xff]
    %v1795 = vld [vmem:[%s1792 + $0x10] sm:$0xff]
    %v1796 = vld [vmem:[%s1792 + $0x18] sm:$0xff]
    %1797 = vmatpush.bf16.msra.mxu0 %v562
    %1798 = vmatpush.bf16.msra.mxu0 %v558
    %1799 = vmatpush.bf16.msra.mxu0 %v554
    %1800 = vmatpush.bf16.msra.mxu0 %v550
    %1801 = vmatpush.bf16.msra.mxu0 %v546
    %1802 = vmatpush.bf16.msra.mxu0 %v542
    %1803 = vmatpush.bf16.msra.mxu0 %v538
    %1804 = vmatpush.bf16.msra.mxu0 %v534
    %1805 = vmatmul.bf16.gmra.mxu0 %v1623
    %v1806 = vpop.f32.mrf.mxu0
    %v1807 = vadd.f32 0.0, %v1806
    %v1808 = vpop.f32.mrf.mxu0
    %1809 = vdwg.mxu0
    %1810 = vmatpush.bf16.msra.mxu0 %v563
    %1811 = vmatpush.bf16.msra.mxu0 %v559
    %1812 = vmatpush.bf16.msra.mxu0 %v555
    %1813 = vmatpush.bf16.msra.mxu0 %v551
    %1814 = vmatpush.bf16.msra.mxu0 %v547
    %1815 = vmatpush.bf16.msra.mxu0 %v543
    %1816 = vmatpush.bf16.msra.mxu0 %v539
    %1817 = vmatpush.bf16.msra.mxu0 %v535
    %1818 = vmatmul.bf16.gmra.mxu0 %v1623
    %v1819 = vpop.f32.mrf.mxu0
    %v1820 = vadd.f32 0.0, %v1819
    %v1821 = vpop.f32.mrf.mxu0
    %1822 = vdwg.mxu0
    %1823 = vmatpush.bf16.msra.mxu0 %v564
    %1824 = vmatpush.bf16.msra.mxu0 %v560
    %1825 = vmatpush.bf16.msra.mxu0 %v556
    %1826 = vmatpush.bf16.msra.mxu0 %v552
    %1827 = vmatpush.bf16.msra.mxu0 %v548
    %1828 = vmatpush.bf16.msra.mxu0 %v544
    %1829 = vmatpush.bf16.msra.mxu0 %v540
    %1830 = vmatpush.bf16.msra.mxu0 %v536
    %1831 = vmatmul.bf16.gmra.mxu0 %v1623
    %v1832 = vpop.f32.mrf.mxu0
    %v1833 = vadd.f32 0.0, %v1832
    %v1834 = vpop.f32.mrf.mxu0
    %1835 = vdwg.mxu0
    %1836 = vmatpush.bf16.msra.mxu0 %v565
    %1837 = vmatpush.bf16.msra.mxu0 %v561
    %1838 = vmatpush.bf16.msra.mxu0 %v557
    %1839 = vmatpush.bf16.msra.mxu0 %v553
    %1840 = vmatpush.bf16.msra.mxu0 %v549
    %1841 = vmatpush.bf16.msra.mxu0 %v545
    %1842 = vmatpush.bf16.msra.mxu0 %v541
    %1843 = vmatpush.bf16.msra.mxu0 %v537
    %1844 = vmatmul.bf16.gmra.mxu0 %v1623
    %v1845 = vpop.f32.mrf.mxu0
    %v1846 = vadd.f32 0.0, %v1845
    %v1847 = vpop.f32.mrf.mxu0
    %1848 = vdwg.mxu0
    %v1849 = vadd.f32 %v1793, %v1807
    %v1850 = vadd.f32 %v1794, %v1820
    %v1851 = vadd.f32 %v1795, %v1833
    %v1852 = vadd.f32 %v1796, %v1846
    %v1853 = vxor.u32 %v1849, 2147483648
    %v1854 = vxor.u32 %v1850, 2147483648
    %v1855 = vxor.u32 %v1852, 2147483648
    %v1856 = vmul.f32 %v1853, 1.442695
    %v1857 = vpow.pop %v1856
    %v1858 = vmul.f32 %v1854, 1.442695
    %v1859 = vpow.pop %v1858
    %v1860 = vmul.f32 %v1855, 1.442695
    %v1861 = vpow.pop %v1860
    %v1862 = vadd.f32 %v1857, 1.0
    %v1863 = vadd.f32 %v1859, 1.0
    %v1864 = vadd.f32 %v1861, 1.0
    %v1865 = vrcp.pop %v1862
    %v1866 = vmul.f32 %v1862, %v1865
    %v1867 = vsub.f32 1.0, %v1866
    %v1868 = vmul.f32 %v1865, %v1867
    %v1869 = vadd.f32 %v1865, %v1868
    %vm1870 = vweird.f32 %v1862
    %vm1871 = vweird.f32 %v1865
    %vm1872 = vmor %vm1870, %vm1871
    %v1873 = vsel %vm1872, %v1865, %v1869
    %v1874 = vand.u32 2147483647, %v1862
    %vm1875 = vcmp.eq.f32.partialorder %v1874, 8.507059e+37
    %v1876 = vand.u32 %v1862, 2147483648
    %v1877 = vor.u32 1.1754944e-38, %v1876
    %v1878 = vsel %vm1875, %v1877, %v1873
    %v1879 = vmul.f32 1.0, %v1878
    %v1880 = vrcp.pop %v1863
    %v1881 = vmul.f32 %v1863, %v1880
    %v1882 = vsub.f32 1.0, %v1881
    %v1883 = vmul.f32 %v1880, %v1882
    %v1884 = vadd.f32 %v1880, %v1883
    %vm1885 = vweird.f32 %v1863
    %vm1886 = vweird.f32 %v1880
    %vm1887 = vmor %vm1885, %vm1886
    %v1888 = vsel %vm1887, %v1880, %v1884
    %v1889 = vand.u32 2147483647, %v1863
    %vm1890 = vcmp.eq.f32.partialorder %v1889, 8.507059e+37
    %v1891 = vand.u32 %v1863, 2147483648
    %v1892 = vor.u32 1.1754944e-38, %v1891
    %v1893 = vsel %vm1890, %v1892, %v1888
    %v1894 = vmul.f32 1.0, %v1893
    %v1895 = vrcp.pop %v1864
    %v1896 = vmul.f32 %v1864, %v1895
    %v1897 = vsub.f32 1.0, %v1896
    %v1898 = vmul.f32 %v1895, %v1897
    %v1899 = vadd.f32 %v1895, %v1898
    %vm1900 = vweird.f32 %v1864
    %vm1901 = vweird.f32 %v1895
    %vm1902 = vmor %vm1900, %vm1901
    %v1903 = vsel %vm1902, %v1895, %v1899
    %v1904 = vand.u32 2147483647, %v1864
    %vm1905 = vcmp.eq.f32.partialorder %v1904, 8.507059e+37
    %v1906 = vand.u32 %v1864, 2147483648
    %v1907 = vor.u32 1.1754944e-38, %v1906
    %v1908 = vsel %vm1905, %v1907, %v1903
    %v1909 = vmul.f32 1.0, %v1908
    %v1910 = vtanh.pop %v1851
    %v1911 = vmul.f32 %v1894, %v1620
    %v1912 = vmul.f32 %v1879, %v1910
    %v1913 = vadd.f32 %v1911, %v1912
    %v1914 = vtanh.pop %v1913
    %v1915 = vmul.f32 %v1909, %v1914
    %v1916 = vpack.c.bf16 %v1915, %v1915
    %v1917 = vpack.c.bf16 %v1791, %v1791
    %1918 = vmatpush.bf16.msra.mxu0 %v939
    %1919 = vmatpush.bf16.msra.mxu0 %v935
    %1920 = vmatpush.bf16.msra.mxu0 %v931
    %1921 = vmatpush.bf16.msra.mxu0 %v927
    %1922 = vmatpush.bf16.msra.mxu0 %v923
    %1923 = vmatpush.bf16.msra.mxu0 %v919
    %1924 = vmatpush.bf16.msra.mxu0 %v915
    %1925 = vmatpush.bf16.msra.mxu0 %v911
    %1926 = vmatmul.bf16.gmra.mxu0 %v1916
    %v1927 = vpop.f32.mrf.mxu0
    %v1928 = vadd.f32 %v426, %v1927
    %v1929 = vpop.f32.mrf.mxu0
    %1930 = vdwg.mxu0
    %1931 = vmatpush.bf16.msra.mxu0 %v971
    %1932 = vmatpush.bf16.msra.mxu0 %v967
    %1933 = vmatpush.bf16.msra.mxu0 %v963
    %1934 = vmatpush.bf16.msra.mxu0 %v959
    %1935 = vmatpush.bf16.msra.mxu0 %v955
    %1936 = vmatpush.bf16.msra.mxu0 %v951
    %1937 = vmatpush.bf16.msra.mxu0 %v947
    %1938 = vmatpush.bf16.msra.mxu0 %v943
    %1939 = vmatmul.bf16.gmra.mxu0 %v1917
    %v1940 = vpop.f32.mrf.mxu0
    %v1941 = vadd.f32 %v1928, %v1940
    %v1942 = vpop.f32.mrf.mxu0
    %1943 = vdwg.mxu0
    %1944 = vmatpush.bf16.msra.mxu0 %v940
    %1945 = vmatpush.bf16.msra.mxu0 %v936
    %1946 = vmatpush.bf16.msra.mxu0 %v932
    %1947 = vmatpush.bf16.msra.mxu0 %v928
    %1948 = vmatpush.bf16.msra.mxu0 %v924
    %1949 = vmatpush.bf16.msra.mxu0 %v920
    %1950 = vmatpush.bf16.msra.mxu0 %v916
    %1951 = vmatpush.bf16.msra.mxu0 %v912
    %1952 = vmatmul.bf16.gmra.mxu0 %v1916
    %v1953 = vpop.f32.mrf.mxu0
    %v1954 = vadd.f32 %v427, %v1953
    %v1955 = vpop.f32.mrf.mxu0
    %1956 = vdwg.mxu0
    %1957 = vmatpush.bf16.msra.mxu0 %v972
    %1958 = vmatpush.bf16.msra.mxu0 %v968
    %1959 = vmatpush.bf16.msra.mxu0 %v964
    %1960 = vmatpush.bf16.msra.mxu0 %v960
    %1961 = vmatpush.bf16.msra.mxu0 %v956
    %1962 = vmatpush.bf16.msra.mxu0 %v952
    %1963 = vmatpush.bf16.msra.mxu0 %v948
    %1964 = vmatpush.bf16.msra.mxu0 %v944
    %1965 = vmatmul.bf16.gmra.mxu0 %v1917
    %v1966 = vpop.f32.mrf.mxu0
    %v1967 = vadd.f32 %v1954, %v1966
    %v1968 = vpop.f32.mrf.mxu0
    %1969 = vdwg.mxu0
    %1970 = vmatpush.bf16.msra.mxu0 %v941
    %1971 = vmatpush.bf16.msra.mxu0 %v937
    %1972 = vmatpush.bf16.msra.mxu0 %v933
    %1973 = vmatpush.bf16.msra.mxu0 %v929
    %1974 = vmatpush.bf16.msra.mxu0 %v925
    %1975 = vmatpush.bf16.msra.mxu0 %v921
    %1976 = vmatpush.bf16.msra.mxu0 %v917
    %1977 = vmatpush.bf16.msra.mxu0 %v913
    %1978 = vmatmul.bf16.gmra.mxu0 %v1916
    %v1979 = vpop.f32.mrf.mxu0
    %v1980 = vadd.f32 %v428, %v1979
    %v1981 = vpop.f32.mrf.mxu0
    %1982 = vdwg.mxu0
    %1983 = vmatpush.bf16.msra.mxu0 %v973
    %1984 = vmatpush.bf16.msra.mxu0 %v969
    %1985 = vmatpush.bf16.msra.mxu0 %v965
    %1986 = vmatpush.bf16.msra.mxu0 %v961
    %1987 = vmatpush.bf16.msra.mxu0 %v957
    %1988 = vmatpush.bf16.msra.mxu0 %v953
    %1989 = vmatpush.bf16.msra.mxu0 %v949
    %1990 = vmatpush.bf16.msra.mxu0 %v945
    %1991 = vmatmul.bf16.gmra.mxu0 %v1917
    %v1992 = vpop.f32.mrf.mxu0
    %v1993 = vadd.f32 %v1980, %v1992
    %v1994 = vpop.f32.mrf.mxu0
    %1995 = vdwg.mxu0
    %1996 = vmatpush.bf16.msra.mxu0 %v942
    %1997 = vmatpush.bf16.msra.mxu0 %v938
    %1998 = vmatpush.bf16.msra.mxu0 %v934
    %1999 = vmatpush.bf16.msra.mxu0 %v930
    %2000 = vmatpush.bf16.msra.mxu0 %v926
    %2001 = vmatpush.bf16.msra.mxu0 %v922
    %2002 = vmatpush.bf16.msra.mxu0 %v918
    %2003 = vmatpush.bf16.msra.mxu0 %v914
    %2004 = vmatmul.bf16.gmra.mxu0 %v1916
    %v2005 = vpop.f32.mrf.mxu0
    %v2006 = vadd.f32 %v429, %v2005
    %v2007 = vpop.f32.mrf.mxu0
    %2008 = vdwg.mxu0
    %2009 = vmatpush.bf16.msra.mxu0 %v974
    %2010 = vmatpush.bf16.msra.mxu0 %v970
    %2011 = vmatpush.bf16.msra.mxu0 %v966
    %2012 = vmatpush.bf16.msra.mxu0 %v962
    %2013 = vmatpush.bf16.msra.mxu0 %v958
    %2014 = vmatpush.bf16.msra.mxu0 %v954
    %2015 = vmatpush.bf16.msra.mxu0 %v950
    %2016 = vmatpush.bf16.msra.mxu0 %v946
    %2017 = vmatmul.bf16.gmra.mxu0 %v1917
    %v2018 = vpop.f32.mrf.mxu0
    %v2019 = vadd.f32 %v2006, %v2018
    %v2020 = vpop.f32.mrf.mxu0
    %2021 = vdwg.mxu0
    %v2022 = vxor.u32 %v1941, 2147483648
    %v2023 = vxor.u32 %v1967, 2147483648
    %v2024 = vxor.u32 %v2019, 2147483648
    %v2025 = vmul.f32 %v2022, 1.442695
    %v2026 = vpow.pop %v2025
    %v2027 = vmul.f32 %v2023, 1.442695
    %v2028 = vpow.pop %v2027
    %v2029 = vmul.f32 %v2024, 1.442695
    %v2030 = vpow.pop %v2029
    %v2031 = vadd.f32 %v2026, 1.0
    %v2032 = vadd.f32 %v2028, 1.0
    %v2033 = vadd.f32 %v2030, 1.0
    %v2034 = vrcp.pop %v2031
    %v2035 = vmul.f32 %v2031, %v2034
    %v2036 = vsub.f32 1.0, %v2035
    %v2037 = vmul.f32 %v2034, %v2036
    %v2038 = vadd.f32 %v2034, %v2037
    %vm2039 = vweird.f32 %v2031
    %vm2040 = vweird.f32 %v2034
    %vm2041 = vmor %vm2039, %vm2040
    %v2042 = vsel %vm2041, %v2034, %v2038
    %v2043 = vand.u32 2147483647, %v2031
    %vm2044 = vcmp.eq.f32.partialorder %v2043, 8.507059e+37
    %v2045 = vand.u32 %v2031, 2147483648
    %v2046 = vor.u32 1.1754944e-38, %v2045
    %v2047 = vsel %vm2044, %v2046, %v2042
    %v2048 = vmul.f32 1.0, %v2047
    %v2049 = vrcp.pop %v2032
    %v2050 = vmul.f32 %v2032, %v2049
    %v2051 = vsub.f32 1.0, %v2050
    %v2052 = vmul.f32 %v2049, %v2051
    %v2053 = vadd.f32 %v2049, %v2052
    %vm2054 = vweird.f32 %v2032
    %vm2055 = vweird.f32 %v2049
    %vm2056 = vmor %vm2054, %vm2055
    %v2057 = vsel %vm2056, %v2049, %v2053
    %v2058 = vand.u32 2147483647, %v2032
    %vm2059 = vcmp.eq.f32.partialorder %v2058, 8.507059e+37
    %v2060 = vand.u32 %v2032, 2147483648
    %v2061 = vor.u32 1.1754944e-38, %v2060
    %v2062 = vsel %vm2059, %v2061, %v2057
    %v2063 = vmul.f32 1.0, %v2062
    %v2064 = vrcp.pop %v2033
    %v2065 = vmul.f32 %v2033, %v2064
    %v2066 = vsub.f32 1.0, %v2065
    %v2067 = vmul.f32 %v2064, %v2066
    %v2068 = vadd.f32 %v2064, %v2067
    %vm2069 = vweird.f32 %v2033
    %vm2070 = vweird.f32 %v2064
    %vm2071 = vmor %vm2069, %vm2070
    %v2072 = vsel %vm2071, %v2064, %v2068
    %v2073 = vand.u32 2147483647, %v2033
    %vm2074 = vcmp.eq.f32.partialorder %v2073, 8.507059e+37
    %v2075 = vand.u32 %v2033, 2147483648
    %v2076 = vor.u32 1.1754944e-38, %v2075
    %v2077 = vsel %vm2074, %v2076, %v2072
    %v2078 = vmul.f32 1.0, %v2077
    %v2079 = vtanh.pop %v1993
    %v2080 = vmul.f32 %v2063, %v1789
    %v2081 = vmul.f32 %v2048, %v2079
    %v2082 = vadd.f32 %v2080, %v2081
    %v2083 = vtanh.pop %v2082
    %v2084 = vmul.f32 %v2078, %v2083
    %s2085 = scalar_lea.vmem [#allocation2], 128
    %v2086 = vld [vmem:[%s2085] sm:$0xff]
    %v2087 = vld [vmem:[%s2085 + $0x8] sm:$0xff]
    %v2088 = vld [vmem:[%s2085 + $0x10] sm:$0xff]
    %v2089 = vld [vmem:[%s2085 + $0x18] sm:$0xff]
    %2090 = vmatpush.bf16.msra.mxu0 %v562
    %2091 = vmatpush.bf16.msra.mxu0 %v558
    %2092 = vmatpush.bf16.msra.mxu0 %v554
    %2093 = vmatpush.bf16.msra.mxu0 %v550
    %2094 = vmatpush.bf16.msra.mxu0 %v546
    %2095 = vmatpush.bf16.msra.mxu0 %v542
    %2096 = vmatpush.bf16.msra.mxu0 %v538
    %2097 = vmatpush.bf16.msra.mxu0 %v534
    %2098 = vmatmul.bf16.gmra.mxu0 %v1916
    %v2099 = vpop.f32.mrf.mxu0
    %v2100 = vadd.f32 0.0, %v2099
    %v2101 = vpop.f32.mrf.mxu0
    %2102 = vdwg.mxu0
    %2103 = vmatpush.bf16.msra.mxu0 %v563
    %2104 = vmatpush.bf16.msra.mxu0 %v559
    %2105 = vmatpush.bf16.msra.mxu0 %v555
    %2106 = vmatpush.bf16.msra.mxu0 %v551
    %2107 = vmatpush.bf16.msra.mxu0 %v547
    %2108 = vmatpush.bf16.msra.mxu0 %v543
    %2109 = vmatpush.bf16.msra.mxu0 %v539
    %2110 = vmatpush.bf16.msra.mxu0 %v535
    %2111 = vmatmul.bf16.gmra.mxu0 %v1916
    %v2112 = vpop.f32.mrf.mxu0
    %v2113 = vadd.f32 0.0, %v2112
    %v2114 = vpop.f32.mrf.mxu0
    %2115 = vdwg.mxu0
    %2116 = vmatpush.bf16.msra.mxu0 %v564
    %2117 = vmatpush.bf16.msra.mxu0 %v560
    %2118 = vmatpush.bf16.msra.mxu0 %v556
    %2119 = vmatpush.bf16.msra.mxu0 %v552
    %2120 = vmatpush.bf16.msra.mxu0 %v548
    %2121 = vmatpush.bf16.msra.mxu0 %v544
    %2122 = vmatpush.bf16.msra.mxu0 %v540
    %2123 = vmatpush.bf16.msra.mxu0 %v536
    %2124 = vmatmul.bf16.gmra.mxu0 %v1916
    %v2125 = vpop.f32.mrf.mxu0
    %v2126 = vadd.f32 0.0, %v2125
    %v2127 = vpop.f32.mrf.mxu0
    %2128 = vdwg.mxu0
    %2129 = vmatpush.bf16.msra.mxu0 %v565
    %2130 = vmatpush.bf16.msra.mxu0 %v561
    %2131 = vmatpush.bf16.msra.mxu0 %v557
    %2132 = vmatpush.bf16.msra.mxu0 %v553
    %2133 = vmatpush.bf16.msra.mxu0 %v549
    %2134 = vmatpush.bf16.msra.mxu0 %v545
    %2135 = vmatpush.bf16.msra.mxu0 %v541
    %2136 = vmatpush.bf16.msra.mxu0 %v537
    %2137 = vmatmul.bf16.gmra.mxu0 %v1916
    %v2138 = vpop.f32.mrf.mxu0
    %v2139 = vadd.f32 0.0, %v2138
    %v2140 = vpop.f32.mrf.mxu0
    %2141 = vdwg.mxu0
    %v2142 = vadd.f32 %v2086, %v2100
    %v2143 = vadd.f32 %v2087, %v2113
    %v2144 = vadd.f32 %v2088, %v2126
    %v2145 = vadd.f32 %v2089, %v2139
    %v2146 = vxor.u32 %v2142, 2147483648
    %v2147 = vxor.u32 %v2143, 2147483648
    %v2148 = vxor.u32 %v2145, 2147483648
    %v2149 = vmul.f32 %v2146, 1.442695
    %v2150 = vpow.pop %v2149
    %v2151 = vmul.f32 %v2147, 1.442695
    %v2152 = vpow.pop %v2151
    %v2153 = vmul.f32 %v2148, 1.442695
    %v2154 = vpow.pop %v2153
    %v2155 = vadd.f32 %v2150, 1.0
    %v2156 = vadd.f32 %v2152, 1.0
    %v2157 = vadd.f32 %v2154, 1.0
    %v2158 = vrcp.pop %v2155
    %v2159 = vmul.f32 %v2155, %v2158
    %v2160 = vsub.f32 1.0, %v2159
    %v2161 = vmul.f32 %v2158, %v2160
    %v2162 = vadd.f32 %v2158, %v2161
    %vm2163 = vweird.f32 %v2155
    %vm2164 = vweird.f32 %v2158
    %vm2165 = vmor %vm2163, %vm2164
    %v2166 = vsel %vm2165, %v2158, %v2162
    %v2167 = vand.u32 2147483647, %v2155
    %vm2168 = vcmp.eq.f32.partialorder %v2167, 8.507059e+37
    %v2169 = vand.u32 %v2155, 2147483648
    %v2170 = vor.u32 1.1754944e-38, %v2169
    %v2171 = vsel %vm2168, %v2170, %v2166
    %v2172 = vmul.f32 1.0, %v2171
    %v2173 = vrcp.pop %v2156
    %v2174 = vmul.f32 %v2156, %v2173
    %v2175 = vsub.f32 1.0, %v2174
    %v2176 = vmul.f32 %v2173, %v2175
    %v2177 = vadd.f32 %v2173, %v2176
    %vm2178 = vweird.f32 %v2156
    %vm2179 = vweird.f32 %v2173
    %vm2180 = vmor %vm2178, %vm2179
    %v2181 = vsel %vm2180, %v2173, %v2177
    %v2182 = vand.u32 2147483647, %v2156
    %vm2183 = vcmp.eq.f32.partialorder %v2182, 8.507059e+37
    %v2184 = vand.u32 %v2156, 2147483648
    %v2185 = vor.u32 1.1754944e-38, %v2184
    %v2186 = vsel %vm2183, %v2185, %v2181
    %v2187 = vmul.f32 1.0, %v2186
    %v2188 = vrcp.pop %v2157
    %v2189 = vmul.f32 %v2157, %v2188
    %v2190 = vsub.f32 1.0, %v2189
    %v2191 = vmul.f32 %v2188, %v2190
    %v2192 = vadd.f32 %v2188, %v2191
    %vm2193 = vweird.f32 %v2157
    %vm2194 = vweird.f32 %v2188
    %vm2195 = vmor %vm2193, %vm2194
    %v2196 = vsel %vm2195, %v2188, %v2192
    %v2197 = vand.u32 2147483647, %v2157
    %vm2198 = vcmp.eq.f32.partialorder %v2197, 8.507059e+37
    %v2199 = vand.u32 %v2157, 2147483648
    %v2200 = vor.u32 1.1754944e-38, %v2199
    %v2201 = vsel %vm2198, %v2200, %v2196
    %v2202 = vmul.f32 1.0, %v2201
    %v2203 = vtanh.pop %v2144
    %v2204 = vmul.f32 %v2187, %v1913
    %v2205 = vmul.f32 %v2172, %v2203
    %v2206 = vadd.f32 %v2204, %v2205
    %v2207 = vtanh.pop %v2206
    %v2208 = vmul.f32 %v2202, %v2207
    %v2209 = vpack.c.bf16 %v2208, %v2208
    %v2210 = vpack.c.bf16 %v2084, %v2084
    %2211 = vmatpush.bf16.msra.mxu0 %v939
    %2212 = vmatpush.bf16.msra.mxu0 %v935
    %2213 = vmatpush.bf16.msra.mxu0 %v931
    %2214 = vmatpush.bf16.msra.mxu0 %v927
    %2215 = vmatpush.bf16.msra.mxu0 %v923
    %2216 = vmatpush.bf16.msra.mxu0 %v919
    %2217 = vmatpush.bf16.msra.mxu0 %v915
    %2218 = vmatpush.bf16.msra.mxu0 %v911
    %2219 = vmatmul.bf16.gmra.mxu0 %v2209
    %v2220 = vpop.f32.mrf.mxu0
    %v2221 = vadd.f32 %v426, %v2220
    %v2222 = vpop.f32.mrf.mxu0
    %2223 = vdwg.mxu0
    %2224 = vmatpush.bf16.msra.mxu0 %v971
    %2225 = vmatpush.bf16.msra.mxu0 %v967
    %2226 = vmatpush.bf16.msra.mxu0 %v963
    %2227 = vmatpush.bf16.msra.mxu0 %v959
    %2228 = vmatpush.bf16.msra.mxu0 %v955
    %2229 = vmatpush.bf16.msra.mxu0 %v951
    %2230 = vmatpush.bf16.msra.mxu0 %v947
    %2231 = vmatpush.bf16.msra.mxu0 %v943
    %2232 = vmatmul.bf16.gmra.mxu0 %v2210
    %v2233 = vpop.f32.mrf.mxu0
    %v2234 = vadd.f32 %v2221, %v2233
    %v2235 = vpop.f32.mrf.mxu0
    %2236 = vdwg.mxu0
    %2237 = vmatpush.bf16.msra.mxu0 %v940
    %2238 = vmatpush.bf16.msra.mxu0 %v936
    %2239 = vmatpush.bf16.msra.mxu0 %v932
    %2240 = vmatpush.bf16.msra.mxu0 %v928
    %2241 = vmatpush.bf16.msra.mxu0 %v924
    %2242 = vmatpush.bf16.msra.mxu0 %v920
    %2243 = vmatpush.bf16.msra.mxu0 %v916
    %2244 = vmatpush.bf16.msra.mxu0 %v912
    %2245 = vmatmul.bf16.gmra.mxu0 %v2209
    %v2246 = vpop.f32.mrf.mxu0
    %v2247 = vadd.f32 %v427, %v2246
    %v2248 = vpop.f32.mrf.mxu0
    %2249 = vdwg.mxu0
    %2250 = vmatpush.bf16.msra.mxu0 %v972
    %2251 = vmatpush.bf16.msra.mxu0 %v968
    %2252 = vmatpush.bf16.msra.mxu0 %v964
    %2253 = vmatpush.bf16.msra.mxu0 %v960
    %2254 = vmatpush.bf16.msra.mxu0 %v956
    %2255 = vmatpush.bf16.msra.mxu0 %v952
    %2256 = vmatpush.bf16.msra.mxu0 %v948
    %2257 = vmatpush.bf16.msra.mxu0 %v944
    %2258 = vmatmul.bf16.gmra.mxu0 %v2210
    %v2259 = vpop.f32.mrf.mxu0
    %v2260 = vadd.f32 %v2247, %v2259
    %v2261 = vpop.f32.mrf.mxu0
    %2262 = vdwg.mxu0
    %2263 = vmatpush.bf16.msra.mxu0 %v941
    %2264 = vmatpush.bf16.msra.mxu0 %v937
    %2265 = vmatpush.bf16.msra.mxu0 %v933
    %2266 = vmatpush.bf16.msra.mxu0 %v929
    %2267 = vmatpush.bf16.msra.mxu0 %v925
    %2268 = vmatpush.bf16.msra.mxu0 %v921
    %2269 = vmatpush.bf16.msra.mxu0 %v917
    %2270 = vmatpush.bf16.msra.mxu0 %v913
    %2271 = vmatmul.bf16.gmra.mxu0 %v2209
    %v2272 = vpop.f32.mrf.mxu0
    %v2273 = vadd.f32 %v428, %v2272
    %v2274 = vpop.f32.mrf.mxu0
    %2275 = vdwg.mxu0
    %2276 = vmatpush.bf16.msra.mxu0 %v973
    %2277 = vmatpush.bf16.msra.mxu0 %v969
    %2278 = vmatpush.bf16.msra.mxu0 %v965
    %2279 = vmatpush.bf16.msra.mxu0 %v961
    %2280 = vmatpush.bf16.msra.mxu0 %v957
    %2281 = vmatpush.bf16.msra.mxu0 %v953
    %2282 = vmatpush.bf16.msra.mxu0 %v949
    %2283 = vmatpush.bf16.msra.mxu0 %v945
    %2284 = vmatmul.bf16.gmra.mxu0 %v2210
    %v2285 = vpop.f32.mrf.mxu0
    %v2286 = vadd.f32 %v2273, %v2285
    %v2287 = vpop.f32.mrf.mxu0
    %2288 = vdwg.mxu0
    %2289 = vmatpush.bf16.msra.mxu0 %v942
    %2290 = vmatpush.bf16.msra.mxu0 %v938
    %2291 = vmatpush.bf16.msra.mxu0 %v934
    %2292 = vmatpush.bf16.msra.mxu0 %v930
    %2293 = vmatpush.bf16.msra.mxu0 %v926
    %2294 = vmatpush.bf16.msra.mxu0 %v922
    %2295 = vmatpush.bf16.msra.mxu0 %v918
    %2296 = vmatpush.bf16.msra.mxu0 %v914
    %2297 = vmatmul.bf16.gmra.mxu0 %v2209
    %v2298 = vpop.f32.mrf.mxu0
    %v2299 = vadd.f32 %v429, %v2298
    %v2300 = vpop.f32.mrf.mxu0
    %2301 = vdwg.mxu0
    %2302 = vmatpush.bf16.msra.mxu0 %v974
    %2303 = vmatpush.bf16.msra.mxu0 %v970
    %2304 = vmatpush.bf16.msra.mxu0 %v966
    %2305 = vmatpush.bf16.msra.mxu0 %v962
    %2306 = vmatpush.bf16.msra.mxu0 %v958
    %2307 = vmatpush.bf16.msra.mxu0 %v954
    %2308 = vmatpush.bf16.msra.mxu0 %v950
    %2309 = vmatpush.bf16.msra.mxu0 %v946
    %2310 = vmatmul.bf16.gmra.mxu0 %v2210
    %v2311 = vpop.f32.mrf.mxu0
    %v2312 = vadd.f32 %v2299, %v2311
    %v2313 = vpop.f32.mrf.mxu0
    %2314 = vdwg.mxu0
    %v2315 = vxor.u32 %v2234, 2147483648
    %v2316 = vxor.u32 %v2260, 2147483648
    %v2317 = vxor.u32 %v2312, 2147483648
    %v2318 = vmul.f32 %v2315, 1.442695
    %v2319 = vpow.pop %v2318
    %v2320 = vmul.f32 %v2316, 1.442695
    %v2321 = vpow.pop %v2320
    %v2322 = vmul.f32 %v2317, 1.442695
    %v2323 = vpow.pop %v2322
    %v2324 = vadd.f32 %v2319, 1.0
    %v2325 = vadd.f32 %v2321, 1.0
    %v2326 = vadd.f32 %v2323, 1.0
    %v2327 = vrcp.pop %v2324
    %v2328 = vmul.f32 %v2324, %v2327
    %v2329 = vsub.f32 1.0, %v2328
    %v2330 = vmul.f32 %v2327, %v2329
    %v2331 = vadd.f32 %v2327, %v2330
    %vm2332 = vweird.f32 %v2324
    %vm2333 = vweird.f32 %v2327
    %vm2334 = vmor %vm2332, %vm2333
    %v2335 = vsel %vm2334, %v2327, %v2331
    %v2336 = vand.u32 2147483647, %v2324
    %vm2337 = vcmp.eq.f32.partialorder %v2336, 8.507059e+37
    %v2338 = vand.u32 %v2324, 2147483648
    %v2339 = vor.u32 1.1754944e-38, %v2338
    %v2340 = vsel %vm2337, %v2339, %v2335
    %v2341 = vmul.f32 1.0, %v2340
    %v2342 = vrcp.pop %v2325
    %v2343 = vmul.f32 %v2325, %v2342
    %v2344 = vsub.f32 1.0, %v2343
    %v2345 = vmul.f32 %v2342, %v2344
    %v2346 = vadd.f32 %v2342, %v2345
    %vm2347 = vweird.f32 %v2325
    %vm2348 = vweird.f32 %v2342
    %vm2349 = vmor %vm2347, %vm2348
    %v2350 = vsel %vm2349, %v2342, %v2346
    %v2351 = vand.u32 2147483647, %v2325
    %vm2352 = vcmp.eq.f32.partialorder %v2351, 8.507059e+37
    %v2353 = vand.u32 %v2325, 2147483648
    %v2354 = vor.u32 1.1754944e-38, %v2353
    %v2355 = vsel %vm2352, %v2354, %v2350
    %v2356 = vmul.f32 1.0, %v2355
    %v2357 = vrcp.pop %v2326
    %v2358 = vmul.f32 %v2326, %v2357
    %v2359 = vsub.f32 1.0, %v2358
    %v2360 = vmul.f32 %v2357, %v2359
    %v2361 = vadd.f32 %v2357, %v2360
    %vm2362 = vweird.f32 %v2326
    %vm2363 = vweird.f32 %v2357
    %vm2364 = vmor %vm2362, %vm2363
    %v2365 = vsel %vm2364, %v2357, %v2361
    %v2366 = vand.u32 2147483647, %v2326
    %vm2367 = vcmp.eq.f32.partialorder %v2366, 8.507059e+37
    %v2368 = vand.u32 %v2326, 2147483648
    %v2369 = vor.u32 1.1754944e-38, %v2368
    %v2370 = vsel %vm2367, %v2369, %v2365
    %v2371 = vmul.f32 1.0, %v2370
    %v2372 = vtanh.pop %v2286
    %v2373 = vmul.f32 %v2356, %v2082
    %v2374 = vmul.f32 %v2341, %v2372
    %v2375 = vadd.f32 %v2373, %v2374
    %v2376 = vtanh.pop %v2375
    %v2377 = vmul.f32 %v2371, %v2376
    %s2378 = scalar_lea.vmem [#allocation2], 160
    %v2379 = vld [vmem:[%s2378] sm:$0xff]
    %v2380 = vld [vmem:[%s2378 + $0x8] sm:$0xff]
    %v2381 = vld [vmem:[%s2378 + $0x10] sm:$0xff]
    %v2382 = vld [vmem:[%s2378 + $0x18] sm:$0xff]
    %2383 = vmatpush.bf16.msra.mxu0 %v562
    %2384 = vmatpush.bf16.msra.mxu0 %v558
    %2385 = vmatpush.bf16.msra.mxu0 %v554
    %2386 = vmatpush.bf16.msra.mxu0 %v550
    %2387 = vmatpush.bf16.msra.mxu0 %v546
    %2388 = vmatpush.bf16.msra.mxu0 %v542
    %2389 = vmatpush.bf16.msra.mxu0 %v538
    %2390 = vmatpush.bf16.msra.mxu0 %v534
    %2391 = vmatmul.bf16.gmra.mxu0 %v2209
    %v2392 = vpop.f32.mrf.mxu0
    %v2393 = vadd.f32 0.0, %v2392
    %v2394 = vpop.f32.mrf.mxu0
    %2395 = vdwg.mxu0
    %2396 = vmatpush.bf16.msra.mxu0 %v563
    %2397 = vmatpush.bf16.msra.mxu0 %v559
    %2398 = vmatpush.bf16.msra.mxu0 %v555
    %2399 = vmatpush.bf16.msra.mxu0 %v551
    %2400 = vmatpush.bf16.msra.mxu0 %v547
    %2401 = vmatpush.bf16.msra.mxu0 %v543
    %2402 = vmatpush.bf16.msra.mxu0 %v539
    %2403 = vmatpush.bf16.msra.mxu0 %v535
    %2404 = vmatmul.bf16.gmra.mxu0 %v2209
    %v2405 = vpop.f32.mrf.mxu0
    %v2406 = vadd.f32 0.0, %v2405
    %v2407 = vpop.f32.mrf.mxu0
    %2408 = vdwg.mxu0
    %2409 = vmatpush.bf16.msra.mxu0 %v564
    %2410 = vmatpush.bf16.msra.mxu0 %v560
    %2411 = vmatpush.bf16.msra.mxu0 %v556
    %2412 = vmatpush.bf16.msra.mxu0 %v552
    %2413 = vmatpush.bf16.msra.mxu0 %v548
    %2414 = vmatpush.bf16.msra.mxu0 %v544
    %2415 = vmatpush.bf16.msra.mxu0 %v540
    %2416 = vmatpush.bf16.msra.mxu0 %v536
    %2417 = vmatmul.bf16.gmra.mxu0 %v2209
    %v2418 = vpop.f32.mrf.mxu0
    %v2419 = vadd.f32 0.0, %v2418
    %v2420 = vpop.f32.mrf.mxu0
    %2421 = vdwg.mxu0
    %2422 = vmatpush.bf16.msra.mxu0 %v565
    %2423 = vmatpush.bf16.msra.mxu0 %v561
    %2424 = vmatpush.bf16.msra.mxu0 %v557
    %2425 = vmatpush.bf16.msra.mxu0 %v553
    %2426 = vmatpush.bf16.msra.mxu0 %v549
    %2427 = vmatpush.bf16.msra.mxu0 %v545
    %2428 = vmatpush.bf16.msra.mxu0 %v541
    %2429 = vmatpush.bf16.msra.mxu0 %v537
    %2430 = vmatmul.bf16.gmra.mxu0 %v2209
    %v2431 = vpop.f32.mrf.mxu0
    %v2432 = vadd.f32 0.0, %v2431
    %v2433 = vpop.f32.mrf.mxu0
    %2434 = vdwg.mxu0
    %v2435 = vadd.f32 %v2379, %v2393
    %v2436 = vadd.f32 %v2380, %v2406
    %v2437 = vadd.f32 %v2381, %v2419
    %v2438 = vadd.f32 %v2382, %v2432
    %v2439 = vxor.u32 %v2435, 2147483648
    %v2440 = vxor.u32 %v2436, 2147483648
    %v2441 = vxor.u32 %v2438, 2147483648
    %v2442 = vmul.f32 %v2439, 1.442695
    %v2443 = vpow.pop %v2442
    %v2444 = vmul.f32 %v2440, 1.442695
    %v2445 = vpow.pop %v2444
    %v2446 = vmul.f32 %v2441, 1.442695
    %v2447 = vpow.pop %v2446
    %v2448 = vadd.f32 %v2443, 1.0
    %v2449 = vadd.f32 %v2445, 1.0
    %v2450 = vadd.f32 %v2447, 1.0
    %v2451 = vrcp.pop %v2448
    %v2452 = vmul.f32 %v2448, %v2451
    %v2453 = vsub.f32 1.0, %v2452
    %v2454 = vmul.f32 %v2451, %v2453
    %v2455 = vadd.f32 %v2451, %v2454
    %vm2456 = vweird.f32 %v2448
    %vm2457 = vweird.f32 %v2451
    %vm2458 = vmor %vm2456, %vm2457
    %v2459 = vsel %vm2458, %v2451, %v2455
    %v2460 = vand.u32 2147483647, %v2448
    %vm2461 = vcmp.eq.f32.partialorder %v2460, 8.507059e+37
    %v2462 = vand.u32 %v2448, 2147483648
    %v2463 = vor.u32 1.1754944e-38, %v2462
    %v2464 = vsel %vm2461, %v2463, %v2459
    %v2465 = vmul.f32 1.0, %v2464
    %v2466 = vrcp.pop %v2449
    %v2467 = vmul.f32 %v2449, %v2466
    %v2468 = vsub.f32 1.0, %v2467
    %v2469 = vmul.f32 %v2466, %v2468
    %v2470 = vadd.f32 %v2466, %v2469
    %vm2471 = vweird.f32 %v2449
    %vm2472 = vweird.f32 %v2466
    %vm2473 = vmor %vm2471, %vm2472
    %v2474 = vsel %vm2473, %v2466, %v2470
    %v2475 = vand.u32 2147483647, %v2449
    %vm2476 = vcmp.eq.f32.partialorder %v2475, 8.507059e+37
    %v2477 = vand.u32 %v2449, 2147483648
    %v2478 = vor.u32 1.1754944e-38, %v2477
    %v2479 = vsel %vm2476, %v2478, %v2474
    %v2480 = vmul.f32 1.0, %v2479
    %v2481 = vrcp.pop %v2450
    %v2482 = vmul.f32 %v2450, %v2481
    %v2483 = vsub.f32 1.0, %v2482
    %v2484 = vmul.f32 %v2481, %v2483
    %v2485 = vadd.f32 %v2481, %v2484
    %vm2486 = vweird.f32 %v2450
    %vm2487 = vweird.f32 %v2481
    %vm2488 = vmor %vm2486, %vm2487
    %v2489 = vsel %vm2488, %v2481, %v2485
    %v2490 = vand.u32 2147483647, %v2450
    %vm2491 = vcmp.eq.f32.partialorder %v2490, 8.507059e+37
    %v2492 = vand.u32 %v2450, 2147483648
    %v2493 = vor.u32 1.1754944e-38, %v2492
    %v2494 = vsel %vm2491, %v2493, %v2489
    %v2495 = vmul.f32 1.0, %v2494
    %v2496 = vtanh.pop %v2437
    %v2497 = vmul.f32 %v2480, %v2206
    %v2498 = vmul.f32 %v2465, %v2496
    %v2499 = vadd.f32 %v2497, %v2498
    %v2500 = vtanh.pop %v2499
    %v2501 = vmul.f32 %v2495, %v2500
    %v2502 = vpack.c.bf16 %v2501, %v2501
    %v2503 = vpack.c.bf16 %v2377, %v2377
    %2504 = vmatpush.bf16.msra.mxu0 %v939
    %2505 = vmatpush.bf16.msra.mxu0 %v935
    %2506 = vmatpush.bf16.msra.mxu0 %v931
    %2507 = vmatpush.bf16.msra.mxu0 %v927
    %2508 = vmatpush.bf16.msra.mxu0 %v923
    %2509 = vmatpush.bf16.msra.mxu0 %v919
    %2510 = vmatpush.bf16.msra.mxu0 %v915
    %2511 = vmatpush.bf16.msra.mxu0 %v911
    %2512 = vmatmul.bf16.gmra.mxu0 %v2502
    %v2513 = vpop.f32.mrf.mxu0
    %v2514 = vadd.f32 %v426, %v2513
    %v2515 = vpop.f32.mrf.mxu0
    %2516 = vdwg.mxu0
    %2517 = vmatpush.bf16.msra.mxu0 %v971
    %2518 = vmatpush.bf16.msra.mxu0 %v967
    %2519 = vmatpush.bf16.msra.mxu0 %v963
    %2520 = vmatpush.bf16.msra.mxu0 %v959
    %2521 = vmatpush.bf16.msra.mxu0 %v955
    %2522 = vmatpush.bf16.msra.mxu0 %v951
    %2523 = vmatpush.bf16.msra.mxu0 %v947
    %2524 = vmatpush.bf16.msra.mxu0 %v943
    %2525 = vmatmul.bf16.gmra.mxu0 %v2503
    %v2526 = vpop.f32.mrf.mxu0
    %v2527 = vadd.f32 %v2514, %v2526
    %v2528 = vpop.f32.mrf.mxu0
    %2529 = vdwg.mxu0
    %2530 = vmatpush.bf16.msra.mxu0 %v940
    %2531 = vmatpush.bf16.msra.mxu0 %v936
    %2532 = vmatpush.bf16.msra.mxu0 %v932
    %2533 = vmatpush.bf16.msra.mxu0 %v928
    %2534 = vmatpush.bf16.msra.mxu0 %v924
    %2535 = vmatpush.bf16.msra.mxu0 %v920
    %2536 = vmatpush.bf16.msra.mxu0 %v916
    %2537 = vmatpush.bf16.msra.mxu0 %v912
    %2538 = vmatmul.bf16.gmra.mxu0 %v2502
    %v2539 = vpop.f32.mrf.mxu0
    %v2540 = vadd.f32 %v427, %v2539
    %v2541 = vpop.f32.mrf.mxu0
    %2542 = vdwg.mxu0
    %2543 = vmatpush.bf16.msra.mxu0 %v972
    %2544 = vmatpush.bf16.msra.mxu0 %v968
    %2545 = vmatpush.bf16.msra.mxu0 %v964
    %2546 = vmatpush.bf16.msra.mxu0 %v960
    %2547 = vmatpush.bf16.msra.mxu0 %v956
    %2548 = vmatpush.bf16.msra.mxu0 %v952
    %2549 = vmatpush.bf16.msra.mxu0 %v948
    %2550 = vmatpush.bf16.msra.mxu0 %v944
    %2551 = vmatmul.bf16.gmra.mxu0 %v2503
    %v2552 = vpop.f32.mrf.mxu0
    %v2553 = vadd.f32 %v2540, %v2552
    %v2554 = vpop.f32.mrf.mxu0
    %2555 = vdwg.mxu0
    %2556 = vmatpush.bf16.msra.mxu0 %v941
    %2557 = vmatpush.bf16.msra.mxu0 %v937
    %2558 = vmatpush.bf16.msra.mxu0 %v933
    %2559 = vmatpush.bf16.msra.mxu0 %v929
    %2560 = vmatpush.bf16.msra.mxu0 %v925
    %2561 = vmatpush.bf16.msra.mxu0 %v921
    %2562 = vmatpush.bf16.msra.mxu0 %v917
    %2563 = vmatpush.bf16.msra.mxu0 %v913
    %2564 = vmatmul.bf16.gmra.mxu0 %v2502
    %v2565 = vpop.f32.mrf.mxu0
    %v2566 = vadd.f32 %v428, %v2565
    %v2567 = vpop.f32.mrf.mxu0
    %2568 = vdwg.mxu0
    %2569 = vmatpush.bf16.msra.mxu0 %v973
    %2570 = vmatpush.bf16.msra.mxu0 %v969
    %2571 = vmatpush.bf16.msra.mxu0 %v965
    %2572 = vmatpush.bf16.msra.mxu0 %v961
    %2573 = vmatpush.bf16.msra.mxu0 %v957
    %2574 = vmatpush.bf16.msra.mxu0 %v953
    %2575 = vmatpush.bf16.msra.mxu0 %v949
    %2576 = vmatpush.bf16.msra.mxu0 %v945
    %2577 = vmatmul.bf16.gmra.mxu0 %v2503
    %v2578 = vpop.f32.mrf.mxu0
    %v2579 = vadd.f32 %v2566, %v2578
    %v2580 = vpop.f32.mrf.mxu0
    %2581 = vdwg.mxu0
    %2582 = vmatpush.bf16.msra.mxu0 %v942
    %2583 = vmatpush.bf16.msra.mxu0 %v938
    %2584 = vmatpush.bf16.msra.mxu0 %v934
    %2585 = vmatpush.bf16.msra.mxu0 %v930
    %2586 = vmatpush.bf16.msra.mxu0 %v926
    %2587 = vmatpush.bf16.msra.mxu0 %v922
    %2588 = vmatpush.bf16.msra.mxu0 %v918
    %2589 = vmatpush.bf16.msra.mxu0 %v914
    %2590 = vmatmul.bf16.gmra.mxu0 %v2502
    %v2591 = vpop.f32.mrf.mxu0
    %v2592 = vadd.f32 %v429, %v2591
    %v2593 = vpop.f32.mrf.mxu0
    %2594 = vdwg.mxu0
    %2595 = vmatpush.bf16.msra.mxu0 %v974
    %2596 = vmatpush.bf16.msra.mxu0 %v970
    %2597 = vmatpush.bf16.msra.mxu0 %v966
    %2598 = vmatpush.bf16.msra.mxu0 %v962
    %2599 = vmatpush.bf16.msra.mxu0 %v958
    %2600 = vmatpush.bf16.msra.mxu0 %v954
    %2601 = vmatpush.bf16.msra.mxu0 %v950
    %2602 = vmatpush.bf16.msra.mxu0 %v946
    %2603 = vmatmul.bf16.gmra.mxu0 %v2503
    %v2604 = vpop.f32.mrf.mxu0
    %v2605 = vadd.f32 %v2592, %v2604
    %v2606 = vpop.f32.mrf.mxu0
    %2607 = vdwg.mxu0
    %v2608 = vxor.u32 %v2527, 2147483648
    %v2609 = vxor.u32 %v2553, 2147483648
    %v2610 = vxor.u32 %v2605, 2147483648
    %v2611 = vmul.f32 %v2608, 1.442695
    %v2612 = vpow.pop %v2611
    %v2613 = vmul.f32 %v2609, 1.442695
    %v2614 = vpow.pop %v2613
    %v2615 = vmul.f32 %v2610, 1.442695
    %v2616 = vpow.pop %v2615
    %v2617 = vadd.f32 %v2612, 1.0
    %v2618 = vadd.f32 %v2614, 1.0
    %v2619 = vadd.f32 %v2616, 1.0
    %v2620 = vrcp.pop %v2617
    %v2621 = vmul.f32 %v2617, %v2620
    %v2622 = vsub.f32 1.0, %v2621
    %v2623 = vmul.f32 %v2620, %v2622
    %v2624 = vadd.f32 %v2620, %v2623
    %vm2625 = vweird.f32 %v2617
    %vm2626 = vweird.f32 %v2620
    %vm2627 = vmor %vm2625, %vm2626
    %v2628 = vsel %vm2627, %v2620, %v2624
    %v2629 = vand.u32 2147483647, %v2617
    %vm2630 = vcmp.eq.f32.partialorder %v2629, 8.507059e+37
    %v2631 = vand.u32 %v2617, 2147483648
    %v2632 = vor.u32 1.1754944e-38, %v2631
    %v2633 = vsel %vm2630, %v2632, %v2628
    %v2634 = vmul.f32 1.0, %v2633
    %v2635 = vrcp.pop %v2618
    %v2636 = vmul.f32 %v2618, %v2635
    %v2637 = vsub.f32 1.0, %v2636
    %v2638 = vmul.f32 %v2635, %v2637
    %v2639 = vadd.f32 %v2635, %v2638
    %vm2640 = vweird.f32 %v2618
    %vm2641 = vweird.f32 %v2635
    %vm2642 = vmor %vm2640, %vm2641
    %v2643 = vsel %vm2642, %v2635, %v2639
    %v2644 = vand.u32 2147483647, %v2618
    %vm2645 = vcmp.eq.f32.partialorder %v2644, 8.507059e+37
    %v2646 = vand.u32 %v2618, 2147483648
    %v2647 = vor.u32 1.1754944e-38, %v2646
    %v2648 = vsel %vm2645, %v2647, %v2643
    %v2649 = vmul.f32 1.0, %v2648
    %v2650 = vrcp.pop %v2619
    %v2651 = vmul.f32 %v2619, %v2650
    %v2652 = vsub.f32 1.0, %v2651
    %v2653 = vmul.f32 %v2650, %v2652
    %v2654 = vadd.f32 %v2650, %v2653
    %vm2655 = vweird.f32 %v2619
    %vm2656 = vweird.f32 %v2650
    %vm2657 = vmor %vm2655, %vm2656
    %v2658 = vsel %vm2657, %v2650, %v2654
    %v2659 = vand.u32 2147483647, %v2619
    %vm2660 = vcmp.eq.f32.partialorder %v2659, 8.507059e+37
    %v2661 = vand.u32 %v2619, 2147483648
    %v2662 = vor.u32 1.1754944e-38, %v2661
    %v2663 = vsel %vm2660, %v2662, %v2658
    %v2664 = vmul.f32 1.0, %v2663
    %v2665 = vtanh.pop %v2579
    %v2666 = vmul.f32 %v2649, %v2375
    %v2667 = vmul.f32 %v2634, %v2665
    %v2668 = vadd.f32 %v2666, %v2667
    %v2669 = vtanh.pop %v2668
    %v2670 = vmul.f32 %v2664, %v2669
    %s2671 = scalar_lea.vmem [#allocation2], 192
    %v2672 = vld [vmem:[%s2671] sm:$0xff]
    %v2673 = vld [vmem:[%s2671 + $0x8] sm:$0xff]
    %v2674 = vld [vmem:[%s2671 + $0x10] sm:$0xff]
    %v2675 = vld [vmem:[%s2671 + $0x18] sm:$0xff]
    %2676 = vmatpush.bf16.msra.mxu0 %v562
    %2677 = vmatpush.bf16.msra.mxu0 %v558
    %2678 = vmatpush.bf16.msra.mxu0 %v554
    %2679 = vmatpush.bf16.msra.mxu0 %v550
    %2680 = vmatpush.bf16.msra.mxu0 %v546
    %2681 = vmatpush.bf16.msra.mxu0 %v542
    %2682 = vmatpush.bf16.msra.mxu0 %v538
    %2683 = vmatpush.bf16.msra.mxu0 %v534
    %2684 = vmatmul.bf16.gmra.mxu0 %v2502
    %v2685 = vpop.f32.mrf.mxu0
    %v2686 = vadd.f32 0.0, %v2685
    %v2687 = vpop.f32.mrf.mxu0
    %2688 = vdwg.mxu0
    %2689 = vmatpush.bf16.msra.mxu0 %v563
    %2690 = vmatpush.bf16.msra.mxu0 %v559
    %2691 = vmatpush.bf16.msra.mxu0 %v555
    %2692 = vmatpush.bf16.msra.mxu0 %v551
    %2693 = vmatpush.bf16.msra.mxu0 %v547
    %2694 = vmatpush.bf16.msra.mxu0 %v543
    %2695 = vmatpush.bf16.msra.mxu0 %v539
    %2696 = vmatpush.bf16.msra.mxu0 %v535
    %2697 = vmatmul.bf16.gmra.mxu0 %v2502
    %v2698 = vpop.f32.mrf.mxu0
    %v2699 = vadd.f32 0.0, %v2698
    %v2700 = vpop.f32.mrf.mxu0
    %2701 = vdwg.mxu0
    %2702 = vmatpush.bf16.msra.mxu0 %v564
    %2703 = vmatpush.bf16.msra.mxu0 %v560
    %2704 = vmatpush.bf16.msra.mxu0 %v556
    %2705 = vmatpush.bf16.msra.mxu0 %v552
    %2706 = vmatpush.bf16.msra.mxu0 %v548
    %2707 = vmatpush.bf16.msra.mxu0 %v544
    %2708 = vmatpush.bf16.msra.mxu0 %v540
    %2709 = vmatpush.bf16.msra.mxu0 %v536
    %2710 = vmatmul.bf16.gmra.mxu0 %v2502
    %v2711 = vpop.f32.mrf.mxu0
    %v2712 = vadd.f32 0.0, %v2711
    %v2713 = vpop.f32.mrf.mxu0
    %2714 = vdwg.mxu0
    %2715 = vmatpush.bf16.msra.mxu0 %v565
    %2716 = vmatpush.bf16.msra.mxu0 %v561
    %2717 = vmatpush.bf16.msra.mxu0 %v557
    %2718 = vmatpush.bf16.msra.mxu0 %v553
    %2719 = vmatpush.bf16.msra.mxu0 %v549
    %2720 = vmatpush.bf16.msra.mxu0 %v545
    %2721 = vmatpush.bf16.msra.mxu0 %v541
    %2722 = vmatpush.bf16.msra.mxu0 %v537
    %2723 = vmatmul.bf16.gmra.mxu0 %v2502
    %v2724 = vpop.f32.mrf.mxu0
    %v2725 = vadd.f32 0.0, %v2724
    %v2726 = vpop.f32.mrf.mxu0
    %2727 = vdwg.mxu0
    %v2728 = vadd.f32 %v2672, %v2686
    %v2729 = vadd.f32 %v2673, %v2699
    %v2730 = vadd.f32 %v2674, %v2712
    %v2731 = vadd.f32 %v2675, %v2725
    %v2732 = vxor.u32 %v2728, 2147483648
    %v2733 = vxor.u32 %v2729, 2147483648
    %v2734 = vxor.u32 %v2731, 2147483648
    %v2735 = vmul.f32 %v2732, 1.442695
    %v2736 = vpow.pop %v2735
    %v2737 = vmul.f32 %v2733, 1.442695
    %v2738 = vpow.pop %v2737
    %v2739 = vmul.f32 %v2734, 1.442695
    %v2740 = vpow.pop %v2739
    %v2741 = vadd.f32 %v2736, 1.0
    %v2742 = vadd.f32 %v2738, 1.0
    %v2743 = vadd.f32 %v2740, 1.0
    %v2744 = vrcp.pop %v2741
    %v2745 = vmul.f32 %v2741, %v2744
    %v2746 = vsub.f32 1.0, %v2745
    %v2747 = vmul.f32 %v2744, %v2746
    %v2748 = vadd.f32 %v2744, %v2747
    %vm2749 = vweird.f32 %v2741
    %vm2750 = vweird.f32 %v2744
    %vm2751 = vmor %vm2749, %vm2750
    %v2752 = vsel %vm2751, %v2744, %v2748
    %v2753 = vand.u32 2147483647, %v2741
    %vm2754 = vcmp.eq.f32.partialorder %v2753, 8.507059e+37
    %v2755 = vand.u32 %v2741, 2147483648
    %v2756 = vor.u32 1.1754944e-38, %v2755
    %v2757 = vsel %vm2754, %v2756, %v2752
    %v2758 = vmul.f32 1.0, %v2757
    %v2759 = vrcp.pop %v2742
    %v2760 = vmul.f32 %v2742, %v2759
    %v2761 = vsub.f32 1.0, %v2760
    %v2762 = vmul.f32 %v2759, %v2761
    %v2763 = vadd.f32 %v2759, %v2762
    %vm2764 = vweird.f32 %v2742
    %vm2765 = vweird.f32 %v2759
    %vm2766 = vmor %vm2764, %vm2765
    %v2767 = vsel %vm2766, %v2759, %v2763
    %v2768 = vand.u32 2147483647, %v2742
    %vm2769 = vcmp.eq.f32.partialorder %v2768, 8.507059e+37
    %v2770 = vand.u32 %v2742, 2147483648
    %v2771 = vor.u32 1.1754944e-38, %v2770
    %v2772 = vsel %vm2769, %v2771, %v2767
    %v2773 = vmul.f32 1.0, %v2772
    %v2774 = vrcp.pop %v2743
    %v2775 = vmul.f32 %v2743, %v2774
    %v2776 = vsub.f32 1.0, %v2775
    %v2777 = vmul.f32 %v2774, %v2776
    %v2778 = vadd.f32 %v2774, %v2777
    %vm2779 = vweird.f32 %v2743
    %vm2780 = vweird.f32 %v2774
    %vm2781 = vmor %vm2779, %vm2780
    %v2782 = vsel %vm2781, %v2774, %v2778
    %v2783 = vand.u32 2147483647, %v2743
    %vm2784 = vcmp.eq.f32.partialorder %v2783, 8.507059e+37
    %v2785 = vand.u32 %v2743, 2147483648
    %v2786 = vor.u32 1.1754944e-38, %v2785
    %v2787 = vsel %vm2784, %v2786, %v2782
    %v2788 = vmul.f32 1.0, %v2787
    %v2789 = vtanh.pop %v2730
    %v2790 = vmul.f32 %v2773, %v2499
    %v2791 = vmul.f32 %v2758, %v2789
    %v2792 = vadd.f32 %v2790, %v2791
    %v2793 = vtanh.pop %v2792
    %v2794 = vmul.f32 %v2788, %v2793
    %v2795 = vpack.c.bf16 %v2794, %v2794
    %v2796 = vpack.c.bf16 %v2670, %v2670
    %2797 = vmatpush.bf16.msra.mxu0 %v939
    %2798 = vmatpush.bf16.msra.mxu0 %v935
    %2799 = vmatpush.bf16.msra.mxu0 %v931
    %2800 = vmatpush.bf16.msra.mxu0 %v927
    %2801 = vmatpush.bf16.msra.mxu0 %v923
    %2802 = vmatpush.bf16.msra.mxu0 %v919
    %2803 = vmatpush.bf16.msra.mxu0 %v915
    %2804 = vmatpush.bf16.msra.mxu0 %v911
    %2805 = vmatmul.bf16.gmra.mxu0 %v2795
    %v2806 = vpop.f32.mrf.mxu0
    %v2807 = vadd.f32 %v426, %v2806
    %v2808 = vpop.f32.mrf.mxu0
    %2809 = vdwg.mxu0
    %2810 = vmatpush.bf16.msra.mxu0 %v971
    %2811 = vmatpush.bf16.msra.mxu0 %v967
    %2812 = vmatpush.bf16.msra.mxu0 %v963
    %2813 = vmatpush.bf16.msra.mxu0 %v959
    %2814 = vmatpush.bf16.msra.mxu0 %v955
    %2815 = vmatpush.bf16.msra.mxu0 %v951
    %2816 = vmatpush.bf16.msra.mxu0 %v947
    %2817 = vmatpush.bf16.msra.mxu0 %v943
    %2818 = vmatmul.bf16.gmra.mxu0 %v2796
    %v2819 = vpop.f32.mrf.mxu0
    %v2820 = vadd.f32 %v2807, %v2819
    %v2821 = vpop.f32.mrf.mxu0
    %2822 = vdwg.mxu0
    %2823 = vmatpush.bf16.msra.mxu0 %v940
    %2824 = vmatpush.bf16.msra.mxu0 %v936
    %2825 = vmatpush.bf16.msra.mxu0 %v932
    %2826 = vmatpush.bf16.msra.mxu0 %v928
    %2827 = vmatpush.bf16.msra.mxu0 %v924
    %2828 = vmatpush.bf16.msra.mxu0 %v920
    %2829 = vmatpush.bf16.msra.mxu0 %v916
    %2830 = vmatpush.bf16.msra.mxu0 %v912
    %2831 = vmatmul.bf16.gmra.mxu0 %v2795
    %v2832 = vpop.f32.mrf.mxu0
    %v2833 = vadd.f32 %v427, %v2832
    %v2834 = vpop.f32.mrf.mxu0
    %2835 = vdwg.mxu0
    %2836 = vmatpush.bf16.msra.mxu0 %v972
    %2837 = vmatpush.bf16.msra.mxu0 %v968
    %2838 = vmatpush.bf16.msra.mxu0 %v964
    %2839 = vmatpush.bf16.msra.mxu0 %v960
    %2840 = vmatpush.bf16.msra.mxu0 %v956
    %2841 = vmatpush.bf16.msra.mxu0 %v952
    %2842 = vmatpush.bf16.msra.mxu0 %v948
    %2843 = vmatpush.bf16.msra.mxu0 %v944
    %2844 = vmatmul.bf16.gmra.mxu0 %v2796
    %v2845 = vpop.f32.mrf.mxu0
    %v2846 = vadd.f32 %v2833, %v2845
    %v2847 = vpop.f32.mrf.mxu0
    %2848 = vdwg.mxu0
    %2849 = vmatpush.bf16.msra.mxu0 %v941
    %2850 = vmatpush.bf16.msra.mxu0 %v937
    %2851 = vmatpush.bf16.msra.mxu0 %v933
    %2852 = vmatpush.bf16.msra.mxu0 %v929
    %2853 = vmatpush.bf16.msra.mxu0 %v925
    %2854 = vmatpush.bf16.msra.mxu0 %v921
    %2855 = vmatpush.bf16.msra.mxu0 %v917
    %2856 = vmatpush.bf16.msra.mxu0 %v913
    %2857 = vmatmul.bf16.gmra.mxu0 %v2795
    %v2858 = vpop.f32.mrf.mxu0
    %v2859 = vadd.f32 %v428, %v2858
    %v2860 = vpop.f32.mrf.mxu0
    %2861 = vdwg.mxu0
    %2862 = vmatpush.bf16.msra.mxu0 %v973
    %2863 = vmatpush.bf16.msra.mxu0 %v969
    %2864 = vmatpush.bf16.msra.mxu0 %v965
    %2865 = vmatpush.bf16.msra.mxu0 %v961
    %2866 = vmatpush.bf16.msra.mxu0 %v957
    %2867 = vmatpush.bf16.msra.mxu0 %v953
    %2868 = vmatpush.bf16.msra.mxu0 %v949
    %2869 = vmatpush.bf16.msra.mxu0 %v945
    %2870 = vmatmul.bf16.gmra.mxu0 %v2796
    %v2871 = vpop.f32.mrf.mxu0
    %v2872 = vadd.f32 %v2859, %v2871
    %v2873 = vpop.f32.mrf.mxu0
    %2874 = vdwg.mxu0
    %2875 = vmatpush.bf16.msra.mxu0 %v942
    %2876 = vmatpush.bf16.msra.mxu0 %v938
    %2877 = vmatpush.bf16.msra.mxu0 %v934
    %2878 = vmatpush.bf16.msra.mxu0 %v930
    %2879 = vmatpush.bf16.msra.mxu0 %v926
    %2880 = vmatpush.bf16.msra.mxu0 %v922
    %2881 = vmatpush.bf16.msra.mxu0 %v918
    %2882 = vmatpush.bf16.msra.mxu0 %v914
    %2883 = vmatmul.bf16.gmra.mxu0 %v2795
    %v2884 = vpop.f32.mrf.mxu0
    %v2885 = vadd.f32 %v429, %v2884
    %v2886 = vpop.f32.mrf.mxu0
    %2887 = vdwg.mxu0
    %2888 = vmatpush.bf16.msra.mxu0 %v974
    %2889 = vmatpush.bf16.msra.mxu0 %v970
    %2890 = vmatpush.bf16.msra.mxu0 %v966
    %2891 = vmatpush.bf16.msra.mxu0 %v962
    %2892 = vmatpush.bf16.msra.mxu0 %v958
    %2893 = vmatpush.bf16.msra.mxu0 %v954
    %2894 = vmatpush.bf16.msra.mxu0 %v950
    %2895 = vmatpush.bf16.msra.mxu0 %v946
    %2896 = vmatmul.bf16.gmra.mxu0 %v2796
    %v2897 = vpop.f32.mrf.mxu0
    %v2898 = vadd.f32 %v2885, %v2897
    %v2899 = vpop.f32.mrf.mxu0
    %2900 = vdwg.mxu0
    %v2901 = vxor.u32 %v2820, 2147483648
    %v2902 = vxor.u32 %v2846, 2147483648
    %v2903 = vxor.u32 %v2898, 2147483648
    %v2904 = vmul.f32 %v2901, 1.442695
    %v2905 = vpow.pop %v2904
    %v2906 = vmul.f32 %v2902, 1.442695
    %v2907 = vpow.pop %v2906
    %v2908 = vmul.f32 %v2903, 1.442695
    %v2909 = vpow.pop %v2908
    %v2910 = vadd.f32 %v2905, 1.0
    %v2911 = vadd.f32 %v2907, 1.0
    %v2912 = vadd.f32 %v2909, 1.0
    %v2913 = vrcp.pop %v2910
    %v2914 = vmul.f32 %v2910, %v2913
    %v2915 = vsub.f32 1.0, %v2914
    %v2916 = vmul.f32 %v2913, %v2915
    %v2917 = vadd.f32 %v2913, %v2916
    %vm2918 = vweird.f32 %v2910
    %vm2919 = vweird.f32 %v2913
    %vm2920 = vmor %vm2918, %vm2919
    %v2921 = vsel %vm2920, %v2913, %v2917
    %v2922 = vand.u32 2147483647, %v2910
    %vm2923 = vcmp.eq.f32.partialorder %v2922, 8.507059e+37
    %v2924 = vand.u32 %v2910, 2147483648
    %v2925 = vor.u32 1.1754944e-38, %v2924
    %v2926 = vsel %vm2923, %v2925, %v2921
    %v2927 = vmul.f32 1.0, %v2926
    %v2928 = vrcp.pop %v2911
    %v2929 = vmul.f32 %v2911, %v2928
    %v2930 = vsub.f32 1.0, %v2929
    %v2931 = vmul.f32 %v2928, %v2930
    %v2932 = vadd.f32 %v2928, %v2931
    %vm2933 = vweird.f32 %v2911
    %vm2934 = vweird.f32 %v2928
    %vm2935 = vmor %vm2933, %vm2934
    %v2936 = vsel %vm2935, %v2928, %v2932
    %v2937 = vand.u32 2147483647, %v2911
    %vm2938 = vcmp.eq.f32.partialorder %v2937, 8.507059e+37
    %v2939 = vand.u32 %v2911, 2147483648
    %v2940 = vor.u32 1.1754944e-38, %v2939
    %v2941 = vsel %vm2938, %v2940, %v2936
    %v2942 = vmul.f32 1.0, %v2941
    %v2943 = vrcp.pop %v2912
    %v2944 = vmul.f32 %v2912, %v2943
    %v2945 = vsub.f32 1.0, %v2944
    %v2946 = vmul.f32 %v2943, %v2945
    %v2947 = vadd.f32 %v2943, %v2946
    %vm2948 = vweird.f32 %v2912
    %vm2949 = vweird.f32 %v2943
    %vm2950 = vmor %vm2948, %vm2949
    %v2951 = vsel %vm2950, %v2943, %v2947
    %v2952 = vand.u32 2147483647, %v2912
    %vm2953 = vcmp.eq.f32.partialorder %v2952, 8.507059e+37
    %v2954 = vand.u32 %v2912, 2147483648
    %v2955 = vor.u32 1.1754944e-38, %v2954
    %v2956 = vsel %vm2953, %v2955, %v2951
    %v2957 = vmul.f32 1.0, %v2956
    %v2958 = vtanh.pop %v2872
    %v2959 = vmul.f32 %v2942, %v2668
    %v2960 = vmul.f32 %v2927, %v2958
    %v2961 = vadd.f32 %v2959, %v2960
    %v2962 = vtanh.pop %v2961
    %v2963 = vmul.f32 %v2957, %v2962
    %s2964 = scalar_lea.vmem [#allocation2], 224
    %v2965 = vld [vmem:[%s2964] sm:$0xff]
    %v2966 = vld [vmem:[%s2964 + $0x8] sm:$0xff]
    %v2967 = vld [vmem:[%s2964 + $0x10] sm:$0xff]
    %v2968 = vld [vmem:[%s2964 + $0x18] sm:$0xff]
    %2969 = vmatpush.bf16.msra.mxu0 %v562
    %2970 = vmatpush.bf16.msra.mxu0 %v558
    %2971 = vmatpush.bf16.msra.mxu0 %v554
    %2972 = vmatpush.bf16.msra.mxu0 %v550
    %2973 = vmatpush.bf16.msra.mxu0 %v546
    %2974 = vmatpush.bf16.msra.mxu0 %v542
    %2975 = vmatpush.bf16.msra.mxu0 %v538
    %2976 = vmatpush.bf16.msra.mxu0 %v534
    %2977 = vmatmul.bf16.gmra.mxu0 %v2795
    %v2978 = vpop.f32.mrf.mxu0
    %v2979 = vadd.f32 0.0, %v2978
    %v2980 = vpop.f32.mrf.mxu0
    %2981 = vdwg.mxu0
    %2982 = vmatpush.bf16.msra.mxu0 %v563
    %2983 = vmatpush.bf16.msra.mxu0 %v559
    %2984 = vmatpush.bf16.msra.mxu0 %v555
    %2985 = vmatpush.bf16.msra.mxu0 %v551
    %2986 = vmatpush.bf16.msra.mxu0 %v547
    %2987 = vmatpush.bf16.msra.mxu0 %v543
    %2988 = vmatpush.bf16.msra.mxu0 %v539
    %2989 = vmatpush.bf16.msra.mxu0 %v535
    %2990 = vmatmul.bf16.gmra.mxu0 %v2795
    %v2991 = vpop.f32.mrf.mxu0
    %v2992 = vadd.f32 0.0, %v2991
    %v2993 = vpop.f32.mrf.mxu0
    %2994 = vdwg.mxu0
    %2995 = vmatpush.bf16.msra.mxu0 %v564
    %2996 = vmatpush.bf16.msra.mxu0 %v560
    %2997 = vmatpush.bf16.msra.mxu0 %v556
    %2998 = vmatpush.bf16.msra.mxu0 %v552
    %2999 = vmatpush.bf16.msra.mxu0 %v548
    %3000 = vmatpush.bf16.msra.mxu0 %v544
    %3001 = vmatpush.bf16.msra.mxu0 %v540
    %3002 = vmatpush.bf16.msra.mxu0 %v536
    %3003 = vmatmul.bf16.gmra.mxu0 %v2795
    %v3004 = vpop.f32.mrf.mxu0
    %v3005 = vadd.f32 0.0, %v3004
    %v3006 = vpop.f32.mrf.mxu0
    %3007 = vdwg.mxu0
    %3008 = vmatpush.bf16.msra.mxu0 %v565
    %3009 = vmatpush.bf16.msra.mxu0 %v561
    %3010 = vmatpush.bf16.msra.mxu0 %v557
    %3011 = vmatpush.bf16.msra.mxu0 %v553
    %3012 = vmatpush.bf16.msra.mxu0 %v549
    %3013 = vmatpush.bf16.msra.mxu0 %v545
    %3014 = vmatpush.bf16.msra.mxu0 %v541
    %3015 = vmatpush.bf16.msra.mxu0 %v537
    %3016 = vmatmul.bf16.gmra.mxu0 %v2795
    %v3017 = vpop.f32.mrf.mxu0
    %v3018 = vadd.f32 0.0, %v3017
    %v3019 = vpop.f32.mrf.mxu0
    %3020 = vdwg.mxu0
    %v3021 = vadd.f32 %v2965, %v2979
    %v3022 = vadd.f32 %v2966, %v2992
    %v3023 = vadd.f32 %v2967, %v3005
    %v3024 = vadd.f32 %v2968, %v3018
    %v3025 = vxor.u32 %v3021, 2147483648
    %v3026 = vxor.u32 %v3022, 2147483648
    %v3027 = vxor.u32 %v3024, 2147483648
    %v3028 = vmul.f32 %v3025, 1.442695
    %v3029 = vpow.pop %v3028
    %v3030 = vmul.f32 %v3026, 1.442695
    %v3031 = vpow.pop %v3030
    %v3032 = vmul.f32 %v3027, 1.442695
    %v3033 = vpow.pop %v3032
    %v3034 = vadd.f32 %v3029, 1.0
    %v3035 = vadd.f32 %v3031, 1.0
    %v3036 = vadd.f32 %v3033, 1.0
    %v3037 = vrcp.pop %v3034
    %v3038 = vmul.f32 %v3034, %v3037
    %v3039 = vsub.f32 1.0, %v3038
    %v3040 = vmul.f32 %v3037, %v3039
    %v3041 = vadd.f32 %v3037, %v3040
    %vm3042 = vweird.f32 %v3034
    %vm3043 = vweird.f32 %v3037
    %vm3044 = vmor %vm3042, %vm3043
    %v3045 = vsel %vm3044, %v3037, %v3041
    %v3046 = vand.u32 2147483647, %v3034
    %vm3047 = vcmp.eq.f32.partialorder %v3046, 8.507059e+37
    %v3048 = vand.u32 %v3034, 2147483648
    %v3049 = vor.u32 1.1754944e-38, %v3048
    %v3050 = vsel %vm3047, %v3049, %v3045
    %v3051 = vmul.f32 1.0, %v3050
    %v3052 = vrcp.pop %v3035
    %v3053 = vmul.f32 %v3035, %v3052
    %v3054 = vsub.f32 1.0, %v3053
    %v3055 = vmul.f32 %v3052, %v3054
    %v3056 = vadd.f32 %v3052, %v3055
    %vm3057 = vweird.f32 %v3035
    %vm3058 = vweird.f32 %v3052
    %vm3059 = vmor %vm3057, %vm3058
    %v3060 = vsel %vm3059, %v3052, %v3056
    %v3061 = vand.u32 2147483647, %v3035
    %vm3062 = vcmp.eq.f32.partialorder %v3061, 8.507059e+37
    %v3063 = vand.u32 %v3035, 2147483648
    %v3064 = vor.u32 1.1754944e-38, %v3063
    %v3065 = vsel %vm3062, %v3064, %v3060
    %v3066 = vmul.f32 1.0, %v3065
    %v3067 = vrcp.pop %v3036
    %v3068 = vmul.f32 %v3036, %v3067
    %v3069 = vsub.f32 1.0, %v3068
    %v3070 = vmul.f32 %v3067, %v3069
    %v3071 = vadd.f32 %v3067, %v3070
    %vm3072 = vweird.f32 %v3036
    %vm3073 = vweird.f32 %v3067
    %vm3074 = vmor %vm3072, %vm3073
    %v3075 = vsel %vm3074, %v3067, %v3071
    %v3076 = vand.u32 2147483647, %v3036
    %vm3077 = vcmp.eq.f32.partialorder %v3076, 8.507059e+37
    %v3078 = vand.u32 %v3036, 2147483648
    %v3079 = vor.u32 1.1754944e-38, %v3078
    %v3080 = vsel %vm3077, %v3079, %v3075
    %v3081 = vmul.f32 1.0, %v3080
    %v3082 = vtanh.pop %v3023
    %v3083 = vmul.f32 %v3066, %v2792
    %v3084 = vmul.f32 %v3051, %v3082
    %v3085 = vadd.f32 %v3083, %v3084
    %v3086 = vtanh.pop %v3085
    %v3087 = vmul.f32 %v3081, %v3086
    %v3088 = vpack.c.bf16 %v3087, %v3087
    %v3089 = vpack.c.bf16 %v2963, %v2963
    %3090 = vmatpush.bf16.msra.mxu0 %v939
    %3091 = vmatpush.bf16.msra.mxu0 %v935
    %3092 = vmatpush.bf16.msra.mxu0 %v931
    %3093 = vmatpush.bf16.msra.mxu0 %v927
    %3094 = vmatpush.bf16.msra.mxu0 %v923
    %3095 = vmatpush.bf16.msra.mxu0 %v919
    %3096 = vmatpush.bf16.msra.mxu0 %v915
    %3097 = vmatpush.bf16.msra.mxu0 %v911
    %3098 = vmatmul.bf16.gmra.mxu0 %v3088
    %v3099 = vpop.f32.mrf.mxu0
    %v3100 = vadd.f32 %v426, %v3099
    %v3101 = vpop.f32.mrf.mxu0
    %3102 = vdwg.mxu0
    %3103 = vmatpush.bf16.msra.mxu0 %v971
    %3104 = vmatpush.bf16.msra.mxu0 %v967
    %3105 = vmatpush.bf16.msra.mxu0 %v963
    %3106 = vmatpush.bf16.msra.mxu0 %v959
    %3107 = vmatpush.bf16.msra.mxu0 %v955
    %3108 = vmatpush.bf16.msra.mxu0 %v951
    %3109 = vmatpush.bf16.msra.mxu0 %v947
    %3110 = vmatpush.bf16.msra.mxu0 %v943
    %3111 = vmatmul.bf16.gmra.mxu0 %v3089
    %v3112 = vpop.f32.mrf.mxu0
    %v3113 = vadd.f32 %v3100, %v3112
    %v3114 = vpop.f32.mrf.mxu0
    %3115 = vdwg.mxu0
    %3116 = vmatpush.bf16.msra.mxu0 %v940
    %3117 = vmatpush.bf16.msra.mxu0 %v936
    %3118 = vmatpush.bf16.msra.mxu0 %v932
    %3119 = vmatpush.bf16.msra.mxu0 %v928
    %3120 = vmatpush.bf16.msra.mxu0 %v924
    %3121 = vmatpush.bf16.msra.mxu0 %v920
    %3122 = vmatpush.bf16.msra.mxu0 %v916
    %3123 = vmatpush.bf16.msra.mxu0 %v912
    %3124 = vmatmul.bf16.gmra.mxu0 %v3088
    %v3125 = vpop.f32.mrf.mxu0
    %v3126 = vadd.f32 %v427, %v3125
    %v3127 = vpop.f32.mrf.mxu0
    %3128 = vdwg.mxu0
    %3129 = vmatpush.bf16.msra.mxu0 %v972
    %3130 = vmatpush.bf16.msra.mxu0 %v968
    %3131 = vmatpush.bf16.msra.mxu0 %v964
    %3132 = vmatpush.bf16.msra.mxu0 %v960
    %3133 = vmatpush.bf16.msra.mxu0 %v956
    %3134 = vmatpush.bf16.msra.mxu0 %v952
    %3135 = vmatpush.bf16.msra.mxu0 %v948
    %3136 = vmatpush.bf16.msra.mxu0 %v944
    %3137 = vmatmul.bf16.gmra.mxu0 %v3089
    %v3138 = vpop.f32.mrf.mxu0
    %v3139 = vadd.f32 %v3126, %v3138
    %v3140 = vpop.f32.mrf.mxu0
    %3141 = vdwg.mxu0
    %3142 = vmatpush.bf16.msra.mxu0 %v941
    %3143 = vmatpush.bf16.msra.mxu0 %v937
    %3144 = vmatpush.bf16.msra.mxu0 %v933
    %3145 = vmatpush.bf16.msra.mxu0 %v929
    %3146 = vmatpush.bf16.msra.mxu0 %v925
    %3147 = vmatpush.bf16.msra.mxu0 %v921
    %3148 = vmatpush.bf16.msra.mxu0 %v917
    %3149 = vmatpush.bf16.msra.mxu0 %v913
    %3150 = vmatmul.bf16.gmra.mxu0 %v3088
    %v3151 = vpop.f32.mrf.mxu0
    %v3152 = vadd.f32 %v428, %v3151
    %v3153 = vpop.f32.mrf.mxu0
    %3154 = vdwg.mxu0
    %3155 = vmatpush.bf16.msra.mxu0 %v973
    %3156 = vmatpush.bf16.msra.mxu0 %v969
    %3157 = vmatpush.bf16.msra.mxu0 %v965
    %3158 = vmatpush.bf16.msra.mxu0 %v961
    %3159 = vmatpush.bf16.msra.mxu0 %v957
    %3160 = vmatpush.bf16.msra.mxu0 %v953
    %3161 = vmatpush.bf16.msra.mxu0 %v949
    %3162 = vmatpush.bf16.msra.mxu0 %v945
    %3163 = vmatmul.bf16.gmra.mxu0 %v3089
    %v3164 = vpop.f32.mrf.mxu0
    %v3165 = vadd.f32 %v3152, %v3164
    %v3166 = vpop.f32.mrf.mxu0
    %3167 = vdwg.mxu0
    %3168 = vmatpush.bf16.msra.mxu0 %v942
    %3169 = vmatpush.bf16.msra.mxu0 %v938
    %3170 = vmatpush.bf16.msra.mxu0 %v934
    %3171 = vmatpush.bf16.msra.mxu0 %v930
    %3172 = vmatpush.bf16.msra.mxu0 %v926
    %3173 = vmatpush.bf16.msra.mxu0 %v922
    %3174 = vmatpush.bf16.msra.mxu0 %v918
    %3175 = vmatpush.bf16.msra.mxu0 %v914
    %3176 = vmatmul.bf16.gmra.mxu0 %v3088
    %v3177 = vpop.f32.mrf.mxu0
    %v3178 = vadd.f32 %v429, %v3177
    %v3179 = vpop.f32.mrf.mxu0
    %3180 = vdwg.mxu0
    %3181 = vmatpush.bf16.msra.mxu0 %v974
    %3182 = vmatpush.bf16.msra.mxu0 %v970
    %3183 = vmatpush.bf16.msra.mxu0 %v966
    %3184 = vmatpush.bf16.msra.mxu0 %v962
    %3185 = vmatpush.bf16.msra.mxu0 %v958
    %3186 = vmatpush.bf16.msra.mxu0 %v954
    %3187 = vmatpush.bf16.msra.mxu0 %v950
    %3188 = vmatpush.bf16.msra.mxu0 %v946
    %3189 = vmatmul.bf16.gmra.mxu0 %v3089
    %v3190 = vpop.f32.mrf.mxu0
    %v3191 = vadd.f32 %v3178, %v3190
    %v3192 = vpop.f32.mrf.mxu0
    %3193 = vdwg.mxu0
    %v3194 = vxor.u32 %v3113, 2147483648
    %v3195 = vxor.u32 %v3139, 2147483648
    %v3196 = vxor.u32 %v3191, 2147483648
    %v3197 = vmul.f32 %v3194, 1.442695
    %v3198 = vpow.pop %v3197
    %v3199 = vmul.f32 %v3195, 1.442695
    %v3200 = vpow.pop %v3199
    %v3201 = vmul.f32 %v3196, 1.442695
    %v3202 = vpow.pop %v3201
    %v3203 = vadd.f32 %v3198, 1.0
    %v3204 = vadd.f32 %v3200, 1.0
    %v3205 = vadd.f32 %v3202, 1.0
    %v3206 = vrcp.pop %v3203
    %v3207 = vmul.f32 %v3203, %v3206
    %v3208 = vsub.f32 1.0, %v3207
    %v3209 = vmul.f32 %v3206, %v3208
    %v3210 = vadd.f32 %v3206, %v3209
    %vm3211 = vweird.f32 %v3203
    %vm3212 = vweird.f32 %v3206
    %vm3213 = vmor %vm3211, %vm3212
    %v3214 = vsel %vm3213, %v3206, %v3210
    %v3215 = vand.u32 2147483647, %v3203
    %vm3216 = vcmp.eq.f32.partialorder %v3215, 8.507059e+37
    %v3217 = vand.u32 %v3203, 2147483648
    %v3218 = vor.u32 1.1754944e-38, %v3217
    %v3219 = vsel %vm3216, %v3218, %v3214
    %v3220 = vmul.f32 1.0, %v3219
    %v3221 = vrcp.pop %v3204
    %v3222 = vmul.f32 %v3204, %v3221
    %v3223 = vsub.f32 1.0, %v3222
    %v3224 = vmul.f32 %v3221, %v3223
    %v3225 = vadd.f32 %v3221, %v3224
    %vm3226 = vweird.f32 %v3204
    %vm3227 = vweird.f32 %v3221
    %vm3228 = vmor %vm3226, %vm3227
    %v3229 = vsel %vm3228, %v3221, %v3225
    %v3230 = vand.u32 2147483647, %v3204
    %vm3231 = vcmp.eq.f32.partialorder %v3230, 8.507059e+37
    %v3232 = vand.u32 %v3204, 2147483648
    %v3233 = vor.u32 1.1754944e-38, %v3232
    %v3234 = vsel %vm3231, %v3233, %v3229
    %v3235 = vmul.f32 1.0, %v3234
    %v3236 = vrcp.pop %v3205
    %v3237 = vmul.f32 %v3205, %v3236
    %v3238 = vsub.f32 1.0, %v3237
    %v3239 = vmul.f32 %v3236, %v3238
    %v3240 = vadd.f32 %v3236, %v3239
    %vm3241 = vweird.f32 %v3205
    %vm3242 = vweird.f32 %v3236
    %vm3243 = vmor %vm3241, %vm3242
    %v3244 = vsel %vm3243, %v3236, %v3240
    %v3245 = vand.u32 2147483647, %v3205
    %vm3246 = vcmp.eq.f32.partialorder %v3245, 8.507059e+37
    %v3247 = vand.u32 %v3205, 2147483648
    %v3248 = vor.u32 1.1754944e-38, %v3247
    %v3249 = vsel %vm3246, %v3248, %v3244
    %v3250 = vmul.f32 1.0, %v3249
    %v3251 = vtanh.pop %v3165
    %v3252 = vmul.f32 %v3235, %v2961
    %v3253 = vmul.f32 %v3220, %v3251
    %v3254 = vadd.f32 %v3252, %v3253
    %v3255 = vtanh.pop %v3254
    %v3256 = vmul.f32 %v3250, %v3255
    %v3257 = vld [vmem:[%s6] sm:$0xff]
    %v3258 = vld [vmem:[%s6 + $0x8] sm:$0xff]
    %v3259 = vld [vmem:[%s6 + $0x10] sm:$0xff]
    %v3260 = vld [vmem:[%s6 + $0x18] sm:$0xff]
    %v3261 = vld [vmem:[%s6 + $0x20] sm:$0xff]
    %v3262 = vld [vmem:[%s6 + $0x28] sm:$0xff]
    %v3263 = vld [vmem:[%s6 + $0x30] sm:$0xff]
    %v3264 = vld [vmem:[%s6 + $0x38] sm:$0xff]
    %v3265 = vld [vmem:[%s6 + $0x40] sm:$0xff]
    %v3266 = vld [vmem:[%s6 + $0x48] sm:$0xff]
    %v3267 = vld [vmem:[%s6 + $0x50] sm:$0xff]
    %v3268 = vld [vmem:[%s6 + $0x58] sm:$0xff]
    %v3269 = vld [vmem:[%s6 + $0x60] sm:$0xff]
    %v3270 = vld [vmem:[%s6 + $0x68] sm:$0xff]
    %v3271 = vld [vmem:[%s6 + $0x70] sm:$0xff]
    %v3272 = vld [vmem:[%s6 + $0x78] sm:$0xff]
    %v3273 = vld [vmem:[%s7] sm:$0x1]
    %v3275 = vperm.slane %v3273, 0
    %3277 = vmatpush.msra.mxu0 %v3272
    %3278 = vmatpush.msra.mxu0 %v3271
    %3279 = vmatpush.msra.mxu0 %v3270
    %3280 = vmatpush.msra.mxu0 %v3269
    %3281 = vmatpush.msra.mxu0 %v3268
    %3282 = vmatpush.msra.mxu0 %v3267
    %3283 = vmatpush.msra.mxu0 %v3266
    %3284 = vmatpush.msra.mxu0 %v3265
    %3285 = vmatpush.msra.mxu0 %v3264
    %3286 = vmatpush.msra.mxu0 %v3263
    %3287 = vmatpush.msra.mxu0 %v3262
    %3288 = vmatpush.msra.mxu0 %v3261
    %3289 = vmatpush.msra.mxu0 %v3260
    %3290 = vmatpush.msra.mxu0 %v3259
    %3291 = vmatpush.msra.mxu0 %v3258
    %3292 = vmatpush.msra.mxu0 %v3257
    %3293 = vmatmul.f32.gmra.mxu0 %v3256
    %v3294 = vpop.f32.mrf.mxu0
    %v3295 = vadd.f32 %v3275, %v3294
    %3296 = vdwg.mxu0
    %v3297 = vmax.f32 %v3295, 0.0
    %v3298 = vld [vmem:[%s8] sm:$0xff]
    %v3299 = vld [vmem:[%s8 + $0x8] sm:$0xff]
    %v3300 = vld [vmem:[%s8 + $0x10] sm:$0xff]
    %v3301 = vld [vmem:[%s8 + $0x18] sm:$0xff]
    %v3302 = vld [vmem:[%s8 + $0x20] sm:$0xff]
    %v3303 = vld [vmem:[%s8 + $0x28] sm:$0xff]
    %v3304 = vld [vmem:[%s8 + $0x30] sm:$0xff]
    %v3305 = vld [vmem:[%s8 + $0x38] sm:$0xff]
    %v3306 = vld [vmem:[%s9] sm:$0x1]
    %v3308 = vperm.slane %v3306, 0
    %vm3310 = vcmask 523264
    %v3312 = vsel %vm3310, %v3297, 0
    %3314 = vmatpush.msra.mxu0 0.0
    %3315 = vmatpush.msra.mxu0 0.0
    %3316 = vmatpush.msra.mxu0 0.0
    %3317 = vmatpush.msra.mxu0 0.0
    %3318 = vmatpush.msra.mxu0 0.0
    %3319 = vmatpush.msra.mxu0 0.0
    %3320 = vmatpush.msra.mxu0 0.0
    %3321 = vmatpush.msra.mxu0 0.0
    %3322 = vmatpush.msra.mxu0 %v3305
    %3323 = vmatpush.msra.mxu0 %v3304
    %3324 = vmatpush.msra.mxu0 %v3303
    %3325 = vmatpush.msra.mxu0 %v3302
    %3326 = vmatpush.msra.mxu0 %v3301
    %3327 = vmatpush.msra.mxu0 %v3300
    %3328 = vmatpush.msra.mxu0 %v3299
    %3329 = vmatpush.msra.mxu0 %v3298
    %3330 = vmatmul.f32.gmra.mxu0 %v3312
    %v3331 = vpop.f32.mrf.mxu0
    %v3332 = vadd.f32 %v3308, %v3331
    %3333 = vdwg.mxu0
    %vm3334 = vcmask 15360
    %3335 = vst.msk [vmem:[%s10] sm:$0xff] %vm3334, %v3332
    // Predicated region
    $region46: #{tpu_custom_call.1} parent=1 // pred_check
      _
    $region47: #{tpu_custom_call.1} parent=1 // pred_check_branch
      %3337 = sbr.rel (0) target = $region49
    $region48: #{tpu_custom_call.1} parent=1 // pred_region
      _
    $region49: #{tpu_custom_call.1} parent=1 // pred_fallthru
      _
    // Predicated region
    $region50: #{tpu_custom_call.1} parent=1 // pred_check
      _
    $region51: #{tpu_custom_call.1} parent=1 // pred_check_branch
      %3339 = sbr.rel (0) target = $region53
    $region52: #{tpu_custom_call.1} parent=1 // pred_region
      _
    $region53: #{tpu_custom_call.1} parent=1 // pred_fallthru
      _
    %3340 = vsyncpa [#allocation4], 1

</llo_original>
